<compile_context>
chip_gen: v7x
topology: tpu7x:2x2x1
jax: 0.10.0
libtpu: 0.0.40
codegen_flags: <defaults>
</compile_context>

<pallas_src>
import functools

import jax
import jax.numpy as jnp
from jax.experimental import pallas as pl
from jax.experimental.pallas import tpu as pltpu


# ----------------------------------------------------------------------------
# small helpers
# ----------------------------------------------------------------------------
def _c8(c):
    """Round a channel count up to a sublane multiple (8)."""
    return (c + 7) // 8 * 8


def _round128(n):
    """Round up to a lane multiple (128)."""
    return (n + 127) // 128 * 128


# ----------------------------------------------------------------------------
# Fused Pallas kernel: whole WDSR-B forward for one batch element per grid step
# ----------------------------------------------------------------------------
def _wsdr_kernel(x_ref, bic_ref, m_ref, hw_ref, hb_ref,
                 w1_ref, b1_ref, w2_ref, b2_ref, w3_ref, b3_ref,
                 tw_ref, tb_ref, o_ref, xg_ref, p_ref,
                 *, Wc, Lp, G, n_res, res_scale):
    """Refs:
        x   (1, Cin8, Lp)    zero-haloed LR canvas (sub_mean already applied)
        bic (1, Ct8,  Lp)    bicubic in pre-pixel-shuffle canvas layout (residual)
        m   (1, Lp)          1 on real interior pixels, 0 on halo ring / lane pad
        hw/hb, w1..b3 (stacked over blocks), tw/tb : packed conv weights / biases
        o   (1, Ct8, Lp)     tail conv output (pre-pixel-shuffle canvas)
        xg  (Cmax, Lp+2G)    zero-guarded canvas scratch (VMEM)
        p   (9*Cmax, Lp)     gathered 3x3 patch matrix scratch (VMEM)
    """
    mask = m_ref[...]                                          # (1, Lp)
    Cg = xg_ref.shape[0]

    # Zero the lane guards once per grid step; interior writes below never touch
    # them, so every shifted 3x3 window read stays in bounds and sees zeros.
    xg_ref[:, :G] = jnp.zeros((Cg, G), xg_ref.dtype)
    xg_ref[:, G + Lp:] = jnp.zeros((Cg, G), xg_ref.dtype)

    def conv3x3(xval, w, b):
        """Same-padded 3x3 conv as ONE MXU matmul on the flat canvas.
        xval (Cc, Lp) value, w (Co, 9*Cc), b (Co, 1) -> (Co, Lp) f32."""
        Cc = xval.shape[0]
        # Re-zeroing the halo ring (and lane pad) == the zero padding the
        # reference conv sees; this is the only masking needed for correctness.
        xg_ref[:Cc, G:G + Lp] = xval * mask
        t = 0
        for dy in (-1, 0, 1):
            for dx in (-1, 0, 1):
                s = dy * Wc + dx
                p_ref[t * Cc:(t + 1) * Cc, :] = xg_ref[:Cc, G + s:G + s + Lp]
                t += 1
        return jnp.dot(w, p_ref[:9 * Cc, :],
                       preferred_element_type=jnp.float32) + b

    # --- head (sub_mean folded into the canvas in the wrapper) ----------------
    h = conv3x3(x_ref[0], hw_ref[...], hb_ref[...])

    # --- body: WDSR-B blocks; activations never leave VMEM/vregs --------------
    for i in range(n_res):
        t = jnp.dot(w1_ref[i], h, preferred_element_type=jnp.float32) + b1_ref[i]
        t = jnp.maximum(t, 0.0)                                # ReLU
        t = jnp.dot(w2_ref[i], t, preferred_element_type=jnp.float32) + b2_ref[i]
        h = conv3x3(t, w3_ref[i], b3_ref[i]) * res_scale + h

    # --- tail: 3x3 conv; "+ bicubic" rides the residual, add_mean is in tb ----
    y = conv3x3(h, tw_ref[...], tb_ref[...]) + bic_ref[0]
    o_ref[0] = y.astype(o_ref.dtype)


def wsdr_b_fused(x_can, bic_can, mask, params, tail_b, *,
                 Wc, Lp, G, n_res, res_scale):
    """One pallas_call for the whole forward. grid=(N,), one batch image/step."""
    N, Cin8, _ = x_can.shape
    Ct8 = bic_can.shape[1]
    Cf8 = params["head_w"].shape[0]
    Clin8 = params["w2"].shape[1]
    Cmax = max(Cin8, Clin8, Cf8)          # widest input to any 3x3 conv

    kern = functools.partial(_wsdr_kernel, Wc=Wc, Lp=Lp, G=G, n_res=n_res,
                             res_scale=float(res_scale))

    def full(a):       # whole (small) weight / mask array, same every grid step
        return pl.BlockSpec(a.shape, lambda n, _nd=a.ndim: (0,) * _nd)

    def batched(a):    # one batch slice per grid step
        return pl.BlockSpec((1,) + a.shape[1:],
                            lambda n, _nd=a.ndim: (n,) + (0,) * (_nd - 1))

    args = [x_can, bic_can, mask,
            params["head_w"], params["head_b"],
            params["w1"], params["b1"], params["w2"], params["b2"],
            params["w3"], params["b3"],
            params["tail_w"], tail_b]
    in_specs = [batched(x_can), batched(bic_can)] + [full(a) for a in args[2:]]

    return pl.pallas_call(
        kern,
        out_shape=jax.ShapeDtypeStruct((N, Ct8, Lp), x_can.dtype),
        grid=(N,),
        in_specs=in_specs,
        out_specs=pl.BlockSpec((1, Ct8, Lp), lambda n: (n, 0, 0)),
        scratch_shapes=[pltpu.VMEM((Cmax, Lp + 2 * G), jnp.float32),
                        pltpu.VMEM((9 * Cmax, Lp), jnp.float32)],
        compiler_params=pltpu.CompilerParams(
            dimension_semantics=("parallel",)),
    )(*args)


# ----------------------------------------------------------------------------
# plain-JAX layout glue (pad / un-pad / pixel shuffle) -- pure data movement
# ----------------------------------------------------------------------------
def to_canvas(x_nchw, c8, Lp):
    """(N,C,H,W) -> (N,c8,Lp): 1-px zero halo, zero channel pad, lane pad to Lp."""
    N, C, H, W = x_nchw.shape
    xp = jnp.pad(x_nchw, ((0, 0), (0, c8 - C), (1, 1), (1, 1)))
    flat = xp.reshape(N, c8, (H + 2) * (W + 2))
    return jnp.pad(flat, ((0, 0), (0, 0), (0, Lp - flat.shape[-1])))


def interior_mask(H, W, Lp):
    m = jnp.zeros((H + 2, W + 2), jnp.float32).at[1:1 + H, 1:1 + W].set(1.0)
    m = m.reshape(1, (H + 2) * (W + 2))
    return jnp.pad(m, ((0, 0), (0, Lp - m.shape[-1])))


def _pixel_shuffle(x, r):
    """torch.nn.PixelShuffle on NCHW: channel c*r*r + i*r + j -> out channel c."""
    N, Cr2, H, W = x.shape
    C = Cr2 // (r * r)
    x = x.reshape(N, C, r, r, H, W)
    return jnp.transpose(x, (0, 1, 4, 2, 5, 3)).reshape(N, C, H * r, W * r)


def _inv_pixel_shuffle(x, r):
    N, C, Hr, Wr = x.shape
    H, W = Hr // r, Wr // r
    x = x.reshape(N, C, H, r, W, r)
    return jnp.transpose(x, (0, 1, 3, 5, 2, 4)).reshape(N, C * r * r, H, W)


# ----------------------------------------------------------------------------
# Parameters (deterministic kaiming-normal init; biases zero).
# weight_norm at init reproduces the raw weight (g=||v||), so plain weights are
# numerically equivalent.  Weights are stored pre-packed for the kernel:
#   W (Cout8, K*K*Cin8) with column ordering (ky, kx, ci); zero rows/cols pad the
# channel counts up to sublane multiples.  Per-block weights are stacked.
# ----------------------------------------------------------------------------
def _kaiming_conv(key, k, cin, cout):
    std = (2.0 / (cin * k * k)) ** 0.5                     # torch kaiming_normal_
    w = jax.random.normal(key, (k, k, cin, cout), jnp.float32) * std
    cin8, cout8 = _c8(cin), _c8(cout)
    wp = jnp.zeros((k * k, cin8, cout8), jnp.float32)
    wp = wp.at[:, :cin, :cout].set(w.reshape(k * k, cin, cout))
    wmat = jnp.transpose(wp, (2, 0, 1)).reshape(cout8, k * k * cin8)
    b = jnp.zeros((cout8, 1), jnp.float32)
    return wmat, b


def init_params(key, config):
    n_res = int(config["n_resblocks"])
    n_feats = int(config["n_feats"])
    r = int(config["scale_factor"])
    channels = int(config["num_channels"])
    assert n_res >= 1
    expand, linear = 6, 0.8
    n_exp, n_lin = n_feats * expand, int(n_feats * linear)
    out_feats = r * r * channels

    keys = jax.random.split(key, 2 + 3 * n_res)
    p = {}
    p["head_w"], p["head_b"] = _kaiming_conv(keys[0], 3, channels, n_feats)
    p["tail_w"], p["tail_b"] = _kaiming_conv(keys[1], 3, n_feats, out_feats)
    w1s, b1s, w2s, b2s, w3s, b3s = [], [], [], [], [], []
    for i in range(n_res):
        k1, k2, k3 = keys[2 + 3 * i:5 + 3 * i]
        w1, b1 = _kaiming_conv(k1, 1, n_feats, n_exp)
        w2, b2 = _kaiming_conv(k2, 1, n_exp, n_lin)
        w3, b3 = _kaiming_conv(k3, 3, n_lin, n_feats)
        w1s.append(w1); b1s.append(b1); w2s.append(w2); b2s.append(b2)
        w3s.append(w3); b3s.append(b3)
    p["w1"] = jnp.stack(w1s); p["b1"] = jnp.stack(b1s)
    p["w2"] = jnp.stack(w2s); p["b2"] = jnp.stack(b2s)
    p["w3"] = jnp.stack(w3s); p["b3"] = jnp.stack(b3s)
    return p


# ----------------------------------------------------------------------------
# Forward pass (matches WSDR_B.forward; NCHW like the PyTorch module)
# ----------------------------------------------------------------------------
# Standard EDSR/WDSR MeanShift (rgb_range=1, rgb_std=1): y = x + sign * rgb_mean.
_RGB_MEAN = jnp.array([0.4488, 0.4371, 0.4040], jnp.float32)


def wsdr_b_forward(params, x, bicubic, config):
    """x: (N, C, H, W);  bicubic: (N, C, H*r, W*r)  ->  (N, C, H*r, W*r)."""
    N, C, H, W = x.shape
    r = int(config["scale_factor"])
    res_scale = float(config["res_scale"])
    n_res = int(config["n_resblocks"])
    out_feats = C * r * r
    Wc = W + 2
    Lc = (H + 2) * Wc
    Lp = _round128(Lc)                 # lane-dense canvas width
    G = _round128(Wc + 1)              # lane guard so every 3x3 shift is in-bounds
    mean = _RGB_MEAN[:C]

    mask = interior_mask(H, W, Lp)
    # sub_mean folded into the (XLA-fused) canvas/pad copy; the zero halo of the
    # canvas is exactly the zero padding the reference conv sees after sub_mean.
    x_can = to_canvas(x - mean.reshape(1, C, 1, 1), _c8(C), Lp)
    # "+ bicubic" rides the tail conv residual, in pre-pixel-shuffle canvas layout.
    bic_can = to_canvas(_inv_pixel_shuffle(bicubic, r), _c8(out_feats), Lp)
    # add_mean folded into the tail bias (pre-shuffle channel c*r*r+k -> mean[c]).
    tail_b = params["tail_b"].at[:out_feats, 0].add(jnp.repeat(mean, r * r))

    # NOTE: the reference forward computes s = self.skip(x) but never uses it
    # (dead code), so the 5x5 skip conv + pixel shuffle is not computed here.

    out = wsdr_b_fused(x_can, bic_can, mask, params, tail_b,
                       Wc=Wc, Lp=Lp, G=G, n_res=n_res, res_scale=res_scale)

    # un-pad (drop halo + padded channels / lanes) and pixel-shuffle: layout glue
    t = out[:, :out_feats, :Lc].reshape(N, out_feats, H + 2, Wc)[:, :, 1:1 + H,
                                                                 1:1 + W]
    return _pixel_shuffle(t, r)


# ----------------------------------------------------------------------------
if __name__ == "__main__":
    config = dict(n_resblocks=2, n_feats=8, scale_factor=2,
                  num_channels=3, res_scale=1.0, use_wn=True)

    key = jax.random.PRNGKey(0)
    kx, kb, kp = jax.random.split(key, 3)

    N, C, H, W = 2, config["num_channels"], 16, 16
    r = config["scale_factor"]
    x = jax.random.uniform(kx, (N, C, H, W), jnp.float32)                # LR image
    bicubic = jax.random.uniform(kb, (N, C, H * r, W * r), jnp.float32)  # upsampled

    params = init_params(kp, config)

    fwd = jax.jit(functools.partial(wsdr_b_forward, config=config))
    out = fwd(params, x, bicubic)
    jax.block_until_ready(out)

    assert out.shape == (N, C, H * r, W * r), out.shape
    assert bool(jnp.all(jnp.isfinite(out)))
    print("KERNEL_OK")
</pallas_src>

<mosaic_0001>
module attributes {stable_mosaic.version = 11 : i64} {
  func.func @_wsdr_kernel(%arg0: i32, %arg1: memref<1x8x384xf32, #tpu.memory_space<vmem>>, %arg2: memref<1x16x384xf32, #tpu.memory_space<vmem>>, %arg3: memref<1x384xf32, #tpu.memory_space<vmem>>, %arg4: memref<8x72xf32, #tpu.memory_space<vmem>>, %arg5: memref<8x1xf32, #tpu.memory_space<vmem>>, %arg6: memref<2x48x8xf32, #tpu.memory_space<vmem>>, %arg7: memref<2x48x1xf32, #tpu.memory_space<vmem>>, %arg8: memref<2x8x48xf32, #tpu.memory_space<vmem>>, %arg9: memref<2x8x1xf32, #tpu.memory_space<vmem>>, %arg10: memref<2x8x72xf32, #tpu.memory_space<vmem>>, %arg11: memref<2x8x1xf32, #tpu.memory_space<vmem>>, %arg12: memref<16x72xf32, #tpu.memory_space<vmem>>, %arg13: memref<16x1xf32, #tpu.memory_space<vmem>>, %arg14: memref<1x16x384xf32, #tpu.memory_space<vmem>>, %arg15: memref<8x640xf32, #tpu.memory_space<vmem>>, %arg16: memref<72x384xf32, #tpu.memory_space<vmem>>) attributes {dimension_semantics = [#tpu.dimension_semantics<parallel>], iteration_bounds = array<i64: 2>, scalar_prefetch = 0 : i64, scratch_operands = 2 : i64, tpu.core_type = #tpu.core_type<tc>, window_params = [{transform_indices = @transform_0, window_bounds = array<i64: 1, 8, 384>}, {transform_indices = @transform_1, window_bounds = array<i64: 1, 16, 384>}, {pipeline_mode = #tpu.pipeline_mode<synchronous>, transform_indices = @transform_2, window_bounds = array<i64: 1, 384>}, {pipeline_mode = #tpu.pipeline_mode<synchronous>, transform_indices = @transform_3, window_bounds = array<i64: 8, 72>}, {pipeline_mode = #tpu.pipeline_mode<synchronous>, transform_indices = @transform_4, window_bounds = array<i64: 8, 1>}, {pipeline_mode = #tpu.pipeline_mode<synchronous>, transform_indices = @transform_5, window_bounds = array<i64: 2, 48, 8>}, {pipeline_mode = #tpu.pipeline_mode<synchronous>, transform_indices = @transform_6, window_bounds = array<i64: 2, 48, 1>}, {pipeline_mode = #tpu.pipeline_mode<synchronous>, transform_indices = @transform_7, window_bounds = array<i64: 2, 8, 48>}, {pipeline_mode = #tpu.pipeline_mode<synchronous>, transform_indices = @transform_8, window_bounds = array<i64: 2, 8, 1>}, {pipeline_mode = #tpu.pipeline_mode<synchronous>, transform_indices = @transform_9, window_bounds = array<i64: 2, 8, 72>}, {pipeline_mode = #tpu.pipeline_mode<synchronous>, transform_indices = @transform_10, window_bounds = array<i64: 2, 8, 1>}, {pipeline_mode = #tpu.pipeline_mode<synchronous>, transform_indices = @transform_11, window_bounds = array<i64: 16, 72>}, {pipeline_mode = #tpu.pipeline_mode<synchronous>, transform_indices = @transform_12, window_bounds = array<i64: 16, 1>}, {transform_indices = @transform_13, window_bounds = array<i64: 1, 16, 384>}]} {
    %c0 = arith.constant 0 : index
    %c0_0 = arith.constant 0 : index
    %0 = vector.load %arg3[%c0, %c0_0] : memref<1x384xf32, #tpu.memory_space<vmem>>, vector<1x384xf32>
    %cst = arith.constant 0.000000e+00 : f32
    %1 = vector.broadcast %cst : f32 to vector<8x128xf32>
    %c0_1 = arith.constant 0 : index
    %c0_2 = arith.constant 0 : index
    %2 = vector.load %arg15[%c0_1, %c0_2] : memref<8x640xf32, #tpu.memory_space<vmem>>, vector<8x128xf32>
    tpu.vector_store %arg15[%c0_1, %c0_2], %1 {strides = array<i32>} : memref<8x640xf32, #tpu.memory_space<vmem>>, vector<8x128xf32>,
    %cst_3 = arith.constant 0.000000e+00 : f32
    %3 = vector.broadcast %cst_3 : f32 to vector<8x128xf32>
    %c0_4 = arith.constant 0 : index
    %c512 = arith.constant 512 : index
    %4 = vector.load %arg15[%c0_4, %c512] : memref<8x640xf32, #tpu.memory_space<vmem>>, vector<8x128xf32>
    tpu.vector_store %arg15[%c0_4, %c512], %3 {strides = array<i32>} : memref<8x640xf32, #tpu.memory_space<vmem>>, vector<8x128xf32>,
    %c0_5 = arith.constant 0 : index
    %c0_6 = arith.constant 0 : index
    %c0_7 = arith.constant 0 : index
    %5 = vector.load %arg1[%c0_5, %c0_6, %c0_7] : memref<1x8x384xf32, #tpu.memory_space<vmem>>, vector<1x8x384xf32>
    %6 = vector.shape_cast %5 : vector<1x8x384xf32> to vector<8x384xf32>
    %c0_8 = arith.constant 0 : index
    %c0_9 = arith.constant 0 : index
    %7 = vector.load %arg4[%c0_8, %c0_9] : memref<8x72xf32, #tpu.memory_space<vmem>>, vector<8x72xf32>
    %c0_10 = arith.constant 0 : index
    %c0_11 = arith.constant 0 : index
    %8 = vector.load %arg5[%c0_10, %c0_11] : memref<8x1xf32, #tpu.memory_space<vmem>>, vector<8x1xf32>
    %9 = vector.broadcast %0 : vector<1x384xf32> to vector<8x384xf32>
    %10 = arith.mulf %6, %9 : vector<8x384xf32>
    %c0_12 = arith.constant 0 : index
    %c128 = arith.constant 128 : index
    %11 = vector.load %arg15[%c0_12, %c128] : memref<8x640xf32, #tpu.memory_space<vmem>>, vector<8x384xf32>
    tpu.vector_store %arg15[%c0_12, %c128], %10 {strides = array<i32>} : memref<8x640xf32, #tpu.memory_space<vmem>>, vector<8x384xf32>,
    %c0_13 = arith.constant 0 : index
    %c109 = arith.constant 109 : index
    %12 = vector.load %arg15[%c0_13, %c109] : memref<8x640xf32, #tpu.memory_space<vmem>>, vector<8x384xf32>
    %c0_14 = arith.constant 0 : index
    %c0_15 = arith.constant 0 : index
    %13 = vector.load %arg16[%c0_14, %c0_15] : memref<72x384xf32, #tpu.memory_space<vmem>>, vector<8x384xf32>
    tpu.vector_store %arg16[%c0_14, %c0_15], %12 {strides = array<i32>} : memref<72x384xf32, #tpu.memory_space<vmem>>, vector<8x384xf32>,
    %c0_16 = arith.constant 0 : index
    %c110 = arith.constant 110 : index
    %14 = vector.load %arg15[%c0_16, %c110] : memref<8x640xf32, #tpu.memory_space<vmem>>, vector<8x384xf32>
    %c8 = arith.constant 8 : index
    %c0_17 = arith.constant 0 : index
    %15 = vector.load %arg16[%c8, %c0_17] : memref<72x384xf32, #tpu.memory_space<vmem>>, vector<8x384xf32>
    tpu.vector_store %arg16[%c8, %c0_17], %14 {strides = array<i32>} : memref<72x384xf32, #tpu.memory_space<vmem>>, vector<8x384xf32>,
    %c0_18 = arith.constant 0 : index
    %c111 = arith.constant 111 : index
    %16 = vector.load %arg15[%c0_18, %c111] : memref<8x640xf32, #tpu.memory_space<vmem>>, vector<8x384xf32>
    %c16 = arith.constant 16 : index
    %c0_19 = arith.constant 0 : index
    %17 = vector.load %arg16[%c16, %c0_19] : memref<72x384xf32, #tpu.memory_space<vmem>>, vector<8x384xf32>
    tpu.vector_store %arg16[%c16, %c0_19], %16 {strides = array<i32>} : memref<72x384xf32, #tpu.memory_space<vmem>>, vector<8x384xf32>,
    %c0_20 = arith.constant 0 : index
    %c127 = arith.constant 127 : index
    %18 = vector.load %arg15[%c0_20, %c127] : memref<8x640xf32, #tpu.memory_space<vmem>>, vector<8x384xf32>
    %c24 = arith.constant 24 : index
    %c0_21 = arith.constant 0 : index
    %19 = vector.load %arg16[%c24, %c0_21] : memref<72x384xf32, #tpu.memory_space<vmem>>, vector<8x384xf32>
    tpu.vector_store %arg16[%c24, %c0_21], %18 {strides = array<i32>} : memref<72x384xf32, #tpu.memory_space<vmem>>, vector<8x384xf32>,
    %c0_22 = arith.constant 0 : index
    %c128_23 = arith.constant 128 : index
    %20 = vector.load %arg15[%c0_22, %c128_23] : memref<8x640xf32, #tpu.memory_space<vmem>>, vector<8x384xf32>
    %c32 = arith.constant 32 : index
    %c0_24 = arith.constant 0 : index
    %21 = vector.load %arg16[%c32, %c0_24] : memref<72x384xf32, #tpu.memory_space<vmem>>, vector<8x384xf32>
    tpu.vector_store %arg16[%c32, %c0_24], %20 {strides = array<i32>} : memref<72x384xf32, #tpu.memory_space<vmem>>, vector<8x384xf32>,
    %c0_25 = arith.constant 0 : index
    %c129 = arith.constant 129 : index
    %22 = vector.load %arg15[%c0_25, %c129] : memref<8x640xf32, #tpu.memory_space<vmem>>, vector<8x384xf32>
    %c40 = arith.constant 40 : index
    %c0_26 = arith.constant 0 : index
    %23 = vector.load %arg16[%c40, %c0_26] : memref<72x384xf32, #tpu.memory_space<vmem>>, vector<8x384xf32>
    tpu.vector_store %arg16[%c40, %c0_26], %22 {strides = array<i32>} : memref<72x384xf32, #tpu.memory_space<vmem>>, vector<8x384xf32>,
    %c0_27 = arith.constant 0 : index
    %c145 = arith.constant 145 : index
    %24 = vector.load %arg15[%c0_27, %c145] : memref<8x640xf32, #tpu.memory_space<vmem>>, vector<8x384xf32>
    %c48 = arith.constant 48 : index
    %c0_28 = arith.constant 0 : index
    %25 = vector.load %arg16[%c48, %c0_28] : memref<72x384xf32, #tpu.memory_space<vmem>>, vector<8x384xf32>
    tpu.vector_store %arg16[%c48, %c0_28], %24 {strides = array<i32>} : memref<72x384xf32, #tpu.memory_space<vmem>>, vector<8x384xf32>,
    %c0_29 = arith.constant 0 : index
    %c146 = arith.constant 146 : index
    %26 = vector.load %arg15[%c0_29, %c146] : memref<8x640xf32, #tpu.memory_space<vmem>>, vector<8x384xf32>
    %c56 = arith.constant 56 : index
    %c0_30 = arith.constant 0 : index
    %27 = vector.load %arg16[%c56, %c0_30] : memref<72x384xf32, #tpu.memory_space<vmem>>, vector<8x384xf32>
    tpu.vector_store %arg16[%c56, %c0_30], %26 {strides = array<i32>} : memref<72x384xf32, #tpu.memory_space<vmem>>, vector<8x384xf32>,
    %c0_31 = arith.constant 0 : index
    %c147 = arith.constant 147 : index
    %28 = vector.load %arg15[%c0_31, %c147] : memref<8x640xf32, #tpu.memory_space<vmem>>, vector<8x384xf32>
    %c64 = arith.constant 64 : index
    %c0_32 = arith.constant 0 : index
    %29 = vector.load %arg16[%c64, %c0_32] : memref<72x384xf32, #tpu.memory_space<vmem>>, vector<8x384xf32>
    tpu.vector_store %arg16[%c64, %c0_32], %28 {strides = array<i32>} : memref<72x384xf32, #tpu.memory_space<vmem>>, vector<8x384xf32>,
    %c0_33 = arith.constant 0 : index
    %c0_34 = arith.constant 0 : index
    %30 = vector.load %arg16[%c0_33, %c0_34] : memref<72x384xf32, #tpu.memory_space<vmem>>, vector<72x384xf32>
    %cst_35 = arith.constant dense<0.000000e+00> : vector<8x384xf32>
    %31 = tpu.matmul %7, %30, %cst_35 {dimension_numbers = #tpu.dot_dimension_numbers<[1], [0], [0], [1], [0, 0, 1, 1], [], []>} : vector<8x72xf32>, vector<72x384xf32>, vector<8x384xf32> -> vector<8x384xf32>
    %32 = vector.broadcast %8 : vector<8x1xf32> to vector<8x384xf32>
    %33 = arith.addf %31, %32 : vector<8x384xf32>
    %c0_36 = arith.constant 0 : index
    %c0_37 = arith.constant 0 : index
    %c0_38 = arith.constant 0 : index
    %34 = vector.load %arg6[%c0_36, %c0_37, %c0_38] : memref<2x48x8xf32, #tpu.memory_space<vmem>>, vector<1x48x8xf32>
    %35 = vector.shape_cast %34 : vector<1x48x8xf32> to vector<48x8xf32>
    %cst_39 = arith.constant dense<0.000000e+00> : vector<48x384xf32>
    %36 = tpu.matmul %35, %33, %cst_39 {dimension_numbers = #tpu.dot_dimension_numbers<[1], [0], [0], [1], [0, 0, 1, 1], [], []>} : vector<48x8xf32>, vector<8x384xf32>, vector<48x384xf32> -> vector<48x384xf32>
    %c0_40 = arith.constant 0 : index
    %c0_41 = arith.constant 0 : index
    %c0_42 = arith.constant 0 : index
    %37 = vector.load %arg7[%c0_40, %c0_41, %c0_42] : memref<2x48x1xf32, #tpu.memory_space<vmem>>, vector<1x48x1xf32>
    %38 = vector.shape_cast %37 : vector<1x48x1xf32> to vector<48x1xf32>
    %39 = vector.broadcast %38 : vector<48x1xf32> to vector<48x384xf32>
    %40 = arith.addf %36, %39 : vector<48x384xf32>
    %cst_43 = arith.constant 0.000000e+00 : f32
    %41 = vector.broadcast %cst_43 : f32 to vector<48x384xf32>
    %42 = arith.maximumf %40, %41 : vector<48x384xf32>
    %c0_44 = arith.constant 0 : index
    %c0_45 = arith.constant 0 : index
    %c0_46 = arith.constant 0 : index
    %43 = vector.load %arg8[%c0_44, %c0_45, %c0_46] : memref<2x8x48xf32, #tpu.memory_space<vmem>>, vector<1x8x48xf32>
    %44 = vector.shape_cast %43 : vector<1x8x48xf32> to vector<8x48xf32>
    %cst_47 = arith.constant dense<0.000000e+00> : vector<8x384xf32>
    %45 = tpu.matmul %44, %42, %cst_47 {dimension_numbers = #tpu.dot_dimension_numbers<[1], [0], [0], [1], [0, 0, 1, 1], [], []>} : vector<8x48xf32>, vector<48x384xf32>, vector<8x384xf32> -> vector<8x384xf32>
    %c0_48 = arith.constant 0 : index
    %c0_49 = arith.constant 0 : index
    %c0_50 = arith.constant 0 : index
    %46 = vector.load %arg9[%c0_48, %c0_49, %c0_50] : memref<2x8x1xf32, #tpu.memory_space<vmem>>, vector<1x8x1xf32>
    %47 = vector.shape_cast %46 : vector<1x8x1xf32> to vector<8x1xf32>
    %48 = vector.broadcast %47 : vector<8x1xf32> to vector<8x384xf32>
    %49 = arith.addf %45, %48 : vector<8x384xf32>
    %c0_51 = arith.constant 0 : index
    %c0_52 = arith.constant 0 : index
    %c0_53 = arith.constant 0 : index
    %50 = vector.load %arg10[%c0_51, %c0_52, %c0_53] : memref<2x8x72xf32, #tpu.memory_space<vmem>>, vector<1x8x72xf32>
    %51 = vector.shape_cast %50 : vector<1x8x72xf32> to vector<8x72xf32>
    %c0_54 = arith.constant 0 : index
    %c0_55 = arith.constant 0 : index
    %c0_56 = arith.constant 0 : index
    %52 = vector.load %arg11[%c0_54, %c0_55, %c0_56] : memref<2x8x1xf32, #tpu.memory_space<vmem>>, vector<1x8x1xf32>
    %53 = vector.shape_cast %52 : vector<1x8x1xf32> to vector<8x1xf32>
    %54 = vector.broadcast %0 : vector<1x384xf32> to vector<8x384xf32>
    %55 = arith.mulf %49, %54 : vector<8x384xf32>
    %c0_57 = arith.constant 0 : index
    %c128_58 = arith.constant 128 : index
    %56 = vector.load %arg15[%c0_57, %c128_58] : memref<8x640xf32, #tpu.memory_space<vmem>>, vector<8x384xf32>
    tpu.vector_store %arg15[%c0_57, %c128_58], %55 {strides = array<i32>} : memref<8x640xf32, #tpu.memory_space<vmem>>, vector<8x384xf32>,
    %c0_59 = arith.constant 0 : index
    %c109_60 = arith.constant 109 : index
    %57 = vector.load %arg15[%c0_59, %c109_60] : memref<8x640xf32, #tpu.memory_space<vmem>>, vector<8x384xf32>
    %c0_61 = arith.constant 0 : index
    %c0_62 = arith.constant 0 : index
    %58 = vector.load %arg16[%c0_61, %c0_62] : memref<72x384xf32, #tpu.memory_space<vmem>>, vector<8x384xf32>
    tpu.vector_store %arg16[%c0_61, %c0_62], %57 {strides = array<i32>} : memref<72x384xf32, #tpu.memory_space<vmem>>, vector<8x384xf32>,
    %c0_63 = arith.constant 0 : index
    %c110_64 = arith.constant 110 : index
    %59 = vector.load %arg15[%c0_63, %c110_64] : memref<8x640xf32, #tpu.memory_space<vmem>>, vector<8x384xf32>
    %c8_65 = arith.constant 8 : index
    %c0_66 = arith.constant 0 : index
    %60 = vector.load %arg16[%c8_65, %c0_66] : memref<72x384xf32, #tpu.memory_space<vmem>>, vector<8x384xf32>
    tpu.vector_store %arg16[%c8_65, %c0_66], %59 {strides = array<i32>} : memref<72x384xf32, #tpu.memory_space<vmem>>, vector<8x384xf32>,
    %c0_67 = arith.constant 0 : index
    %c111_68 = arith.constant 111 : index
    %61 = vector.load %arg15[%c0_67, %c111_68] : memref<8x640xf32, #tpu.memory_space<vmem>>, vector<8x384xf32>
    %c16_69 = arith.constant 16 : index
    %c0_70 = arith.constant 0 : index
    %62 = vector.load %arg16[%c16_69, %c0_70] : memref<72x384xf32, #tpu.memory_space<vmem>>, vector<8x384xf32>
    tpu.vector_store %arg16[%c16_69, %c0_70], %61 {strides = array<i32>} : memref<72x384xf32, #tpu.memory_space<vmem>>, vector<8x384xf32>,
    %c0_71 = arith.constant 0 : index
    %c127_72 = arith.constant 127 : index
    %63 = vector.load %arg15[%c0_71, %c127_72] : memref<8x640xf32, #tpu.memory_space<vmem>>, vector<8x384xf32>
    %c24_73 = arith.constant 24 : index
    %c0_74 = arith.constant 0 : index
    %64 = vector.load %arg16[%c24_73, %c0_74] : memref<72x384xf32, #tpu.memory_space<vmem>>, vector<8x384xf32>
    tpu.vector_store %arg16[%c24_73, %c0_74], %63 {strides = array<i32>} : memref<72x384xf32, #tpu.memory_space<vmem>>, vector<8x384xf32>,
    %c0_75 = arith.constant 0 : index
    %c128_76 = arith.constant 128 : index
    %65 = vector.load %arg15[%c0_75, %c128_76] : memref<8x640xf32, #tpu.memory_space<vmem>>, vector<8x384xf32>
    %c32_77 = arith.constant 32 : index
    %c0_78 = arith.constant 0 : index
    %66 = vector.load %arg16[%c32_77, %c0_78] : memref<72x384xf32, #tpu.memory_space<vmem>>, vector<8x384xf32>
    tpu.vector_store %arg16[%c32_77, %c0_78], %65 {strides = array<i32>} : memref<72x384xf32, #tpu.memory_space<vmem>>, vector<8x384xf32>,
    %c0_79 = arith.constant 0 : index
    %c129_80 = arith.constant 129 : index
    %67 = vector.load %arg15[%c0_79, %c129_80] : memref<8x640xf32, #tpu.memory_space<vmem>>, vector<8x384xf32>
    %c40_81 = arith.constant 40 : index
    %c0_82 = arith.constant 0 : index
    %68 = vector.load %arg16[%c40_81, %c0_82] : memref<72x384xf32, #tpu.memory_space<vmem>>, vector<8x384xf32>
    tpu.vector_store %arg16[%c40_81, %c0_82], %67 {strides = array<i32>} : memref<72x384xf32, #tpu.memory_space<vmem>>, vector<8x384xf32>,
    %c0_83 = arith.constant 0 : index
    %c145_84 = arith.constant 145 : index
    %69 = vector.load %arg15[%c0_83, %c145_84] : memref<8x640xf32, #tpu.memory_space<vmem>>, vector<8x384xf32>
    %c48_85 = arith.constant 48 : index
    %c0_86 = arith.constant 0 : index
    %70 = vector.load %arg16[%c48_85, %c0_86] : memref<72x384xf32, #tpu.memory_space<vmem>>, vector<8x384xf32>
    tpu.vector_store %arg16[%c48_85, %c0_86], %69 {strides = array<i32>} : memref<72x384xf32, #tpu.memory_space<vmem>>, vector<8x384xf32>,
    %c0_87 = arith.constant 0 : index
    %c146_88 = arith.constant 146 : index
    %71 = vector.load %arg15[%c0_87, %c146_88] : memref<8x640xf32, #tpu.memory_space<vmem>>, vector<8x384xf32>
    %c56_89 = arith.constant 56 : index
    %c0_90 = arith.constant 0 : index
    %72 = vector.load %arg16[%c56_89, %c0_90] : memref<72x384xf32, #tpu.memory_space<vmem>>, vector<8x384xf32>
    tpu.vector_store %arg16[%c56_89, %c0_90], %71 {strides = array<i32>} : memref<72x384xf32, #tpu.memory_space<vmem>>, vector<8x384xf32>,
    %c0_91 = arith.constant 0 : index
    %c147_92 = arith.constant 147 : index
    %73 = vector.load %arg15[%c0_91, %c147_92] : memref<8x640xf32, #tpu.memory_space<vmem>>, vector<8x384xf32>
    %c64_93 = arith.constant 64 : index
    %c0_94 = arith.constant 0 : index
    %74 = vector.load %arg16[%c64_93, %c0_94] : memref<72x384xf32, #tpu.memory_space<vmem>>, vector<8x384xf32>
    tpu.vector_store %arg16[%c64_93, %c0_94], %73 {strides = array<i32>} : memref<72x384xf32, #tpu.memory_space<vmem>>, vector<8x384xf32>,
    %c0_95 = arith.constant 0 : index
    %c0_96 = arith.constant 0 : index
    %75 = vector.load %arg16[%c0_95, %c0_96] : memref<72x384xf32, #tpu.memory_space<vmem>>, vector<72x384xf32>
    %cst_97 = arith.constant dense<0.000000e+00> : vector<8x384xf32>
    %76 = tpu.matmul %51, %75, %cst_97 {dimension_numbers = #tpu.dot_dimension_numbers<[1], [0], [0], [1], [0, 0, 1, 1], [], []>} : vector<8x72xf32>, vector<72x384xf32>, vector<8x384xf32> -> vector<8x384xf32>
    %77 = vector.broadcast %53 : vector<8x1xf32> to vector<8x384xf32>
    %78 = arith.addf %76, %77 : vector<8x384xf32>
    %cst_98 = arith.constant 1.000000e+00 : f32
    %79 = vector.broadcast %cst_98 : f32 to vector<8x384xf32>
    %80 = arith.mulf %78, %79 : vector<8x384xf32>
    %81 = arith.addf %80, %33 : vector<8x384xf32>
    %c1 = arith.constant 1 : index
    %c0_99 = arith.constant 0 : index
    %c0_100 = arith.constant 0 : index
    %82 = vector.load %arg6[%c1, %c0_99, %c0_100] : memref<2x48x8xf32, #tpu.memory_space<vmem>>, vector<1x48x8xf32>
    %83 = vector.shape_cast %82 : vector<1x48x8xf32> to vector<48x8xf32>
    %cst_101 = arith.constant dense<0.000000e+00> : vector<48x384xf32>
    %84 = tpu.matmul %83, %81, %cst_101 {dimension_numbers = #tpu.dot_dimension_numbers<[1], [0], [0], [1], [0, 0, 1, 1], [], []>} : vector<48x8xf32>, vector<8x384xf32>, vector<48x384xf32> -> vector<48x384xf32>
    %c1_102 = arith.constant 1 : index
    %c0_103 = arith.constant 0 : index
    %c0_104 = arith.constant 0 : index
    %85 = vector.load %arg7[%c1_102, %c0_103, %c0_104] : memref<2x48x1xf32, #tpu.memory_space<vmem>>, vector<1x48x1xf32>
    %86 = vector.shape_cast %85 : vector<1x48x1xf32> to vector<48x1xf32>
    %87 = vector.broadcast %86 : vector<48x1xf32> to vector<48x384xf32>
    %88 = arith.addf %84, %87 : vector<48x384xf32>
    %cst_105 = arith.constant 0.000000e+00 : f32
    %89 = vector.broadcast %cst_105 : f32 to vector<48x384xf32>
    %90 = arith.maximumf %88, %89 : vector<48x384xf32>
    %c1_106 = arith.constant 1 : index
    %c0_107 = arith.constant 0 : index
    %c0_108 = arith.constant 0 : index
    %91 = vector.load %arg8[%c1_106, %c0_107, %c0_108] : memref<2x8x48xf32, #tpu.memory_space<vmem>>, vector<1x8x48xf32>
    %92 = vector.shape_cast %91 : vector<1x8x48xf32> to vector<8x48xf32>
    %cst_109 = arith.constant dense<0.000000e+00> : vector<8x384xf32>
    %93 = tpu.matmul %92, %90, %cst_109 {dimension_numbers = #tpu.dot_dimension_numbers<[1], [0], [0], [1], [0, 0, 1, 1], [], []>} : vector<8x48xf32>, vector<48x384xf32>, vector<8x384xf32> -> vector<8x384xf32>
    %c1_110 = arith.constant 1 : index
    %c0_111 = arith.constant 0 : index
    %c0_112 = arith.constant 0 : index
    %94 = vector.load %arg9[%c1_110, %c0_111, %c0_112] : memref<2x8x1xf32, #tpu.memory_space<vmem>>, vector<1x8x1xf32>
    %95 = vector.shape_cast %94 : vector<1x8x1xf32> to vector<8x1xf32>
    %96 = vector.broadcast %95 : vector<8x1xf32> to vector<8x384xf32>
    %97 = arith.addf %93, %96 : vector<8x384xf32>
    %c1_113 = arith.constant 1 : index
    %c0_114 = arith.constant 0 : index
    %c0_115 = arith.constant 0 : index
    %98 = vector.load %arg10[%c1_113, %c0_114, %c0_115] : memref<2x8x72xf32, #tpu.memory_space<vmem>>, vector<1x8x72xf32>
    %99 = vector.shape_cast %98 : vector<1x8x72xf32> to vector<8x72xf32>
    %c1_116 = arith.constant 1 : index
    %c0_117 = arith.constant 0 : index
    %c0_118 = arith.constant 0 : index
    %100 = vector.load %arg11[%c1_116, %c0_117, %c0_118] : memref<2x8x1xf32, #tpu.memory_space<vmem>>, vector<1x8x1xf32>
    %101 = vector.shape_cast %100 : vector<1x8x1xf32> to vector<8x1xf32>
    %102 = vector.broadcast %0 : vector<1x384xf32> to vector<8x384xf32>
    %103 = arith.mulf %97, %102 : vector<8x384xf32>
    %c0_119 = arith.constant 0 : index
    %c128_120 = arith.constant 128 : index
    %104 = vector.load %arg15[%c0_119, %c128_120] : memref<8x640xf32, #tpu.memory_space<vmem>>, vector<8x384xf32>
    tpu.vector_store %arg15[%c0_119, %c128_120], %103 {strides = array<i32>} : memref<8x640xf32, #tpu.memory_space<vmem>>, vector<8x384xf32>,
    %c0_121 = arith.constant 0 : index
    %c109_122 = arith.constant 109 : index
    %105 = vector.load %arg15[%c0_121, %c109_122] : memref<8x640xf32, #tpu.memory_space<vmem>>, vector<8x384xf32>
    %c0_123 = arith.constant 0 : index
    %c0_124 = arith.constant 0 : index
    %106 = vector.load %arg16[%c0_123, %c0_124] : memref<72x384xf32, #tpu.memory_space<vmem>>, vector<8x384xf32>
    tpu.vector_store %arg16[%c0_123, %c0_124], %105 {strides = array<i32>} : memref<72x384xf32, #tpu.memory_space<vmem>>, vector<8x384xf32>,
    %c0_125 = arith.constant 0 : index
    %c110_126 = arith.constant 110 : index
    %107 = vector.load %arg15[%c0_125, %c110_126] : memref<8x640xf32, #tpu.memory_space<vmem>>, vector<8x384xf32>
    %c8_127 = arith.constant 8 : index
    %c0_128 = arith.constant 0 : index
    %108 = vector.load %arg16[%c8_127, %c0_128] : memref<72x384xf32, #tpu.memory_space<vmem>>, vector<8x384xf32>
    tpu.vector_store %arg16[%c8_127, %c0_128], %107 {strides = array<i32>} : memref<72x384xf32, #tpu.memory_space<vmem>>, vector<8x384xf32>,
    %c0_129 = arith.constant 0 : index
    %c111_130 = arith.constant 111 : index
    %109 = vector.load %arg15[%c0_129, %c111_130] : memref<8x640xf32, #tpu.memory_space<vmem>>, vector<8x384xf32>
    %c16_131 = arith.constant 16 : index
    %c0_132 = arith.constant 0 : index
    %110 = vector.load %arg16[%c16_131, %c0_132] : memref<72x384xf32, #tpu.memory_space<vmem>>, vector<8x384xf32>
    tpu.vector_store %arg16[%c16_131, %c0_132], %109 {strides = array<i32>} : memref<72x384xf32, #tpu.memory_space<vmem>>, vector<8x384xf32>,
    %c0_133 = arith.constant 0 : index
    %c127_134 = arith.constant 127 : index
    %111 = vector.load %arg15[%c0_133, %c127_134] : memref<8x640xf32, #tpu.memory_space<vmem>>, vector<8x384xf32>
    %c24_135 = arith.constant 24 : index
    %c0_136 = arith.constant 0 : index
    %112 = vector.load %arg16[%c24_135, %c0_136] : memref<72x384xf32, #tpu.memory_space<vmem>>, vector<8x384xf32>
    tpu.vector_store %arg16[%c24_135, %c0_136], %111 {strides = array<i32>} : memref<72x384xf32, #tpu.memory_space<vmem>>, vector<8x384xf32>,
    %c0_137 = arith.constant 0 : index
    %c128_138 = arith.constant 128 : index
    %113 = vector.load %arg15[%c0_137, %c128_138] : memref<8x640xf32, #tpu.memory_space<vmem>>, vector<8x384xf32>
    %c32_139 = arith.constant 32 : index
    %c0_140 = arith.constant 0 : index
    %114 = vector.load %arg16[%c32_139, %c0_140] : memref<72x384xf32, #tpu.memory_space<vmem>>, vector<8x384xf32>
    tpu.vector_store %arg16[%c32_139, %c0_140], %113 {strides = array<i32>} : memref<72x384xf32, #tpu.memory_space<vmem>>, vector<8x384xf32>,
    %c0_141 = arith.constant 0 : index
    %c129_142 = arith.constant 129 : index
    %115 = vector.load %arg15[%c0_141, %c129_142] : memref<8x640xf32, #tpu.memory_space<vmem>>, vector<8x384xf32>
    %c40_143 = arith.constant 40 : index
    %c0_144 = arith.constant 0 : index
    %116 = vector.load %arg16[%c40_143, %c0_144] : memref<72x384xf32, #tpu.memory_space<vmem>>, vector<8x384xf32>
    tpu.vector_store %arg16[%c40_143, %c0_144], %115 {strides = array<i32>} : memref<72x384xf32, #tpu.memory_space<vmem>>, vector<8x384xf32>,
    %c0_145 = arith.constant 0 : index
    %c145_146 = arith.constant 145 : index
    %117 = vector.load %arg15[%c0_145, %c145_146] : memref<8x640xf32, #tpu.memory_space<vmem>>, vector<8x384xf32>
    %c48_147 = arith.constant 48 : index
    %c0_148 = arith.constant 0 : index
    %118 = vector.load %arg16[%c48_147, %c0_148] : memref<72x384xf32, #tpu.memory_space<vmem>>, vector<8x384xf32>
    tpu.vector_store %arg16[%c48_147, %c0_148], %117 {strides = array<i32>} : memref<72x384xf32, #tpu.memory_space<vmem>>, vector<8x384xf32>,
    %c0_149 = arith.constant 0 : index
    %c146_150 = arith.constant 146 : index
    %119 = vector.load %arg15[%c0_149, %c146_150] : memref<8x640xf32, #tpu.memory_space<vmem>>, vector<8x384xf32>
    %c56_151 = arith.constant 56 : index
    %c0_152 = arith.constant 0 : index
    %120 = vector.load %arg16[%c56_151, %c0_152] : memref<72x384xf32, #tpu.memory_space<vmem>>, vector<8x384xf32>
    tpu.vector_store %arg16[%c56_151, %c0_152], %119 {strides = array<i32>} : memref<72x384xf32, #tpu.memory_space<vmem>>, vector<8x384xf32>,
    %c0_153 = arith.constant 0 : index
    %c147_154 = arith.constant 147 : index
    %121 = vector.load %arg15[%c0_153, %c147_154] : memref<8x640xf32, #tpu.memory_space<vmem>>, vector<8x384xf32>
    %c64_155 = arith.constant 64 : index
    %c0_156 = arith.constant 0 : index
    %122 = vector.load %arg16[%c64_155, %c0_156] : memref<72x384xf32, #tpu.memory_space<vmem>>, vector<8x384xf32>
    tpu.vector_store %arg16[%c64_155, %c0_156], %121 {strides = array<i32>} : memref<72x384xf32, #tpu.memory_space<vmem>>, vector<8x384xf32>,
    %c0_157 = arith.constant 0 : index
    %c0_158 = arith.constant 0 : index
    %123 = vector.load %arg16[%c0_157, %c0_158] : memref<72x384xf32, #tpu.memory_space<vmem>>, vector<72x384xf32>
    %cst_159 = arith.constant dense<0.000000e+00> : vector<8x384xf32>
    %124 = tpu.matmul %99, %123, %cst_159 {dimension_numbers = #tpu.dot_dimension_numbers<[1], [0], [0], [1], [0, 0, 1, 1], [], []>} : vector<8x72xf32>, vector<72x384xf32>, vector<8x384xf32> -> vector<8x384xf32>
    %125 = vector.broadcast %101 : vector<8x1xf32> to vector<8x384xf32>
    %126 = arith.addf %124, %125 : vector<8x384xf32>
    %cst_160 = arith.constant 1.000000e+00 : f32
    %127 = vector.broadcast %cst_160 : f32 to vector<8x384xf32>
    %128 = arith.mulf %126, %127 : vector<8x384xf32>
    %129 = arith.addf %128, %81 : vector<8x384xf32>
    %c0_161 = arith.constant 0 : index
    %c0_162 = arith.constant 0 : index
    %130 = vector.load %arg12[%c0_161, %c0_162] : memref<16x72xf32, #tpu.memory_space<vmem>>, vector<16x72xf32>
    %c0_163 = arith.constant 0 : index
    %c0_164 = arith.constant 0 : index
    %131 = vector.load %arg13[%c0_163, %c0_164] : memref<16x1xf32, #tpu.memory_space<vmem>>, vector<16x1xf32>
    %132 = vector.broadcast %0 : vector<1x384xf32> to vector<8x384xf32>
    %133 = arith.mulf %129, %132 : vector<8x384xf32>
    %c0_165 = arith.constant 0 : index
    %c128_166 = arith.constant 128 : index
    %134 = vector.load %arg15[%c0_165, %c128_166] : memref<8x640xf32, #tpu.memory_space<vmem>>, vector<8x384xf32>
    tpu.vector_store %arg15[%c0_165, %c128_166], %133 {strides = array<i32>} : memref<8x640xf32, #tpu.memory_space<vmem>>, vector<8x384xf32>,
    %c0_167 = arith.constant 0 : index
    %c109_168 = arith.constant 109 : index
    %135 = vector.load %arg15[%c0_167, %c109_168] : memref<8x640xf32, #tpu.memory_space<vmem>>, vector<8x384xf32>
    %c0_169 = arith.constant 0 : index
    %c0_170 = arith.constant 0 : index
    %136 = vector.load %arg16[%c0_169, %c0_170] : memref<72x384xf32, #tpu.memory_space<vmem>>, vector<8x384xf32>
    tpu.vector_store %arg16[%c0_169, %c0_170], %135 {strides = array<i32>} : memref<72x384xf32, #tpu.memory_space<vmem>>, vector<8x384xf32>,
    %c0_171 = arith.constant 0 : index
    %c110_172 = arith.constant 110 : index
    %137 = vector.load %arg15[%c0_171, %c110_172] : memref<8x640xf32, #tpu.memory_space<vmem>>, vector<8x384xf32>
    %c8_173 = arith.constant 8 : index
    %c0_174 = arith.constant 0 : index
    %138 = vector.load %arg16[%c8_173, %c0_174] : memref<72x384xf32, #tpu.memory_space<vmem>>, vector<8x384xf32>
    tpu.vector_store %arg16[%c8_173, %c0_174], %137 {strides = array<i32>} : memref<72x384xf32, #tpu.memory_space<vmem>>, vector<8x384xf32>,
    %c0_175 = arith.constant 0 : index
    %c111_176 = arith.constant 111 : index
    %139 = vector.load %arg15[%c0_175, %c111_176] : memref<8x640xf32, #tpu.memory_space<vmem>>, vector<8x384xf32>
    %c16_177 = arith.constant 16 : index
    %c0_178 = arith.constant 0 : index
    %140 = vector.load %arg16[%c16_177, %c0_178] : memref<72x384xf32, #tpu.memory_space<vmem>>, vector<8x384xf32>
    tpu.vector_store %arg16[%c16_177, %c0_178], %139 {strides = array<i32>} : memref<72x384xf32, #tpu.memory_space<vmem>>, vector<8x384xf32>,
    %c0_179 = arith.constant 0 : index
    %c127_180 = arith.constant 127 : index
    %141 = vector.load %arg15[%c0_179, %c127_180] : memref<8x640xf32, #tpu.memory_space<vmem>>, vector<8x384xf32>
    %c24_181 = arith.constant 24 : index
    %c0_182 = arith.constant 0 : index
    %142 = vector.load %arg16[%c24_181, %c0_182] : memref<72x384xf32, #tpu.memory_space<vmem>>, vector<8x384xf32>
    tpu.vector_store %arg16[%c24_181, %c0_182], %141 {strides = array<i32>} : memref<72x384xf32, #tpu.memory_space<vmem>>, vector<8x384xf32>,
    %c0_183 = arith.constant 0 : index
    %c128_184 = arith.constant 128 : index
    %143 = vector.load %arg15[%c0_183, %c128_184] : memref<8x640xf32, #tpu.memory_space<vmem>>, vector<8x384xf32>
    %c32_185 = arith.constant 32 : index
    %c0_186 = arith.constant 0 : index
    %144 = vector.load %arg16[%c32_185, %c0_186] : memref<72x384xf32, #tpu.memory_space<vmem>>, vector<8x384xf32>
    tpu.vector_store %arg16[%c32_185, %c0_186], %143 {strides = array<i32>} : memref<72x384xf32, #tpu.memory_space<vmem>>, vector<8x384xf32>,
    %c0_187 = arith.constant 0 : index
    %c129_188 = arith.constant 129 : index
    %145 = vector.load %arg15[%c0_187, %c129_188] : memref<8x640xf32, #tpu.memory_space<vmem>>, vector<8x384xf32>
    %c40_189 = arith.constant 40 : index
    %c0_190 = arith.constant 0 : index
    %146 = vector.load %arg16[%c40_189, %c0_190] : memref<72x384xf32, #tpu.memory_space<vmem>>, vector<8x384xf32>
    tpu.vector_store %arg16[%c40_189, %c0_190], %145 {strides = array<i32>} : memref<72x384xf32, #tpu.memory_space<vmem>>, vector<8x384xf32>,
    %c0_191 = arith.constant 0 : index
    %c145_192 = arith.constant 145 : index
    %147 = vector.load %arg15[%c0_191, %c145_192] : memref<8x640xf32, #tpu.memory_space<vmem>>, vector<8x384xf32>
    %c48_193 = arith.constant 48 : index
    %c0_194 = arith.constant 0 : index
    %148 = vector.load %arg16[%c48_193, %c0_194] : memref<72x384xf32, #tpu.memory_space<vmem>>, vector<8x384xf32>
    tpu.vector_store %arg16[%c48_193, %c0_194], %147 {strides = array<i32>} : memref<72x384xf32, #tpu.memory_space<vmem>>, vector<8x384xf32>,
    %c0_195 = arith.constant 0 : index
    %c146_196 = arith.constant 146 : index
    %149 = vector.load %arg15[%c0_195, %c146_196] : memref<8x640xf32, #tpu.memory_space<vmem>>, vector<8x384xf32>
    %c56_197 = arith.constant 56 : index
    %c0_198 = arith.constant 0 : index
    %150 = vector.load %arg16[%c56_197, %c0_198] : memref<72x384xf32, #tpu.memory_space<vmem>>, vector<8x384xf32>
    tpu.vector_store %arg16[%c56_197, %c0_198], %149 {strides = array<i32>} : memref<72x384xf32, #tpu.memory_space<vmem>>, vector<8x384xf32>,
    %c0_199 = arith.constant 0 : index
    %c147_200 = arith.constant 147 : index
    %151 = vector.load %arg15[%c0_199, %c147_200] : memref<8x640xf32, #tpu.memory_space<vmem>>, vector<8x384xf32>
    %c64_201 = arith.constant 64 : index
    %c0_202 = arith.constant 0 : index
    %152 = vector.load %arg16[%c64_201, %c0_202] : memref<72x384xf32, #tpu.memory_space<vmem>>, vector<8x384xf32>
    tpu.vector_store %arg16[%c64_201, %c0_202], %151 {strides = array<i32>} : memref<72x384xf32, #tpu.memory_space<vmem>>, vector<8x384xf32>,
    %c0_203 = arith.constant 0 : index
    %c0_204 = arith.constant 0 : index
    %153 = vector.load %arg16[%c0_203, %c0_204] : memref<72x384xf32, #tpu.memory_space<vmem>>, vector<72x384xf32>
    %cst_205 = arith.constant dense<0.000000e+00> : vector<16x384xf32>
    %154 = tpu.matmul %130, %153, %cst_205 {dimension_numbers = #tpu.dot_dimension_numbers<[1], [0], [0], [1], [0, 0, 1, 1], [], []>} : vector<16x72xf32>, vector<72x384xf32>, vector<16x384xf32> -> vector<16x384xf32>
    %155 = vector.broadcast %131 : vector<16x1xf32> to vector<16x384xf32>
    %156 = arith.addf %154, %155 : vector<16x384xf32>
    %c0_206 = arith.constant 0 : index
    %c0_207 = arith.constant 0 : index
    %c0_208 = arith.constant 0 : index
    %157 = vector.load %arg2[%c0_206, %c0_207, %c0_208] : memref<1x16x384xf32, #tpu.memory_space<vmem>>, vector<1x16x384xf32>
    %158 = vector.shape_cast %157 : vector<1x16x384xf32> to vector<16x384xf32>
    %159 = arith.addf %156, %158 : vector<16x384xf32>
    %c0_209 = arith.constant 0 : index
    %c0_210 = arith.constant 0 : index
    %c0_211 = arith.constant 0 : index
    %160 = vector.load %arg14[%c0_209, %c0_210, %c0_211] : memref<1x16x384xf32, #tpu.memory_space<vmem>>, vector<1x16x384xf32>
    %161 = vector.shape_cast %160 : vector<1x16x384xf32> to vector<16x384xf32>
    %162 = vector.shape_cast %159 : vector<16x384xf32> to vector<1x16x384xf32>
    tpu.vector_store %arg14[%c0_209, %c0_210, %c0_211], %162 {strides = array<i32>} : memref<1x16x384xf32, #tpu.memory_space<vmem>>, vector<1x16x384xf32>,
    return
  }
  func.func @transform_0(%arg0: i32) -> (i32, i32, i32) {
    %c0_i32 = arith.constant 0 : i32
    %c0_i32_0 = arith.constant 0 : i32
    %c0_i32_1 = arith.constant 0 : i32
    return %arg0, %c0_i32, %c0_i32_0 : i32, i32, i32
  }
  func.func @transform_1(%arg0: i32) -> (i32, i32, i32) {
    %c0_i32 = arith.constant 0 : i32
    %c0_i32_0 = arith.constant 0 : i32
    %c0_i32_1 = arith.constant 0 : i32
    return %arg0, %c0_i32, %c0_i32_0 : i32, i32, i32
  }
  func.func @transform_2(%arg0: i32) -> (i32, i32) {
    %c0_i32 = arith.constant 0 : i32
    %c0_i32_0 = arith.constant 0 : i32
    %c0_i32_1 = arith.constant 0 : i32
    return %c0_i32, %c0_i32_0 : i32, i32
  }
  func.func @transform_3(%arg0: i32) -> (i32, i32) {
    %c0_i32 = arith.constant 0 : i32
    %c0_i32_0 = arith.constant 0 : i32
    %c0_i32_1 = arith.constant 0 : i32
    return %c0_i32, %c0_i32_0 : i32, i32
  }
  func.func @transform_4(%arg0: i32) -> (i32, i32) {
    %c0_i32 = arith.constant 0 : i32
    %c0_i32_0 = arith.constant 0 : i32
    %c0_i32_1 = arith.constant 0 : i32
    return %c0_i32, %c0_i32_0 : i32, i32
  }
  func.func @transform_5(%arg0: i32) -> (i32, i32, i32) {
    %c0_i32 = arith.constant 0 : i32
    %c0_i32_0 = arith.constant 0 : i32
    %c0_i32_1 = arith.constant 0 : i32
    %c0_i32_2 = arith.constant 0 : i32
    return %c0_i32, %c0_i32_0, %c0_i32_1 : i32, i32, i32
  }
  func.func @transform_6(%arg0: i32) -> (i32, i32, i32) {
    %c0_i32 = arith.constant 0 : i32
    %c0_i32_0 = arith.constant 0 : i32
    %c0_i32_1 = arith.constant 0 : i32
    %c0_i32_2 = arith.constant 0 : i32
    return %c0_i32, %c0_i32_0, %c0_i32_1 : i32, i32, i32
  }
  func.func @transform_7(%arg0: i32) -> (i32, i32, i32) {
    %c0_i32 = arith.constant 0 : i32
    %c0_i32_0 = arith.constant 0 : i32
    %c0_i32_1 = arith.constant 0 : i32
    %c0_i32_2 = arith.constant 0 : i32
    return %c0_i32, %c0_i32_0, %c0_i32_1 : i32, i32, i32
  }
  func.func @transform_8(%arg0: i32) -> (i32, i32, i32) {
    %c0_i32 = arith.constant 0 : i32
    %c0_i32_0 = arith.constant 0 : i32
    %c0_i32_1 = arith.constant 0 : i32
    %c0_i32_2 = arith.constant 0 : i32
    return %c0_i32, %c0_i32_0, %c0_i32_1 : i32, i32, i32
  }
  func.func @transform_9(%arg0: i32) -> (i32, i32, i32) {
    %c0_i32 = arith.constant 0 : i32
    %c0_i32_0 = arith.constant 0 : i32
    %c0_i32_1 = arith.constant 0 : i32
    %c0_i32_2 = arith.constant 0 : i32
    return %c0_i32, %c0_i32_0, %c0_i32_1 : i32, i32, i32
  }
  func.func @transform_10(%arg0: i32) -> (i32, i32, i32) {
    %c0_i32 = arith.constant 0 : i32
    %c0_i32_0 = arith.constant 0 : i32
    %c0_i32_1 = arith.constant 0 : i32
    %c0_i32_2 = arith.constant 0 : i32
    return %c0_i32, %c0_i32_0, %c0_i32_1 : i32, i32, i32
  }
  func.func @transform_11(%arg0: i32) -> (i32, i32) {
    %c0_i32 = arith.constant 0 : i32
    %c0_i32_0 = arith.constant 0 : i32
    %c0_i32_1 = arith.constant 0 : i32
    return %c0_i32, %c0_i32_0 : i32, i32
  }
  func.func @transform_12(%arg0: i32) -> (i32, i32) {
    %c0_i32 = arith.constant 0 : i32
    %c0_i32_0 = arith.constant 0 : i32
    %c0_i32_1 = arith.constant 0 : i32
    return %c0_i32, %c0_i32_0 : i32, i32
  }
  func.func @transform_13(%arg0: i32) -> (i32, i32, i32) {
    %c0_i32 = arith.constant 0 : i32
    %c0_i32_0 = arith.constant 0 : i32
    %c0_i32_1 = arith.constant 0 : i32
    return %arg0, %c0_i32, %c0_i32_0 : i32, i32, i32
  }
}

</mosaic_0001>

<llo_original>
// kernel: wsdr_b_forward.1
$region0: #{wsdr_b_forward.1}
  #allocation0 [shape = 'u32[]', space=smem, size = 0x4, offset = 0x4, fixed_abs, tag = 'smem constant byte address 0x4 - core index']
  #allocation1 [shape = 'u32[144,128]{1,0:T(1,128)}', space=vmem, size = 0x12000, scoped, tag = 'internal scratch']
  #allocation2 [shape = 'f32[8,640]{1,0:T(8,128)}', space=vmem, size = 0x5000, scoped, tag = 'scratch operand']
  #allocation3 [shape = 'f32[72,384]{1,0:T(8,128)}', space=vmem, size = 0x1b000, scoped, tag = 'scratch operand']
  %s0 = inlined_call_operand.vmem [shape: f32[2,8,384], index: 0, kind: input, shape index: {}]
  %s1 = inlined_call_operand.vmem [shape: f32[2,16,384], index: 1, kind: input, shape index: {}]
  %s2 = inlined_call_operand.vmem [shape: f32[1,384], index: 2, kind: input, shape index: {}]
  %s3 = inlined_call_operand.vmem [shape: f32[8,72], index: 3, kind: input, shape index: {}]
  %s4 = inlined_call_operand.vmem [shape: f32[8,1], index: 4, kind: input, shape index: {}]
  %s5 = inlined_call_operand.vmem [shape: f32[2,48,8], index: 5, kind: input, shape index: {}]
  %s6 = inlined_call_operand.vmem [shape: f32[2,48,1], index: 6, kind: input, shape index: {}]
  %s7 = inlined_call_operand.vmem [shape: f32[2,8,48], index: 7, kind: input, shape index: {}]
  %s8 = inlined_call_operand.vmem [shape: f32[2,8,1], index: 8, kind: input, shape index: {}]
  %s9 = inlined_call_operand.vmem [shape: f32[2,8,72], index: 9, kind: input, shape index: {}]
  %s10 = inlined_call_operand.vmem [shape: f32[2,8,1], index: 10, kind: input, shape index: {}]
  %s11 = inlined_call_operand.vmem [shape: f32[16,72], index: 11, kind: input, shape index: {}]
  %s12 = inlined_call_operand.vmem [shape: f32[16,1], index: 12, kind: input, shape index: {}]
  %s13 = inlined_call_operand.vmem [shape: f32[2,16,384], index: 13, kind: output, shape index: {}]
  %s14 = sld [smem:[#allocation0]]
  $region85: #{wsdr_b_forward.1} parent=0
    _
  %s16 = ssub.s32 1, %s14
  %s17 = scalar_select 0, %s16, %s14
  loop: start=0, step=1, limit=4
  $region2: #{wsdr_b_forward.1} parent=0 // loop_pre_header
    _
  $region3: #{wsdr_b_forward.1} parent=0 // loop_header
    %s19 = sphi 0, %s23
    %p20 = scmp.ge.s32.totalorder %s19, 4
    %s29 = sphi 0, %s31
    %s32 = sphi 0, %s29
    %s33 = sphi 0, %s32
    %s49 = sphi 0, %s33
    %s55 = sphi 0, %s57
    %s58 = sphi 0, %s55
    %s59 = sphi 0, %s58
    %s75 = sphi 0, %s59
    %s79 = sphi 0, %s79
    %s81 = sphi 0, %s79
    %s82 = sphi 0, %s81
    %s96 = sphi 0, %s82
    %s100 = sphi 0, %s100
    %s102 = sphi 0, %s100
    %s103 = sphi 0, %s102
    %s117 = sphi 0, %s103
    %s121 = sphi 0, %s121
    %s123 = sphi 0, %s121
    %s124 = sphi 0, %s123
    %s138 = sphi 0, %s124
    %s142 = sphi 0, %s142
    %s144 = sphi 0, %s142
    %s145 = sphi 0, %s144
    %s159 = sphi 0, %s145
    %s163 = sphi 0, %s163
    %s165 = sphi 0, %s163
    %s166 = sphi 0, %s165
    %s180 = sphi 0, %s166
    %s184 = sphi 0, %s184
    %s186 = sphi 0, %s184
    %s187 = sphi 0, %s186
    %s201 = sphi 0, %s187
    %s205 = sphi 0, %s205
    %s207 = sphi 0, %s205
    %s208 = sphi 0, %s207
    %s222 = sphi 0, %s208
    %s226 = sphi 0, %s226
    %s228 = sphi 0, %s226
    %s229 = sphi 0, %s228
    %s243 = sphi 0, %s229
    %s247 = sphi 0, %s247
    %s249 = sphi 0, %s247
    %s250 = sphi 0, %s249
    %s264 = sphi 0, %s250
    %s268 = sphi 0, %s268
    %s270 = sphi 0, %s268
    %s271 = sphi 0, %s270
    %s285 = sphi 0, %s271
    %s289 = sphi 0, %s289
    %s291 = sphi 0, %s289
    %s292 = sphi 0, %s291
    %s306 = sphi 0, %s292
    %s312 = sphi 0, %s314
    %s315 = sphi 0, %s312
    %s316 = sphi 0, %s315
    %s332 = sphi 0, %s316
  $region4: #{wsdr_b_forward.1} parent=0 // loop_header_branch
    %22 = sbr.rel (%p20) target = $region8
  $region5: #{wsdr_b_forward.1} parent=0 // loop_body
    %s24 = ssub.s32 %s19, 1
    %s25 = ssub.s32 %s19, 2
    %s26 = sadd.s32 %s19, 1
    %s27 = ssub.s32 %s19, %s26
    %p28 = scmp.eq.s32.totalorder %s27, 0
    %s30 = sadd.s32 %s29, 1
    %s31 = scalar_select %p28, %s29, %s30
    %p34 = pneg %p28
    %p35 = scmp.eq.s32.totalorder %s19, 1
    %p36 = por %p34, %p35
    %p37 = scmp.ne.s32.totalorder %s29, %s32
    %p38 = scmp.eq.s32.totalorder %s19, 0
    %p39 = por %p37, %p38
    %p40 = scmp.ne.s32.totalorder %s29, %s32
    %p41 = scmp.eq.s32.totalorder %s24, 1
    %p42 = por %p40, %p41
    %p43 = scmp.ne.s32.totalorder %s32, %s33
    %p44 = scmp.eq.s32.totalorder %s24, 0
    %p45 = por %p43, %p44
    %p46 = scmp.ne.s32.totalorder %s32, %s33
    %p47 = scmp.eq.s32.totalorder %s25, 1
    %p48 = por %p46, %p47
    %p50 = scmp.ne.s32.totalorder %s33, %s49
    %p51 = scmp.eq.s32.totalorder %s25, 0
    %p52 = por %p50, %p51
    %s53 = ssub.s32 %s19, %s26
    %p54 = scmp.eq.s32.totalorder %s53, 0
    %s56 = sadd.s32 %s55, 1
    %s57 = scalar_select %p54, %s55, %s56
    %p60 = pneg %p54
    %p61 = scmp.eq.s32.totalorder %s19, 1
    %p62 = por %p60, %p61
    %p63 = scmp.ne.s32.totalorder %s55, %s58
    %p64 = scmp.eq.s32.totalorder %s19, 0
    %p65 = por %p63, %p64
    %p66 = scmp.ne.s32.totalorder %s55, %s58
    %p67 = scmp.eq.s32.totalorder %s24, 1
    %p68 = por %p66, %p67
    %p69 = scmp.ne.s32.totalorder %s58, %s59
    %p70 = scmp.eq.s32.totalorder %s24, 0
    %p71 = por %p69, %p70
    %p72 = scmp.ne.s32.totalorder %s58, %s59
    %p73 = scmp.eq.s32.totalorder %s25, 1
    %p74 = por %p72, %p73
    %p76 = scmp.ne.s32.totalorder %s59, %s75
    %p77 = scmp.eq.s32.totalorder %s25, 0
    %p78 = por %p76, %p77
    %s80 = sadd.s32 %s79, 1
    %p83 = scmp.eq.s32.totalorder %s19, 1
    %p84 = scmp.ne.s32.totalorder %s79, %s81
    %p85 = scmp.eq.s32.totalorder %s19, 0
    %p86 = por %p84, %p85
    %p87 = scmp.ne.s32.totalorder %s79, %s81
    %p88 = scmp.eq.s32.totalorder %s24, 1
    %p89 = por %p87, %p88
    %p90 = scmp.ne.s32.totalorder %s81, %s82
    %p91 = scmp.eq.s32.totalorder %s24, 0
    %p92 = por %p90, %p91
    %p93 = scmp.ne.s32.totalorder %s81, %s82
    %p94 = scmp.eq.s32.totalorder %s25, 1
    %p95 = por %p93, %p94
    %p97 = scmp.ne.s32.totalorder %s82, %s96
    %p98 = scmp.eq.s32.totalorder %s25, 0
    %p99 = por %p97, %p98
    %s101 = sadd.s32 %s100, 1
    %p104 = scmp.eq.s32.totalorder %s19, 1
    %p105 = scmp.ne.s32.totalorder %s100, %s102
    %p106 = scmp.eq.s32.totalorder %s19, 0
    %p107 = por %p105, %p106
    %p108 = scmp.ne.s32.totalorder %s100, %s102
    %p109 = scmp.eq.s32.totalorder %s24, 1
    %p110 = por %p108, %p109
    %p111 = scmp.ne.s32.totalorder %s102, %s103
    %p112 = scmp.eq.s32.totalorder %s24, 0
    %p113 = por %p111, %p112
    %p114 = scmp.ne.s32.totalorder %s102, %s103
    %p115 = scmp.eq.s32.totalorder %s25, 1
    %p116 = por %p114, %p115
    %p118 = scmp.ne.s32.totalorder %s103, %s117
    %p119 = scmp.eq.s32.totalorder %s25, 0
    %p120 = por %p118, %p119
    %s122 = sadd.s32 %s121, 1
    %p125 = scmp.eq.s32.totalorder %s19, 1
    %p126 = scmp.ne.s32.totalorder %s121, %s123
    %p127 = scmp.eq.s32.totalorder %s19, 0
    %p128 = por %p126, %p127
    %p129 = scmp.ne.s32.totalorder %s121, %s123
    %p130 = scmp.eq.s32.totalorder %s24, 1
    %p131 = por %p129, %p130
    %p132 = scmp.ne.s32.totalorder %s123, %s124
    %p133 = scmp.eq.s32.totalorder %s24, 0
    %p134 = por %p132, %p133
    %p135 = scmp.ne.s32.totalorder %s123, %s124
    %p136 = scmp.eq.s32.totalorder %s25, 1
    %p137 = por %p135, %p136
    %p139 = scmp.ne.s32.totalorder %s124, %s138
    %p140 = scmp.eq.s32.totalorder %s25, 0
    %p141 = por %p139, %p140
    %s143 = sadd.s32 %s142, 1
    %p146 = scmp.eq.s32.totalorder %s19, 1
    %p147 = scmp.ne.s32.totalorder %s142, %s144
    %p148 = scmp.eq.s32.totalorder %s19, 0
    %p149 = por %p147, %p148
    %p150 = scmp.ne.s32.totalorder %s142, %s144
    %p151 = scmp.eq.s32.totalorder %s24, 1
    %p152 = por %p150, %p151
    %p153 = scmp.ne.s32.totalorder %s144, %s145
    %p154 = scmp.eq.s32.totalorder %s24, 0
    %p155 = por %p153, %p154
    %p156 = scmp.ne.s32.totalorder %s144, %s145
    %p157 = scmp.eq.s32.totalorder %s25, 1
    %p158 = por %p156, %p157
    %p160 = scmp.ne.s32.totalorder %s145, %s159
    %p161 = scmp.eq.s32.totalorder %s25, 0
    %p162 = por %p160, %p161
    %s164 = sadd.s32 %s163, 1
    %p167 = scmp.eq.s32.totalorder %s19, 1
    %p168 = scmp.ne.s32.totalorder %s163, %s165
    %p169 = scmp.eq.s32.totalorder %s19, 0
    %p170 = por %p168, %p169
    %p171 = scmp.ne.s32.totalorder %s163, %s165
    %p172 = scmp.eq.s32.totalorder %s24, 1
    %p173 = por %p171, %p172
    %p174 = scmp.ne.s32.totalorder %s165, %s166
    %p175 = scmp.eq.s32.totalorder %s24, 0
    %p176 = por %p174, %p175
    %p177 = scmp.ne.s32.totalorder %s165, %s166
    %p178 = scmp.eq.s32.totalorder %s25, 1
    %p179 = por %p177, %p178
    %p181 = scmp.ne.s32.totalorder %s166, %s180
    %p182 = scmp.eq.s32.totalorder %s25, 0
    %p183 = por %p181, %p182
    %s185 = sadd.s32 %s184, 1
    %p188 = scmp.eq.s32.totalorder %s19, 1
    %p189 = scmp.ne.s32.totalorder %s184, %s186
    %p190 = scmp.eq.s32.totalorder %s19, 0
    %p191 = por %p189, %p190
    %p192 = scmp.ne.s32.totalorder %s184, %s186
    %p193 = scmp.eq.s32.totalorder %s24, 1
    %p194 = por %p192, %p193
    %p195 = scmp.ne.s32.totalorder %s186, %s187
    %p196 = scmp.eq.s32.totalorder %s24, 0
    %p197 = por %p195, %p196
    %p198 = scmp.ne.s32.totalorder %s186, %s187
    %p199 = scmp.eq.s32.totalorder %s25, 1
    %p200 = por %p198, %p199
    %p202 = scmp.ne.s32.totalorder %s187, %s201
    %p203 = scmp.eq.s32.totalorder %s25, 0
    %p204 = por %p202, %p203
    %s206 = sadd.s32 %s205, 1
    %p209 = scmp.eq.s32.totalorder %s19, 1
    %p210 = scmp.ne.s32.totalorder %s205, %s207
    %p211 = scmp.eq.s32.totalorder %s19, 0
    %p212 = por %p210, %p211
    %p213 = scmp.ne.s32.totalorder %s205, %s207
    %p214 = scmp.eq.s32.totalorder %s24, 1
    %p215 = por %p213, %p214
    %p216 = scmp.ne.s32.totalorder %s207, %s208
    %p217 = scmp.eq.s32.totalorder %s24, 0
    %p218 = por %p216, %p217
    %p219 = scmp.ne.s32.totalorder %s207, %s208
    %p220 = scmp.eq.s32.totalorder %s25, 1
    %p221 = por %p219, %p220
    %p223 = scmp.ne.s32.totalorder %s208, %s222
    %p224 = scmp.eq.s32.totalorder %s25, 0
    %p225 = por %p223, %p224
    %s227 = sadd.s32 %s226, 1
    %p230 = scmp.eq.s32.totalorder %s19, 1
    %p231 = scmp.ne.s32.totalorder %s226, %s228
    %p232 = scmp.eq.s32.totalorder %s19, 0
    %p233 = por %p231, %p232
    %p234 = scmp.ne.s32.totalorder %s226, %s228
    %p235 = scmp.eq.s32.totalorder %s24, 1
    %p236 = por %p234, %p235
    %p237 = scmp.ne.s32.totalorder %s228, %s229
    %p238 = scmp.eq.s32.totalorder %s24, 0
    %p239 = por %p237, %p238
    %p240 = scmp.ne.s32.totalorder %s228, %s229
    %p241 = scmp.eq.s32.totalorder %s25, 1
    %p242 = por %p240, %p241
    %p244 = scmp.ne.s32.totalorder %s229, %s243
    %p245 = scmp.eq.s32.totalorder %s25, 0
    %p246 = por %p244, %p245
    %s248 = sadd.s32 %s247, 1
    %p251 = scmp.eq.s32.totalorder %s19, 1
    %p252 = scmp.ne.s32.totalorder %s247, %s249
    %p253 = scmp.eq.s32.totalorder %s19, 0
    %p254 = por %p252, %p253
    %p255 = scmp.ne.s32.totalorder %s247, %s249
    %p256 = scmp.eq.s32.totalorder %s24, 1
    %p257 = por %p255, %p256
    %p258 = scmp.ne.s32.totalorder %s249, %s250
    %p259 = scmp.eq.s32.totalorder %s24, 0
    %p260 = por %p258, %p259
    %p261 = scmp.ne.s32.totalorder %s249, %s250
    %p262 = scmp.eq.s32.totalorder %s25, 1
    %p263 = por %p261, %p262
    %p265 = scmp.ne.s32.totalorder %s250, %s264
    %p266 = scmp.eq.s32.totalorder %s25, 0
    %p267 = por %p265, %p266
    %s269 = sadd.s32 %s268, 1
    %p272 = scmp.eq.s32.totalorder %s19, 1
    %p273 = scmp.ne.s32.totalorder %s268, %s270
    %p274 = scmp.eq.s32.totalorder %s19, 0
    %p275 = por %p273, %p274
    %p276 = scmp.ne.s32.totalorder %s268, %s270
    %p277 = scmp.eq.s32.totalorder %s24, 1
    %p278 = por %p276, %p277
    %p279 = scmp.ne.s32.totalorder %s270, %s271
    %p280 = scmp.eq.s32.totalorder %s24, 0
    %p281 = por %p279, %p280
    %p282 = scmp.ne.s32.totalorder %s270, %s271
    %p283 = scmp.eq.s32.totalorder %s25, 1
    %p284 = por %p282, %p283
    %p286 = scmp.ne.s32.totalorder %s271, %s285
    %p287 = scmp.eq.s32.totalorder %s25, 0
    %p288 = por %p286, %p287
    %s290 = sadd.s32 %s289, 1
    %p293 = scmp.eq.s32.totalorder %s19, 1
    %p294 = scmp.ne.s32.totalorder %s289, %s291
    %p295 = scmp.eq.s32.totalorder %s19, 0
    %p296 = por %p294, %p295
    %p297 = scmp.ne.s32.totalorder %s289, %s291
    %p298 = scmp.eq.s32.totalorder %s24, 1
    %p299 = por %p297, %p298
    %p300 = scmp.ne.s32.totalorder %s291, %s292
    %p301 = scmp.eq.s32.totalorder %s24, 0
    %p302 = por %p300, %p301
    %p303 = scmp.ne.s32.totalorder %s291, %s292
    %p304 = scmp.eq.s32.totalorder %s25, 1
    %p305 = por %p303, %p304
    %p307 = scmp.ne.s32.totalorder %s292, %s306
    %p308 = scmp.eq.s32.totalorder %s25, 0
    %p309 = por %p307, %p308
    %s310 = ssub.s32 %s19, %s26
    %p311 = scmp.eq.s32.totalorder %s310, 0
    %s313 = sadd.s32 %s312, 1
    %s314 = scalar_select %p311, %s312, %s313
    %p317 = pneg %p311
    %p318 = scmp.eq.s32.totalorder %s19, 1
    %p319 = por %p317, %p318
    %p320 = scmp.ne.s32.totalorder %s312, %s315
    %p321 = scmp.eq.s32.totalorder %s19, 0
    %p322 = por %p320, %p321
    %p323 = scmp.ne.s32.totalorder %s312, %s315
    %p324 = scmp.eq.s32.totalorder %s24, 1
    %p325 = por %p323, %p324
    %p326 = scmp.ne.s32.totalorder %s315, %s316
    %p327 = scmp.eq.s32.totalorder %s24, 0
    %p328 = por %p326, %p327
    %p329 = scmp.ne.s32.totalorder %s315, %s316
    %p330 = scmp.eq.s32.totalorder %s25, 1
    %p331 = por %p329, %p330
    %p333 = scmp.ne.s32.totalorder %s316, %s332
    %p334 = scmp.eq.s32.totalorder %s25, 0
    %p335 = por %p333, %p334
    %p336 = scmp.le.s32.totalorder 1, %s19
    %p337 = scmp.lt.s32.totalorder %s19, 3
    %p338 = pnand %p336, %p337
    %p339 = pneg %p338
    // Predicated region
    $region9: #{wsdr_b_forward.1} parent=5 // pred_check
      _
    $region10: #{wsdr_b_forward.1} parent=5 // pred_check_branch
      %341 = sbr.rel (%p338) target = $region12
    $region11: #{wsdr_b_forward.1} parent=5 // pred_region
      %s342 = ssub.s32 %s19, 1
      // Predicated region
      $region13: #{wsdr_b_forward.1} parent=11 // pred_check
        %p343 = pneg %p92
      $region14: #{wsdr_b_forward.1} parent=11 // pred_check_branch
        %345 = sbr.rel (%p343) target = $region16
      $region15: #{wsdr_b_forward.1} parent=11 // pred_region
        _
      $region16: #{wsdr_b_forward.1} parent=11 // pred_fallthru
        _
      // Predicated region
      $region17: #{wsdr_b_forward.1} parent=11 // pred_check
        %p346 = pneg %p113
      $region18: #{wsdr_b_forward.1} parent=11 // pred_check_branch
        %348 = sbr.rel (%p346) target = $region20
      $region19: #{wsdr_b_forward.1} parent=11 // pred_region
        _
      $region20: #{wsdr_b_forward.1} parent=11 // pred_fallthru
        _
      // Predicated region
      $region21: #{wsdr_b_forward.1} parent=11 // pred_check
        %p349 = pneg %p134
      $region22: #{wsdr_b_forward.1} parent=11 // pred_check_branch
        %351 = sbr.rel (%p349) target = $region24
      $region23: #{wsdr_b_forward.1} parent=11 // pred_region
        _
      $region24: #{wsdr_b_forward.1} parent=11 // pred_fallthru
        _
      // Predicated region
      $region25: #{wsdr_b_forward.1} parent=11 // pred_check
        %p352 = pneg %p155
      $region26: #{wsdr_b_forward.1} parent=11 // pred_check_branch
        %354 = sbr.rel (%p352) target = $region28
      $region27: #{wsdr_b_forward.1} parent=11 // pred_region
        _
      $region28: #{wsdr_b_forward.1} parent=11 // pred_fallthru
        _
      // Predicated region
      $region29: #{wsdr_b_forward.1} parent=11 // pred_check
        %p355 = pneg %p176
      $region30: #{wsdr_b_forward.1} parent=11 // pred_check_branch
        %357 = sbr.rel (%p355) target = $region32
      $region31: #{wsdr_b_forward.1} parent=11 // pred_region
        _
      $region32: #{wsdr_b_forward.1} parent=11 // pred_fallthru
        _
      // Predicated region
      $region33: #{wsdr_b_forward.1} parent=11 // pred_check
        %p358 = pneg %p197
      $region34: #{wsdr_b_forward.1} parent=11 // pred_check_branch
        %360 = sbr.rel (%p358) target = $region36
      $region35: #{wsdr_b_forward.1} parent=11 // pred_region
        _
      $region36: #{wsdr_b_forward.1} parent=11 // pred_fallthru
        _
      // Predicated region
      $region37: #{wsdr_b_forward.1} parent=11 // pred_check
        %p361 = pneg %p218
      $region38: #{wsdr_b_forward.1} parent=11 // pred_check_branch
        %363 = sbr.rel (%p361) target = $region40
      $region39: #{wsdr_b_forward.1} parent=11 // pred_region
        _
      $region40: #{wsdr_b_forward.1} parent=11 // pred_fallthru
        _
      // Predicated region
      $region41: #{wsdr_b_forward.1} parent=11 // pred_check
        %p364 = pneg %p239
      $region42: #{wsdr_b_forward.1} parent=11 // pred_check_branch
        %366 = sbr.rel (%p364) target = $region44
      $region43: #{wsdr_b_forward.1} parent=11 // pred_region
        _
      $region44: #{wsdr_b_forward.1} parent=11 // pred_fallthru
        _
      // Predicated region
      $region45: #{wsdr_b_forward.1} parent=11 // pred_check
        %p367 = pneg %p260
      $region46: #{wsdr_b_forward.1} parent=11 // pred_check_branch
        %369 = sbr.rel (%p367) target = $region48
      $region47: #{wsdr_b_forward.1} parent=11 // pred_region
        _
      $region48: #{wsdr_b_forward.1} parent=11 // pred_fallthru
        _
      // Predicated region
      $region49: #{wsdr_b_forward.1} parent=11 // pred_check
        %p370 = pneg %p281
      $region50: #{wsdr_b_forward.1} parent=11 // pred_check_branch
        %372 = sbr.rel (%p370) target = $region52
      $region51: #{wsdr_b_forward.1} parent=11 // pred_region
        _
      $region52: #{wsdr_b_forward.1} parent=11 // pred_fallthru
        _
      // Predicated region
      $region53: #{wsdr_b_forward.1} parent=11 // pred_check
        %p373 = pneg %p302
      $region54: #{wsdr_b_forward.1} parent=11 // pred_check_branch
        %375 = sbr.rel (%p373) target = $region56
      $region55: #{wsdr_b_forward.1} parent=11 // pred_region
        _
      $region56: #{wsdr_b_forward.1} parent=11 // pred_fallthru
        _
    $region12: #{wsdr_b_forward.1} parent=5 // pred_fallthru
      _
    %p376 = scmp.lt.s32.totalorder %s19, 2
    // Predicated region
    $region57: #{wsdr_b_forward.1} parent=5 // pred_check
      %p377 = pneg %p376
    $region58: #{wsdr_b_forward.1} parent=5 // pred_check_branch
      %379 = sbr.rel (%p377) target = $region60
    $region59: #{wsdr_b_forward.1} parent=5 // pred_region
      // Predicated region
      $region61: #{wsdr_b_forward.1} parent=59 // pred_check
        %p380 = pneg %p39
      $region62: #{wsdr_b_forward.1} parent=59 // pred_check_branch
        %382 = sbr.rel (%p380) target = $region64
      $region63: #{wsdr_b_forward.1} parent=59 // pred_region
        %p383 = scmp.lt.s32.totalorder %s19, 1
        %s384 = scalar_select %p383, %s19, 1
        %s385 = smul.addr %s384, 3
        %s386 = smul.addr %s385, 8
        %s387 = scalar_lea.vmem %s0, %s386
      $region64: #{wsdr_b_forward.1} parent=59 // pred_fallthru
        _
      // Predicated region
      $region65: #{wsdr_b_forward.1} parent=59 // pred_check
        %p388 = pneg %p65
      $region66: #{wsdr_b_forward.1} parent=59 // pred_check_branch
        %390 = sbr.rel (%p388) target = $region68
      $region67: #{wsdr_b_forward.1} parent=59 // pred_region
        %p391 = scmp.lt.s32.totalorder %s19, 1
        %s392 = scalar_select %p391, %s19, 1
        %s393 = smul.addr %s392, 6
        %s394 = smul.addr %s393, 8
        %s395 = scalar_lea.vmem %s1, %s394
      $region68: #{wsdr_b_forward.1} parent=59 // pred_fallthru
        _
    $region60: #{wsdr_b_forward.1} parent=5 // pred_fallthru
      _
    %p396 = scmp.le.s32.totalorder 1, %s19
    %p397 = scmp.lt.s32.totalorder %s19, 3
    %p398 = pnand %p396, %p397
    %p399 = pneg %p398
    // Predicated region
    $region69: #{wsdr_b_forward.1} parent=5 // pred_check
      _
    $region70: #{wsdr_b_forward.1} parent=5 // pred_check_branch
      %401 = sbr.rel (%p398) target = $region72
    $region71: #{wsdr_b_forward.1} parent=5 // pred_region
      %s402 = ssub.s32 %s19, 1
      %p403 = scmp.lt.s32.totalorder %s24, 1
      %s404 = scalar_select %p403, %s24, 1
      %s405 = smul.addr %s404, 3
      %s406 = smul.addr %s405, 8
      %s407 = scalar_lea.vmem %s0, %s406
      %p408 = pneg %p45
      %p409 = pneg %p42
      %p410 = scmp.lt.s32.totalorder %s24, 1
      %s411 = scalar_select %p410, %s24, 1
      %s412 = smul.addr %s411, 6
      %s413 = smul.addr %s412, 8
      %s414 = scalar_lea.vmem %s1, %s413
      %p415 = pneg %p71
      %p416 = pneg %p68
      %p417 = pneg %p92
      %p418 = pneg %p89
      %p419 = pneg %p113
      %p420 = pneg %p110
      %p421 = pneg %p134
      %p422 = pneg %p131
      %p423 = pneg %p155
      %p424 = pneg %p152
      %p425 = pneg %p176
      %p426 = pneg %p173
      %p427 = pneg %p197
      %p428 = pneg %p194
      %p429 = pneg %p218
      %p430 = pneg %p215
      %p431 = pneg %p239
      %p432 = pneg %p236
      %p433 = pneg %p260
      %p434 = pneg %p257
      %p435 = pneg %p281
      %p436 = pneg %p278
      %p437 = pneg %p302
      %p438 = pneg %p299
      %p439 = pneg %p328
      %p440 = pneg %p325
      %p441 = scmp.lt.s32.totalorder %s24, 1
      %s442 = scalar_select %p441, %s24, 1
      %s443 = smul.addr %s442, 6
      %s444 = smul.addr %s443, 8
      %s445 = scalar_lea.vmem %s13, %s444
      %p446 = scmp.lt.s32.totalorder %s24, 1
      %s447 = scalar_select %p446, %s24, 1
      %s448 = smul.addr %s447, 3
      %s449 = smul.addr %s448, 8
      %s450 = scalar_lea.vmem %s0, %s449
      %p451 = scmp.lt.s32.totalorder %s24, 1
      %s452 = scalar_select %p451, %s24, 1
      %s453 = smul.addr %s452, 6
      %s454 = smul.addr %s453, 8
      %s455 = scalar_lea.vmem %s1, %s454
      %p456 = scmp.lt.s32.totalorder %s24, 1
      %s457 = scalar_select %p456, %s24, 1
      %s458 = smul.addr %s457, 6
      %s459 = smul.addr %s458, 8
      %s460 = scalar_lea.vmem %s13, %s459
      %v461 = vld [vmem:[%s2] sm:$0x7]
      %462 = vst [vmem:[#allocation2] sm:$0xff] 0.0
      %463 = vst [vmem:[#allocation2 + $0x20] sm:$0xff] 0.0
      %v464 = vld [vmem:[%s450] sm:$0xff]
      %v465 = vld [vmem:[%s450 + $0x8] sm:$0xff]
      %v466 = vld [vmem:[%s450 + $0x10] sm:$0xff]
      %v467 = vld [vmem:[%s3] sm:$0xff]
      %v468 = vld [vmem:[%s4] sm:$0xff]
      %v470 = vlaneseq
      %v471 = vshrl.u32 %v470, 7
      %v472 = vsub.s32 0, %v471
      %v473 = vrot.slane %v461, %v472
      %v474 = vlaneseq
      %v475 = vshrl.u32 %v474, 7
      %v476 = vsub.s32 1, %v475
      %v477 = vrot.slane %v461, %v476
      %v478 = vlaneseq
      %v479 = vshrl.u32 %v478, 7
      %v480 = vsub.s32 2, %v479
      %v481 = vrot.slane %v461, %v480
      %v485 = vmul.f32 %v464, %v473
      %v486 = vmul.f32 %v465, %v477
      %v487 = vmul.f32 %v466, %v481
      %488 = vst [vmem:[#allocation2 + $0x8] sm:$0xff] %v485
      %489 = vst [vmem:[#allocation2 + $0x10] sm:$0xff] %v486
      %490 = vst [vmem:[#allocation2 + $0x18] sm:$0xff] %v487
      %v491 = vld [vmem:[#allocation2] sm:$0xff]
      %v492 = vld [vmem:[#allocation2 + $0x8] sm:$0xff]
      %v493 = vld [vmem:[#allocation2 + $0x10] sm:$0xff]
      %v494 = vld [vmem:[#allocation2 + $0x18] sm:$0xff]
      %499 = vrot.lane.b32.xlu0 %v491, 19
      %v500 = vpop.permute.xlu0 %499
      %501 = vrot.lane.b32.xlu0 %v492, 19
      %v502 = vpop.permute.xlu0 %501
      %503 = vrot.lane.b32.xlu0 %v493, 19
      %v504 = vpop.permute.xlu0 %503
      %505 = vrot.lane.b32.xlu0 %v494, 19
      %v506 = vpop.permute.xlu0 %505
      %vm507 = vcmask 154624
      %v508 = vsel %vm507, %v500, %v502
      %v509 = vsel %vm507, %v502, %v504
      %v510 = vsel %vm507, %v504, %v506
      %514 = vst [vmem:[#allocation3] sm:$0xff] %v508
      %515 = vst [vmem:[#allocation3 + $0x8] sm:$0xff] %v509
      %516 = vst [vmem:[#allocation3 + $0x10] sm:$0xff] %v510
      %v517 = vld [vmem:[#allocation2] sm:$0xff]
      %v518 = vld [vmem:[#allocation2 + $0x8] sm:$0xff]
      %v519 = vld [vmem:[#allocation2 + $0x10] sm:$0xff]
      %v520 = vld [vmem:[#allocation2 + $0x18] sm:$0xff]
      %525 = vrot.lane.b32.xlu0 %v517, 18
      %v526 = vpop.permute.xlu0 %525
      %527 = vrot.lane.b32.xlu0 %v518, 18
      %v528 = vpop.permute.xlu0 %527
      %529 = vrot.lane.b32.xlu0 %v519, 18
      %v530 = vpop.permute.xlu0 %529
      %531 = vrot.lane.b32.xlu0 %v520, 18
      %v532 = vpop.permute.xlu0 %531
      %vm533 = vcmask 146432
      %v534 = vsel %vm533, %v526, %v528
      %v535 = vsel %vm533, %v528, %v530
      %v536 = vsel %vm533, %v530, %v532
      %540 = vst [vmem:[#allocation3 + $0x18] sm:$0xff] %v534
      %541 = vst [vmem:[#allocation3 + $0x20] sm:$0xff] %v535
      %542 = vst [vmem:[#allocation3 + $0x28] sm:$0xff] %v536
      %v543 = vld [vmem:[#allocation2] sm:$0xff]
      %v544 = vld [vmem:[#allocation2 + $0x8] sm:$0xff]
      %v545 = vld [vmem:[#allocation2 + $0x10] sm:$0xff]
      %v546 = vld [vmem:[#allocation2 + $0x18] sm:$0xff]
      %551 = vrot.lane.b32.xlu0 %v543, 17
      %v552 = vpop.permute.xlu0 %551
      %553 = vrot.lane.b32.xlu0 %v544, 17
      %v554 = vpop.permute.xlu0 %553
      %555 = vrot.lane.b32.xlu0 %v545, 17
      %v556 = vpop.permute.xlu0 %555
      %557 = vrot.lane.b32.xlu0 %v546, 17
      %v558 = vpop.permute.xlu0 %557
      %vm559 = vcmask 138240
      %v560 = vsel %vm559, %v552, %v554
      %v561 = vsel %vm559, %v554, %v556
      %v562 = vsel %vm559, %v556, %v558
      %566 = vst [vmem:[#allocation3 + $0x30] sm:$0xff] %v560
      %567 = vst [vmem:[#allocation3 + $0x38] sm:$0xff] %v561
      %568 = vst [vmem:[#allocation3 + $0x40] sm:$0xff] %v562
      %v569 = vld [vmem:[#allocation2] sm:$0xff]
      %v570 = vld [vmem:[#allocation2 + $0x8] sm:$0xff]
      %v571 = vld [vmem:[#allocation2 + $0x10] sm:$0xff]
      %v572 = vld [vmem:[#allocation2 + $0x18] sm:$0xff]
      %577 = vrot.lane.b32.xlu0 %v569, 1
      %v578 = vpop.permute.xlu0 %577
      %579 = vrot.lane.b32.xlu0 %v570, 1
      %v580 = vpop.permute.xlu0 %579
      %581 = vrot.lane.b32.xlu0 %v571, 1
      %v582 = vpop.permute.xlu0 %581
      %583 = vrot.lane.b32.xlu0 %v572, 1
      %v584 = vpop.permute.xlu0 %583
      %vm585 = vcmask 7168
      %v586 = vsel %vm585, %v578, %v580
      %v587 = vsel %vm585, %v580, %v582
      %v588 = vsel %vm585, %v582, %v584
      %592 = vst [vmem:[#allocation3 + $0x48] sm:$0xff] %v586
      %593 = vst [vmem:[#allocation3 + $0x50] sm:$0xff] %v587
      %594 = vst [vmem:[#allocation3 + $0x58] sm:$0xff] %v588
      %v595 = vld [vmem:[#allocation2 + $0x8] sm:$0xff]
      %v596 = vld [vmem:[#allocation2 + $0x10] sm:$0xff]
      %v597 = vld [vmem:[#allocation2 + $0x18] sm:$0xff]
      %598 = vst [vmem:[#allocation3 + $0x60] sm:$0xff] %v595
      %599 = vst [vmem:[#allocation3 + $0x68] sm:$0xff] %v596
      %600 = vst [vmem:[#allocation3 + $0x70] sm:$0xff] %v597
      %v601 = vld [vmem:[#allocation2 + $0x8] sm:$0xff]
      %v602 = vld [vmem:[#allocation2 + $0x10] sm:$0xff]
      %v603 = vld [vmem:[#allocation2 + $0x18] sm:$0xff]
      %v604 = vld [vmem:[#allocation2 + $0x20] sm:$0xff]
      %609 = vrot.lane.b32.xlu0 %v601, 127
      %v610 = vpop.permute.xlu0 %609
      %611 = vrot.lane.b32.xlu0 %v602, 127
      %v612 = vpop.permute.xlu0 %611
      %613 = vrot.lane.b32.xlu0 %v603, 127
      %v614 = vpop.permute.xlu0 %613
      %615 = vrot.lane.b32.xlu0 %v604, 127
      %v616 = vpop.permute.xlu0 %615
      %vm617 = vcmask 1039360
      %v618 = vsel %vm617, %v610, %v612
      %v619 = vsel %vm617, %v612, %v614
      %v620 = vsel %vm617, %v614, %v616
      %624 = vst [vmem:[#allocation3 + $0x78] sm:$0xff] %v618
      %625 = vst [vmem:[#allocation3 + $0x80] sm:$0xff] %v619
      %626 = vst [vmem:[#allocation3 + $0x88] sm:$0xff] %v620
      %v627 = vld [vmem:[#allocation2 + $0x8] sm:$0xff]
      %v628 = vld [vmem:[#allocation2 + $0x10] sm:$0xff]
      %v629 = vld [vmem:[#allocation2 + $0x18] sm:$0xff]
      %v630 = vld [vmem:[#allocation2 + $0x20] sm:$0xff]
      %635 = vrot.lane.b32.xlu0 %v627, 111
      %v636 = vpop.permute.xlu0 %635
      %637 = vrot.lane.b32.xlu0 %v628, 111
      %v638 = vpop.permute.xlu0 %637
      %639 = vrot.lane.b32.xlu0 %v629, 111
      %v640 = vpop.permute.xlu0 %639
      %641 = vrot.lane.b32.xlu0 %v630, 111
      %v642 = vpop.permute.xlu0 %641
      %vm643 = vcmask 908288
      %v644 = vsel %vm643, %v636, %v638
      %v645 = vsel %vm643, %v638, %v640
      %v646 = vsel %vm643, %v640, %v642
      %650 = vst [vmem:[#allocation3 + $0x90] sm:$0xff] %v644
      %651 = vst [vmem:[#allocation3 + $0x98] sm:$0xff] %v645
      %652 = vst [vmem:[#allocation3 + $0xa0] sm:$0xff] %v646
      %v653 = vld [vmem:[#allocation2 + $0x8] sm:$0xff]
      %v654 = vld [vmem:[#allocation2 + $0x10] sm:$0xff]
      %v655 = vld [vmem:[#allocation2 + $0x18] sm:$0xff]
      %v656 = vld [vmem:[#allocation2 + $0x20] sm:$0xff]
      %661 = vrot.lane.b32.xlu0 %v653, 110
      %v662 = vpop.permute.xlu0 %661
      %663 = vrot.lane.b32.xlu0 %v654, 110
      %v664 = vpop.permute.xlu0 %663
      %665 = vrot.lane.b32.xlu0 %v655, 110
      %v666 = vpop.permute.xlu0 %665
      %667 = vrot.lane.b32.xlu0 %v656, 110
      %v668 = vpop.permute.xlu0 %667
      %vm669 = vcmask 900096
      %v670 = vsel %vm669, %v662, %v664
      %v671 = vsel %vm669, %v664, %v666
      %v672 = vsel %vm669, %v666, %v668
      %676 = vst [vmem:[#allocation3 + $0xa8] sm:$0xff] %v670
      %677 = vst [vmem:[#allocation3 + $0xb0] sm:$0xff] %v671
      %678 = vst [vmem:[#allocation3 + $0xb8] sm:$0xff] %v672
      %v679 = vld [vmem:[#allocation2 + $0x8] sm:$0xff]
      %v680 = vld [vmem:[#allocation2 + $0x10] sm:$0xff]
      %v681 = vld [vmem:[#allocation2 + $0x18] sm:$0xff]
      %v682 = vld [vmem:[#allocation2 + $0x20] sm:$0xff]
      %687 = vrot.lane.b32.xlu0 %v679, 109
      %v688 = vpop.permute.xlu0 %687
      %689 = vrot.lane.b32.xlu0 %v680, 109
      %v690 = vpop.permute.xlu0 %689
      %691 = vrot.lane.b32.xlu0 %v681, 109
      %v692 = vpop.permute.xlu0 %691
      %693 = vrot.lane.b32.xlu0 %v682, 109
      %v694 = vpop.permute.xlu0 %693
      %vm695 = vcmask 891904
      %v696 = vsel %vm695, %v688, %v690
      %v697 = vsel %vm695, %v690, %v692
      %v698 = vsel %vm695, %v692, %v694
      %702 = vst [vmem:[#allocation3 + $0xc0] sm:$0xff] %v696
      %703 = vst [vmem:[#allocation3 + $0xc8] sm:$0xff] %v697
      %704 = vst [vmem:[#allocation3 + $0xd0] sm:$0xff] %v698
      %v705 = vld [vmem:[#allocation3] sm:$0xff]
      %v706 = vld [vmem:[#allocation3 + $0x8] sm:$0xff]
      %v707 = vld [vmem:[#allocation3 + $0x10] sm:$0xff]
      %v708 = vld [vmem:[#allocation3 + $0x18] sm:$0xff]
      %v709 = vld [vmem:[#allocation3 + $0x20] sm:$0xff]
      %v710 = vld [vmem:[#allocation3 + $0x28] sm:$0xff]
      %v711 = vld [vmem:[#allocation3 + $0x30] sm:$0xff]
      %v712 = vld [vmem:[#allocation3 + $0x38] sm:$0xff]
      %v713 = vld [vmem:[#allocation3 + $0x40] sm:$0xff]
      %v714 = vld [vmem:[#allocation3 + $0x48] sm:$0xff]
      %v715 = vld [vmem:[#allocation3 + $0x50] sm:$0xff]
      %v716 = vld [vmem:[#allocation3 + $0x58] sm:$0xff]
      %v717 = vld [vmem:[#allocation3 + $0x60] sm:$0xff]
      %v718 = vld [vmem:[#allocation3 + $0x68] sm:$0xff]
      %v719 = vld [vmem:[#allocation3 + $0x70] sm:$0xff]
      %v720 = vld [vmem:[#allocation3 + $0x78] sm:$0xff]
      %v721 = vld [vmem:[#allocation3 + $0x80] sm:$0xff]
      %v722 = vld [vmem:[#allocation3 + $0x88] sm:$0xff]
      %v723 = vld [vmem:[#allocation3 + $0x90] sm:$0xff]
      %v724 = vld [vmem:[#allocation3 + $0x98] sm:$0xff]
      %v725 = vld [vmem:[#allocation3 + $0xa0] sm:$0xff]
      %v726 = vld [vmem:[#allocation3 + $0xa8] sm:$0xff]
      %v727 = vld [vmem:[#allocation3 + $0xb0] sm:$0xff]
      %v728 = vld [vmem:[#allocation3 + $0xb8] sm:$0xff]
      %v729 = vld [vmem:[#allocation3 + $0xc0] sm:$0xff]
      %v730 = vld [vmem:[#allocation3 + $0xc8] sm:$0xff]
      %v731 = vld [vmem:[#allocation3 + $0xd0] sm:$0xff]
      %733 = vset.pattern.permute.xlu0 0
      %734 = vperm.xlu0 %733, %v468
      %v735 = vpop.permute.xlu0 %734
      %vm737 = vcmask 588800
      %v739 = vsel %vm737, %v467, 0
      %741 = vmatprep.subr.mxu0 %v706
      %742 = vmatpush1.msra.mxu0 %v705
      %743 = vmatprep.subr.mxu0 %v709
      %744 = vmatpush1.msra.mxu0 %v708
      %745 = vmatprep.subr.mxu0 %v712
      %746 = vmatpush1.msra.mxu0 %v711
      %747 = vmatprep.subr.mxu0 %v715
      %748 = vmatpush1.msra.mxu0 %v714
      %749 = vmatprep.subr.mxu0 %v718
      %750 = vmatpush1.msra.mxu0 %v717
      %751 = vmatprep.subr.mxu0 %v721
      %752 = vmatpush1.msra.mxu0 %v720
      %753 = vmatprep.subr.mxu0 %v724
      %754 = vmatpush1.msra.mxu0 %v723
      %755 = vmatprep.subr.mxu0 %v727
      %756 = vmatpush1.msra.mxu0 %v726
      %757 = vmatprep.subr.mxu0 %v730
      %758 = vmatpush1.msra.mxu0 %v729
      %759 = vmatprep.subr.mxu0 0.0
      %760 = vmatpush1.msra.mxu0 0.0
      %761 = vmatprep.subr.mxu0 0.0
      %762 = vmatpush1.msra.mxu0 0.0
      %763 = vmatprep.subr.mxu0 0.0
      %764 = vmatpush1.msra.mxu0 0.0
      %765 = vmatprep.subr.mxu0 0.0
      %766 = vmatpush1.msra.mxu0 0.0
      %767 = vmatprep.subr.mxu0 0.0
      %768 = vmatpush1.msra.mxu0 0.0
      %769 = vmatprep.subr.mxu0 0.0
      %770 = vmatpush1.msra.mxu0 0.0
      %771 = vmatprep.subr.mxu0 0.0
      %772 = vmatpush1.msra.mxu0 0.0
      %773 = vmatprep.subr.mxu0 0.0
      %774 = vmatpush1.msra.mxu0 0.0
      %775 = vmatprep.subr.mxu0 0.0
      %776 = vmatpush1.msra.mxu0 0.0
      %777 = vmatprep.subr.mxu0 0.0
      %778 = vmatpush1.msra.mxu0 0.0
      %779 = vmatprep.subr.mxu0 0.0
      %780 = vmatpush1.msra.mxu0 0.0
      %781 = vmatprep.subr.mxu0 0.0
      %782 = vmatpush1.msra.mxu0 0.0
      %783 = vmatprep.subr.mxu0 0.0
      %784 = vmatpush1.msra.mxu0 0.0
      %785 = vmatprep.subr.mxu0 0.0
      %786 = vmatpush1.msra.mxu0 0.0
      %787 = vmatprep.subr.mxu0 0.0
      %788 = vmatpush1.msra.mxu0 0.0
      %789 = vmatprep.subr.mxu0 0.0
      %790 = vmatpush1.msra.mxu0 0.0
      %791 = vmatprep.subr.mxu0 0.0
      %792 = vmatpush1.msra.mxu0 0.0
      %793 = vmatprep.subr.mxu0 0.0
      %794 = vmatpush1.msra.mxu0 0.0
      %795 = vmatprep.subr.mxu0 0.0
      %796 = vmatpush1.msra.mxu0 0.0
      %797 = vmatprep.subr.mxu0 0.0
      %798 = vmatpush1.msra.mxu0 0.0
      %799 = vmatprep.subr.mxu0 0.0
      %800 = vmatpush1.msra.mxu0 0.0
      %801 = vmatprep.subr.mxu0 0.0
      %802 = vmatpush1.msra.mxu0 0.0
      %803 = vmatprep.subr.mxu0 0.0
      %804 = vmatpush1.msra.mxu0 0.0
      %805 = vmatprep.mubr.f32.mxu0 0.0
      %806 = vmatmul.mubr.f32.gmra.mrb[0].mxu0 %v739
      %v807 = vpop.f32.mrb[0].mxu0
      %v808 = vadd.f32 %v735, %v807
      %v809 = vpop.f32.mrb[0].mxu0
      %v810 = vadd.f32 %v735, %v809
      %811 = vdwg.mxu0
      %812 = vmatprep.subr.mxu0 0.0
      %813 = vmatpush1.msra.mxu0 %v707
      %814 = vmatprep.subr.mxu0 0.0
      %815 = vmatpush1.msra.mxu0 %v710
      %816 = vmatprep.subr.mxu0 0.0
      %817 = vmatpush1.msra.mxu0 %v713
      %818 = vmatprep.subr.mxu0 0.0
      %819 = vmatpush1.msra.mxu0 %v716
      %820 = vmatprep.subr.mxu0 0.0
      %821 = vmatpush1.msra.mxu0 %v719
      %822 = vmatprep.subr.mxu0 0.0
      %823 = vmatpush1.msra.mxu0 %v722
      %824 = vmatprep.subr.mxu0 0.0
      %825 = vmatpush1.msra.mxu0 %v725
      %826 = vmatprep.subr.mxu0 0.0
      %827 = vmatpush1.msra.mxu0 %v728
      %828 = vmatprep.subr.mxu0 0.0
      %829 = vmatpush1.msra.mxu0 %v731
      %830 = vmatprep.subr.mxu0 0.0
      %831 = vmatpush1.msra.mxu0 0.0
      %832 = vmatprep.subr.mxu0 0.0
      %833 = vmatpush1.msra.mxu0 0.0
      %834 = vmatprep.subr.mxu0 0.0
      %835 = vmatpush1.msra.mxu0 0.0
      %836 = vmatprep.subr.mxu0 0.0
      %837 = vmatpush1.msra.mxu0 0.0
      %838 = vmatprep.subr.mxu0 0.0
      %839 = vmatpush1.msra.mxu0 0.0
      %840 = vmatprep.subr.mxu0 0.0
      %841 = vmatpush1.msra.mxu0 0.0
      %842 = vmatprep.subr.mxu0 0.0
      %843 = vmatpush1.msra.mxu0 0.0
      %844 = vmatprep.subr.mxu0 0.0
      %845 = vmatpush1.msra.mxu0 0.0
      %846 = vmatprep.subr.mxu0 0.0
      %847 = vmatpush1.msra.mxu0 0.0
      %848 = vmatprep.subr.mxu0 0.0
      %849 = vmatpush1.msra.mxu0 0.0
      %850 = vmatprep.subr.mxu0 0.0
      %851 = vmatpush1.msra.mxu0 0.0
      %852 = vmatprep.subr.mxu0 0.0
      %853 = vmatpush1.msra.mxu0 0.0
      %854 = vmatprep.subr.mxu0 0.0
      %855 = vmatpush1.msra.mxu0 0.0
      %856 = vmatprep.subr.mxu0 0.0
      %857 = vmatpush1.msra.mxu0 0.0
      %858 = vmatprep.subr.mxu0 0.0
      %859 = vmatpush1.msra.mxu0 0.0
      %860 = vmatprep.subr.mxu0 0.0
      %861 = vmatpush1.msra.mxu0 0.0
      %862 = vmatprep.subr.mxu0 0.0
      %863 = vmatpush1.msra.mxu0 0.0
      %864 = vmatprep.subr.mxu0 0.0
      %865 = vmatpush1.msra.mxu0 0.0
      %866 = vmatprep.subr.mxu0 0.0
      %867 = vmatpush1.msra.mxu0 0.0
      %868 = vmatprep.subr.mxu0 0.0
      %869 = vmatpush1.msra.mxu0 0.0
      %870 = vmatprep.subr.mxu0 0.0
      %871 = vmatpush1.msra.mxu0 0.0
      %872 = vmatprep.subr.mxu0 0.0
      %873 = vmatpush1.msra.mxu0 0.0
      %874 = vmatprep.subr.mxu0 0.0
      %875 = vmatpush1.msra.mxu0 0.0
      %876 = vmatprep.mubr.f32.mxu0 0.0
      %877 = vmatmul.mubr.f32.gmra.mrb[0].mxu0 %v739
      %v878 = vpop.f32.mrb[0].mxu0
      %v879 = vadd.f32 %v735, %v878
      %v880 = vpop.f32.mrb[0].mxu0
      %881 = vdwg.mxu0
      %v882 = vld [vmem:[%s5] sm:$0xff]
      %v883 = vld [vmem:[%s5 + $0x8] sm:$0xff]
      %v884 = vld [vmem:[%s5 + $0x10] sm:$0xff]
      %v885 = vld [vmem:[%s5 + $0x18] sm:$0xff]
      %v886 = vld [vmem:[%s5 + $0x20] sm:$0xff]
      %v887 = vld [vmem:[%s5 + $0x28] sm:$0xff]
      %v888 = vld [vmem:[%s6] sm:$0xff]
      %v889 = vld [vmem:[%s6 + $0x8] sm:$0xff]
      %v890 = vld [vmem:[%s6 + $0x10] sm:$0xff]
      %v891 = vld [vmem:[%s6 + $0x18] sm:$0xff]
      %v892 = vld [vmem:[%s6 + $0x20] sm:$0xff]
      %v893 = vld [vmem:[%s6 + $0x28] sm:$0xff]
      %895 = vset.pattern.permute.xlu0 0
      %896 = vperm.xlu0 %895, %v888
      %v897 = vpop.permute.xlu0 %896
      %900 = vset.pattern.permute.xlu0 0
      %901 = vperm.xlu0 %900, %v889
      %v902 = vpop.permute.xlu0 %901
      %905 = vset.pattern.permute.xlu0 0
      %906 = vperm.xlu0 %905, %v890
      %v907 = vpop.permute.xlu0 %906
      %910 = vset.pattern.permute.xlu0 0
      %911 = vperm.xlu0 %910, %v891
      %v912 = vpop.permute.xlu0 %911
      %915 = vset.pattern.permute.xlu0 0
      %916 = vperm.xlu0 %915, %v892
      %v917 = vpop.permute.xlu0 %916
      %920 = vset.pattern.permute.xlu0 0
      %921 = vperm.xlu0 %920, %v893
      %v922 = vpop.permute.xlu0 %921
      %vm924 = vcmask 64512
      %v926 = vsel %vm924, %v882, 0
      %v929 = vsel %vm924, %v883, 0
      %v932 = vsel %vm924, %v884, 0
      %v935 = vsel %vm924, %v885, 0
      %v938 = vsel %vm924, %v886, 0
      %v941 = vsel %vm924, %v887, 0
      %943 = vmatprep.subr.mxu0 %v810
      %944 = vmatpush1.msra.mxu0 %v808
      %945 = vmatprep.subr.mxu0 0.0
      %946 = vmatpush1.msra.mxu0 0.0
      %947 = vmatprep.subr.mxu0 0.0
      %948 = vmatpush1.msra.mxu0 0.0
      %949 = vmatprep.subr.mxu0 0.0
      %950 = vmatpush1.msra.mxu0 0.0
      %951 = vmatprep.subr.mxu0 0.0
      %952 = vmatpush1.msra.mxu0 0.0
      %953 = vmatprep.subr.mxu0 0.0
      %954 = vmatpush1.msra.mxu0 0.0
      %955 = vmatprep.subr.mxu0 0.0
      %956 = vmatpush1.msra.mxu0 0.0
      %957 = vmatprep.subr.mxu0 0.0
      %958 = vmatpush1.msra.mxu0 0.0
      %959 = vmatprep.subr.mxu0 0.0
      %960 = vmatpush1.msra.mxu0 0.0
      %961 = vmatprep.subr.mxu0 0.0
      %962 = vmatpush1.msra.mxu0 0.0
      %963 = vmatprep.subr.mxu0 0.0
      %964 = vmatpush1.msra.mxu0 0.0
      %965 = vmatprep.subr.mxu0 0.0
      %966 = vmatpush1.msra.mxu0 0.0
      %967 = vmatprep.subr.mxu0 0.0
      %968 = vmatpush1.msra.mxu0 0.0
      %969 = vmatprep.subr.mxu0 0.0
      %970 = vmatpush1.msra.mxu0 0.0
      %971 = vmatprep.subr.mxu0 0.0
      %972 = vmatpush1.msra.mxu0 0.0
      %973 = vmatprep.subr.mxu0 0.0
      %974 = vmatpush1.msra.mxu0 0.0
      %975 = vmatprep.subr.mxu0 0.0
      %976 = vmatpush1.msra.mxu0 0.0
      %977 = vmatprep.subr.mxu0 0.0
      %978 = vmatpush1.msra.mxu0 0.0
      %979 = vmatprep.subr.mxu0 0.0
      %980 = vmatpush1.msra.mxu0 0.0
      %981 = vmatprep.subr.mxu0 0.0
      %982 = vmatpush1.msra.mxu0 0.0
      %983 = vmatprep.subr.mxu0 0.0
      %984 = vmatpush1.msra.mxu0 0.0
      %985 = vmatprep.subr.mxu0 0.0
      %986 = vmatpush1.msra.mxu0 0.0
      %987 = vmatprep.subr.mxu0 0.0
      %988 = vmatpush1.msra.mxu0 0.0
      %989 = vmatprep.subr.mxu0 0.0
      %990 = vmatpush1.msra.mxu0 0.0
      %991 = vmatprep.subr.mxu0 0.0
      %992 = vmatpush1.msra.mxu0 0.0
      %993 = vmatprep.subr.mxu0 0.0
      %994 = vmatpush1.msra.mxu0 0.0
      %995 = vmatprep.subr.mxu0 0.0
      %996 = vmatpush1.msra.mxu0 0.0
      %997 = vmatprep.subr.mxu0 0.0
      %998 = vmatpush1.msra.mxu0 0.0
      %999 = vmatprep.subr.mxu0 0.0
      %1000 = vmatpush1.msra.mxu0 0.0
      %1001 = vmatprep.subr.mxu0 0.0
      %1002 = vmatpush1.msra.mxu0 0.0
      %1003 = vmatprep.subr.mxu0 0.0
      %1004 = vmatpush1.msra.mxu0 0.0
      %1005 = vmatprep.subr.mxu0 0.0
      %1006 = vmatpush1.msra.mxu0 0.0
      %1007 = vmatprep.mubr.f32.mxu0 0.0
      %1008 = vmatmul.mubr.f32.gmra.mrb[0].mxu0 %v926
      %v1009 = vpop.f32.mrb[0].mxu0
      %v1010 = vadd.f32 %v897, %v1009
      %v1011 = vpop.f32.mrb[0].mxu0
      %v1012 = vadd.f32 %v897, %v1011
      %1013 = vmatprep.mubr.f32.mxu0 0.0
      %1014 = vmatmul.mubr.f32.gmra.mrb[0].mxu0 %v929
      %v1015 = vpop.f32.mrb[0].mxu0
      %v1016 = vadd.f32 %v902, %v1015
      %v1017 = vpop.f32.mrb[0].mxu0
      %v1018 = vadd.f32 %v902, %v1017
      %1019 = vmatprep.mubr.f32.mxu0 0.0
      %1020 = vmatmul.mubr.f32.gmra.mrb[0].mxu0 %v932
      %v1021 = vpop.f32.mrb[0].mxu0
      %v1022 = vadd.f32 %v907, %v1021
      %v1023 = vpop.f32.mrb[0].mxu0
      %v1024 = vadd.f32 %v907, %v1023
      %1025 = vmatprep.mubr.f32.mxu0 0.0
      %1026 = vmatmul.mubr.f32.gmra.mrb[0].mxu0 %v935
      %v1027 = vpop.f32.mrb[0].mxu0
      %v1028 = vadd.f32 %v912, %v1027
      %v1029 = vpop.f32.mrb[0].mxu0
      %v1030 = vadd.f32 %v912, %v1029
      %1031 = vmatprep.mubr.f32.mxu0 0.0
      %1032 = vmatmul.mubr.f32.gmra.mrb[0].mxu0 %v938
      %v1033 = vpop.f32.mrb[0].mxu0
      %v1034 = vadd.f32 %v917, %v1033
      %v1035 = vpop.f32.mrb[0].mxu0
      %v1036 = vadd.f32 %v917, %v1035
      %1037 = vmatprep.mubr.f32.mxu0 0.0
      %1038 = vmatmul.mubr.f32.gmra.mrb[0].mxu0 %v941
      %v1039 = vpop.f32.mrb[0].mxu0
      %v1040 = vadd.f32 %v922, %v1039
      %v1041 = vpop.f32.mrb[0].mxu0
      %v1042 = vadd.f32 %v922, %v1041
      %1043 = vdwg.mxu0
      %1044 = vmatprep.subr.mxu0 0.0
      %1045 = vmatpush1.msra.mxu0 %v879
      %1046 = vmatprep.subr.mxu0 0.0
      %1047 = vmatpush1.msra.mxu0 0.0
      %1048 = vmatprep.subr.mxu0 0.0
      %1049 = vmatpush1.msra.mxu0 0.0
      %1050 = vmatprep.subr.mxu0 0.0
      %1051 = vmatpush1.msra.mxu0 0.0
      %1052 = vmatprep.subr.mxu0 0.0
      %1053 = vmatpush1.msra.mxu0 0.0
      %1054 = vmatprep.subr.mxu0 0.0
      %1055 = vmatpush1.msra.mxu0 0.0
      %1056 = vmatprep.subr.mxu0 0.0
      %1057 = vmatpush1.msra.mxu0 0.0
      %1058 = vmatprep.subr.mxu0 0.0
      %1059 = vmatpush1.msra.mxu0 0.0
      %1060 = vmatprep.subr.mxu0 0.0
      %1061 = vmatpush1.msra.mxu0 0.0
      %1062 = vmatprep.subr.mxu0 0.0
      %1063 = vmatpush1.msra.mxu0 0.0
      %1064 = vmatprep.subr.mxu0 0.0
      %1065 = vmatpush1.msra.mxu0 0.0
      %1066 = vmatprep.subr.mxu0 0.0
      %1067 = vmatpush1.msra.mxu0 0.0
      %1068 = vmatprep.subr.mxu0 0.0
      %1069 = vmatpush1.msra.mxu0 0.0
      %1070 = vmatprep.subr.mxu0 0.0
      %1071 = vmatpush1.msra.mxu0 0.0
      %1072 = vmatprep.subr.mxu0 0.0
      %1073 = vmatpush1.msra.mxu0 0.0
      %1074 = vmatprep.subr.mxu0 0.0
      %1075 = vmatpush1.msra.mxu0 0.0
      %1076 = vmatprep.subr.mxu0 0.0
      %1077 = vmatpush1.msra.mxu0 0.0
      %1078 = vmatprep.subr.mxu0 0.0
      %1079 = vmatpush1.msra.mxu0 0.0
      %1080 = vmatprep.subr.mxu0 0.0
      %1081 = vmatpush1.msra.mxu0 0.0
      %1082 = vmatprep.subr.mxu0 0.0
      %1083 = vmatpush1.msra.mxu0 0.0
      %1084 = vmatprep.subr.mxu0 0.0
      %1085 = vmatpush1.msra.mxu0 0.0
      %1086 = vmatprep.subr.mxu0 0.0
      %1087 = vmatpush1.msra.mxu0 0.0
      %1088 = vmatprep.subr.mxu0 0.0
      %1089 = vmatpush1.msra.mxu0 0.0
      %1090 = vmatprep.subr.mxu0 0.0
      %1091 = vmatpush1.msra.mxu0 0.0
      %1092 = vmatprep.subr.mxu0 0.0
      %1093 = vmatpush1.msra.mxu0 0.0
      %1094 = vmatprep.subr.mxu0 0.0
      %1095 = vmatpush1.msra.mxu0 0.0
      %1096 = vmatprep.subr.mxu0 0.0
      %1097 = vmatpush1.msra.mxu0 0.0
      %1098 = vmatprep.subr.mxu0 0.0
      %1099 = vmatpush1.msra.mxu0 0.0
      %1100 = vmatprep.subr.mxu0 0.0
      %1101 = vmatpush1.msra.mxu0 0.0
      %1102 = vmatprep.subr.mxu0 0.0
      %1103 = vmatpush1.msra.mxu0 0.0
      %1104 = vmatprep.subr.mxu0 0.0
      %1105 = vmatpush1.msra.mxu0 0.0
      %1106 = vmatprep.subr.mxu0 0.0
      %1107 = vmatpush1.msra.mxu0 0.0
      %1108 = vmatprep.mubr.f32.mxu0 0.0
      %1109 = vmatmul.mubr.f32.gmra.mrb[0].mxu0 %v926
      %v1110 = vpop.f32.mrb[0].mxu0
      %v1111 = vadd.f32 %v897, %v1110
      %v1112 = vpop.f32.mrb[0].mxu0
      %1113 = vmatprep.mubr.f32.mxu0 0.0
      %1114 = vmatmul.mubr.f32.gmra.mrb[0].mxu0 %v929
      %v1115 = vpop.f32.mrb[0].mxu0
      %v1116 = vadd.f32 %v902, %v1115
      %v1117 = vpop.f32.mrb[0].mxu0
      %1118 = vmatprep.mubr.f32.mxu0 0.0
      %1119 = vmatmul.mubr.f32.gmra.mrb[0].mxu0 %v932
      %v1120 = vpop.f32.mrb[0].mxu0
      %v1121 = vadd.f32 %v907, %v1120
      %v1122 = vpop.f32.mrb[0].mxu0
      %1123 = vmatprep.mubr.f32.mxu0 0.0
      %1124 = vmatmul.mubr.f32.gmra.mrb[0].mxu0 %v935
      %v1125 = vpop.f32.mrb[0].mxu0
      %v1126 = vadd.f32 %v912, %v1125
      %v1127 = vpop.f32.mrb[0].mxu0
      %1128 = vmatprep.mubr.f32.mxu0 0.0
      %1129 = vmatmul.mubr.f32.gmra.mrb[0].mxu0 %v938
      %v1130 = vpop.f32.mrb[0].mxu0
      %v1131 = vadd.f32 %v917, %v1130
      %v1132 = vpop.f32.mrb[0].mxu0
      %1133 = vmatprep.mubr.f32.mxu0 0.0
      %1134 = vmatmul.mubr.f32.gmra.mrb[0].mxu0 %v941
      %v1135 = vpop.f32.mrb[0].mxu0
      %v1136 = vadd.f32 %v922, %v1135
      %v1137 = vpop.f32.mrb[0].mxu0
      %1138 = vdwg.mxu0
      %v1139 = vmax.f32 %v1010, 0.0
      %v1140 = vmax.f32 %v1012, 0.0
      %v1141 = vmax.f32 %v1111, 0.0
      %v1142 = vmax.f32 %v1016, 0.0
      %v1143 = vmax.f32 %v1018, 0.0
      %v1144 = vmax.f32 %v1116, 0.0
      %v1145 = vmax.f32 %v1022, 0.0
      %v1146 = vmax.f32 %v1024, 0.0
      %v1147 = vmax.f32 %v1121, 0.0
      %v1148 = vmax.f32 %v1028, 0.0
      %v1149 = vmax.f32 %v1030, 0.0
      %v1150 = vmax.f32 %v1126, 0.0
      %v1151 = vmax.f32 %v1034, 0.0
      %v1152 = vmax.f32 %v1036, 0.0
      %v1153 = vmax.f32 %v1131, 0.0
      %v1154 = vmax.f32 %v1040, 0.0
      %v1155 = vmax.f32 %v1042, 0.0
      %v1156 = vmax.f32 %v1136, 0.0
      %v1157 = vld [vmem:[%s7] sm:$0xff]
      %v1158 = vld [vmem:[%s8] sm:$0xff]
      %1160 = vset.pattern.permute.xlu0 0
      %1161 = vperm.xlu0 %1160, %v1158
      %v1162 = vpop.permute.xlu0 %1161
      %vm1164 = vcmask 392192
      %v1166 = vsel %vm1164, %v1157, 0
      %1168 = vmatprep.subr.mxu0 %v1140
      %1169 = vmatpush1.msra.mxu0 %v1139
      %1170 = vmatprep.subr.mxu0 %v1143
      %1171 = vmatpush1.msra.mxu0 %v1142
      %1172 = vmatprep.subr.mxu0 %v1146
      %1173 = vmatpush1.msra.mxu0 %v1145
      %1174 = vmatprep.subr.mxu0 %v1149
      %1175 = vmatpush1.msra.mxu0 %v1148
      %1176 = vmatprep.subr.mxu0 %v1152
      %1177 = vmatpush1.msra.mxu0 %v1151
      %1178 = vmatprep.subr.mxu0 %v1155
      %1179 = vmatpush1.msra.mxu0 %v1154
      %1180 = vmatprep.subr.mxu0 0.0
      %1181 = vmatpush1.msra.mxu0 0.0
      %1182 = vmatprep.subr.mxu0 0.0
      %1183 = vmatpush1.msra.mxu0 0.0
      %1184 = vmatprep.subr.mxu0 0.0
      %1185 = vmatpush1.msra.mxu0 0.0
      %1186 = vmatprep.subr.mxu0 0.0
      %1187 = vmatpush1.msra.mxu0 0.0
      %1188 = vmatprep.subr.mxu0 0.0
      %1189 = vmatpush1.msra.mxu0 0.0
      %1190 = vmatprep.subr.mxu0 0.0
      %1191 = vmatpush1.msra.mxu0 0.0
      %1192 = vmatprep.subr.mxu0 0.0
      %1193 = vmatpush1.msra.mxu0 0.0
      %1194 = vmatprep.subr.mxu0 0.0
      %1195 = vmatpush1.msra.mxu0 0.0
      %1196 = vmatprep.subr.mxu0 0.0
      %1197 = vmatpush1.msra.mxu0 0.0
      %1198 = vmatprep.subr.mxu0 0.0
      %1199 = vmatpush1.msra.mxu0 0.0
      %1200 = vmatprep.subr.mxu0 0.0
      %1201 = vmatpush1.msra.mxu0 0.0
      %1202 = vmatprep.subr.mxu0 0.0
      %1203 = vmatpush1.msra.mxu0 0.0
      %1204 = vmatprep.subr.mxu0 0.0
      %1205 = vmatpush1.msra.mxu0 0.0
      %1206 = vmatprep.subr.mxu0 0.0
      %1207 = vmatpush1.msra.mxu0 0.0
      %1208 = vmatprep.subr.mxu0 0.0
      %1209 = vmatpush1.msra.mxu0 0.0
      %1210 = vmatprep.subr.mxu0 0.0
      %1211 = vmatpush1.msra.mxu0 0.0
      %1212 = vmatprep.subr.mxu0 0.0
      %1213 = vmatpush1.msra.mxu0 0.0
      %1214 = vmatprep.subr.mxu0 0.0
      %1215 = vmatpush1.msra.mxu0 0.0
      %1216 = vmatprep.subr.mxu0 0.0
      %1217 = vmatpush1.msra.mxu0 0.0
      %1218 = vmatprep.subr.mxu0 0.0
      %1219 = vmatpush1.msra.mxu0 0.0
      %1220 = vmatprep.subr.mxu0 0.0
      %1221 = vmatpush1.msra.mxu0 0.0
      %1222 = vmatprep.subr.mxu0 0.0
      %1223 = vmatpush1.msra.mxu0 0.0
      %1224 = vmatprep.subr.mxu0 0.0
      %1225 = vmatpush1.msra.mxu0 0.0
      %1226 = vmatprep.subr.mxu0 0.0
      %1227 = vmatpush1.msra.mxu0 0.0
      %1228 = vmatprep.subr.mxu0 0.0
      %1229 = vmatpush1.msra.mxu0 0.0
      %1230 = vmatprep.subr.mxu0 0.0
      %1231 = vmatpush1.msra.mxu0 0.0
      %1232 = vmatprep.mubr.f32.mxu0 0.0
      %1233 = vmatmul.mubr.f32.gmra.mrb[0].mxu0 %v1166
      %v1234 = vpop.f32.mrb[0].mxu0
      %v1235 = vadd.f32 %v1162, %v1234
      %v1236 = vpop.f32.mrb[0].mxu0
      %v1237 = vadd.f32 %v1162, %v1236
      %1238 = vdwg.mxu0
      %1239 = vmatprep.subr.mxu0 0.0
      %1240 = vmatpush1.msra.mxu0 %v1141
      %1241 = vmatprep.subr.mxu0 0.0
      %1242 = vmatpush1.msra.mxu0 %v1144
      %1243 = vmatprep.subr.mxu0 0.0
      %1244 = vmatpush1.msra.mxu0 %v1147
      %1245 = vmatprep.subr.mxu0 0.0
      %1246 = vmatpush1.msra.mxu0 %v1150
      %1247 = vmatprep.subr.mxu0 0.0
      %1248 = vmatpush1.msra.mxu0 %v1153
      %1249 = vmatprep.subr.mxu0 0.0
      %1250 = vmatpush1.msra.mxu0 %v1156
      %1251 = vmatprep.subr.mxu0 0.0
      %1252 = vmatpush1.msra.mxu0 0.0
      %1253 = vmatprep.subr.mxu0 0.0
      %1254 = vmatpush1.msra.mxu0 0.0
      %1255 = vmatprep.subr.mxu0 0.0
      %1256 = vmatpush1.msra.mxu0 0.0
      %1257 = vmatprep.subr.mxu0 0.0
      %1258 = vmatpush1.msra.mxu0 0.0
      %1259 = vmatprep.subr.mxu0 0.0
      %1260 = vmatpush1.msra.mxu0 0.0
      %1261 = vmatprep.subr.mxu0 0.0
      %1262 = vmatpush1.msra.mxu0 0.0
      %1263 = vmatprep.subr.mxu0 0.0
      %1264 = vmatpush1.msra.mxu0 0.0
      %1265 = vmatprep.subr.mxu0 0.0
      %1266 = vmatpush1.msra.mxu0 0.0
      %1267 = vmatprep.subr.mxu0 0.0
      %1268 = vmatpush1.msra.mxu0 0.0
      %1269 = vmatprep.subr.mxu0 0.0
      %1270 = vmatpush1.msra.mxu0 0.0
      %1271 = vmatprep.subr.mxu0 0.0
      %1272 = vmatpush1.msra.mxu0 0.0
      %1273 = vmatprep.subr.mxu0 0.0
      %1274 = vmatpush1.msra.mxu0 0.0
      %1275 = vmatprep.subr.mxu0 0.0
      %1276 = vmatpush1.msra.mxu0 0.0
      %1277 = vmatprep.subr.mxu0 0.0
      %1278 = vmatpush1.msra.mxu0 0.0
      %1279 = vmatprep.subr.mxu0 0.0
      %1280 = vmatpush1.msra.mxu0 0.0
      %1281 = vmatprep.subr.mxu0 0.0
      %1282 = vmatpush1.msra.mxu0 0.0
      %1283 = vmatprep.subr.mxu0 0.0
      %1284 = vmatpush1.msra.mxu0 0.0
      %1285 = vmatprep.subr.mxu0 0.0
      %1286 = vmatpush1.msra.mxu0 0.0
      %1287 = vmatprep.subr.mxu0 0.0
      %1288 = vmatpush1.msra.mxu0 0.0
      %1289 = vmatprep.subr.mxu0 0.0
      %1290 = vmatpush1.msra.mxu0 0.0
      %1291 = vmatprep.subr.mxu0 0.0
      %1292 = vmatpush1.msra.mxu0 0.0
      %1293 = vmatprep.subr.mxu0 0.0
      %1294 = vmatpush1.msra.mxu0 0.0
      %1295 = vmatprep.subr.mxu0 0.0
      %1296 = vmatpush1.msra.mxu0 0.0
      %1297 = vmatprep.subr.mxu0 0.0
      %1298 = vmatpush1.msra.mxu0 0.0
      %1299 = vmatprep.subr.mxu0 0.0
      %1300 = vmatpush1.msra.mxu0 0.0
      %1301 = vmatprep.subr.mxu0 0.0
      %1302 = vmatpush1.msra.mxu0 0.0
      %1303 = vmatprep.mubr.f32.mxu0 0.0
      %1304 = vmatmul.mubr.f32.gmra.mrb[0].mxu0 %v1166
      %v1305 = vpop.f32.mrb[0].mxu0
      %v1306 = vadd.f32 %v1162, %v1305
      %v1307 = vpop.f32.mrb[0].mxu0
      %1308 = vdwg.mxu0
      %v1309 = vld [vmem:[%s9] sm:$0xff]
      %v1310 = vld [vmem:[%s10] sm:$0xff]
      %v1311 = vmul.f32 %v1235, %v473
      %v1312 = vmul.f32 %v1237, %v477
      %v1313 = vmul.f32 %v1306, %v481
      %1314 = vst [vmem:[#allocation2 + $0x8] sm:$0xff] %v1311
      %1315 = vst [vmem:[#allocation2 + $0x10] sm:$0xff] %v1312
      %1316 = vst [vmem:[#allocation2 + $0x18] sm:$0xff] %v1313
      %v1317 = vld [vmem:[#allocation2] sm:$0xff]
      %v1318 = vld [vmem:[#allocation2 + $0x8] sm:$0xff]
      %v1319 = vld [vmem:[#allocation2 + $0x10] sm:$0xff]
      %v1320 = vld [vmem:[#allocation2 + $0x18] sm:$0xff]
      %1325 = vrot.lane.b32.xlu0 %v1317, 19
      %v1326 = vpop.permute.xlu0 %1325
      %1327 = vrot.lane.b32.xlu0 %v1318, 19
      %v1328 = vpop.permute.xlu0 %1327
      %1329 = vrot.lane.b32.xlu0 %v1319, 19
      %v1330 = vpop.permute.xlu0 %1329
      %1331 = vrot.lane.b32.xlu0 %v1320, 19
      %v1332 = vpop.permute.xlu0 %1331
      %v1333 = vsel %vm507, %v1326, %v1328
      %v1334 = vsel %vm507, %v1328, %v1330
      %v1335 = vsel %vm507, %v1330, %v1332
      %1339 = vst [vmem:[#allocation3] sm:$0xff] %v1333
      %1340 = vst [vmem:[#allocation3 + $0x8] sm:$0xff] %v1334
      %1341 = vst [vmem:[#allocation3 + $0x10] sm:$0xff] %v1335
      %v1342 = vld [vmem:[#allocation2] sm:$0xff]
      %v1343 = vld [vmem:[#allocation2 + $0x8] sm:$0xff]
      %v1344 = vld [vmem:[#allocation2 + $0x10] sm:$0xff]
      %v1345 = vld [vmem:[#allocation2 + $0x18] sm:$0xff]
      %1350 = vrot.lane.b32.xlu0 %v1342, 18
      %v1351 = vpop.permute.xlu0 %1350
      %1352 = vrot.lane.b32.xlu0 %v1343, 18
      %v1353 = vpop.permute.xlu0 %1352
      %1354 = vrot.lane.b32.xlu0 %v1344, 18
      %v1355 = vpop.permute.xlu0 %1354
      %1356 = vrot.lane.b32.xlu0 %v1345, 18
      %v1357 = vpop.permute.xlu0 %1356
      %v1358 = vsel %vm533, %v1351, %v1353
      %v1359 = vsel %vm533, %v1353, %v1355
      %v1360 = vsel %vm533, %v1355, %v1357
      %1364 = vst [vmem:[#allocation3 + $0x18] sm:$0xff] %v1358
      %1365 = vst [vmem:[#allocation3 + $0x20] sm:$0xff] %v1359
      %1366 = vst [vmem:[#allocation3 + $0x28] sm:$0xff] %v1360
      %v1367 = vld [vmem:[#allocation2] sm:$0xff]
      %v1368 = vld [vmem:[#allocation2 + $0x8] sm:$0xff]
      %v1369 = vld [vmem:[#allocation2 + $0x10] sm:$0xff]
      %v1370 = vld [vmem:[#allocation2 + $0x18] sm:$0xff]
      %1375 = vrot.lane.b32.xlu0 %v1367, 17
      %v1376 = vpop.permute.xlu0 %1375
      %1377 = vrot.lane.b32.xlu0 %v1368, 17
      %v1378 = vpop.permute.xlu0 %1377
      %1379 = vrot.lane.b32.xlu0 %v1369, 17
      %v1380 = vpop.permute.xlu0 %1379
      %1381 = vrot.lane.b32.xlu0 %v1370, 17
      %v1382 = vpop.permute.xlu0 %1381
      %v1383 = vsel %vm559, %v1376, %v1378
      %v1384 = vsel %vm559, %v1378, %v1380
      %v1385 = vsel %vm559, %v1380, %v1382
      %1389 = vst [vmem:[#allocation3 + $0x30] sm:$0xff] %v1383
      %1390 = vst [vmem:[#allocation3 + $0x38] sm:$0xff] %v1384
      %1391 = vst [vmem:[#allocation3 + $0x40] sm:$0xff] %v1385
      %v1392 = vld [vmem:[#allocation2] sm:$0xff]
      %v1393 = vld [vmem:[#allocation2 + $0x8] sm:$0xff]
      %v1394 = vld [vmem:[#allocation2 + $0x10] sm:$0xff]
      %v1395 = vld [vmem:[#allocation2 + $0x18] sm:$0xff]
      %1400 = vrot.lane.b32.xlu0 %v1392, 1
      %v1401 = vpop.permute.xlu0 %1400
      %1402 = vrot.lane.b32.xlu0 %v1393, 1
      %v1403 = vpop.permute.xlu0 %1402
      %1404 = vrot.lane.b32.xlu0 %v1394, 1
      %v1405 = vpop.permute.xlu0 %1404
      %1406 = vrot.lane.b32.xlu0 %v1395, 1
      %v1407 = vpop.permute.xlu0 %1406
      %v1408 = vsel %vm585, %v1401, %v1403
      %v1409 = vsel %vm585, %v1403, %v1405
      %v1410 = vsel %vm585, %v1405, %v1407
      %1414 = vst [vmem:[#allocation3 + $0x48] sm:$0xff] %v1408
      %1415 = vst [vmem:[#allocation3 + $0x50] sm:$0xff] %v1409
      %1416 = vst [vmem:[#allocation3 + $0x58] sm:$0xff] %v1410
      %v1417 = vld [vmem:[#allocation2 + $0x8] sm:$0xff]
      %v1418 = vld [vmem:[#allocation2 + $0x10] sm:$0xff]
      %v1419 = vld [vmem:[#allocation2 + $0x18] sm:$0xff]
      %1420 = vst [vmem:[#allocation3 + $0x60] sm:$0xff] %v1417
      %1421 = vst [vmem:[#allocation3 + $0x68] sm:$0xff] %v1418
      %1422 = vst [vmem:[#allocation3 + $0x70] sm:$0xff] %v1419
      %v1423 = vld [vmem:[#allocation2 + $0x8] sm:$0xff]
      %v1424 = vld [vmem:[#allocation2 + $0x10] sm:$0xff]
      %v1425 = vld [vmem:[#allocation2 + $0x18] sm:$0xff]
      %v1426 = vld [vmem:[#allocation2 + $0x20] sm:$0xff]
      %1431 = vrot.lane.b32.xlu0 %v1423, 127
      %v1432 = vpop.permute.xlu0 %1431
      %1433 = vrot.lane.b32.xlu0 %v1424, 127
      %v1434 = vpop.permute.xlu0 %1433
      %1435 = vrot.lane.b32.xlu0 %v1425, 127
      %v1436 = vpop.permute.xlu0 %1435
      %1437 = vrot.lane.b32.xlu0 %v1426, 127
      %v1438 = vpop.permute.xlu0 %1437
      %v1439 = vsel %vm617, %v1432, %v1434
      %v1440 = vsel %vm617, %v1434, %v1436
      %v1441 = vsel %vm617, %v1436, %v1438
      %1445 = vst [vmem:[#allocation3 + $0x78] sm:$0xff] %v1439
      %1446 = vst [vmem:[#allocation3 + $0x80] sm:$0xff] %v1440
      %1447 = vst [vmem:[#allocation3 + $0x88] sm:$0xff] %v1441
      %v1448 = vld [vmem:[#allocation2 + $0x8] sm:$0xff]
      %v1449 = vld [vmem:[#allocation2 + $0x10] sm:$0xff]
      %v1450 = vld [vmem:[#allocation2 + $0x18] sm:$0xff]
      %v1451 = vld [vmem:[#allocation2 + $0x20] sm:$0xff]
      %1456 = vrot.lane.b32.xlu0 %v1448, 111
      %v1457 = vpop.permute.xlu0 %1456
      %1458 = vrot.lane.b32.xlu0 %v1449, 111
      %v1459 = vpop.permute.xlu0 %1458
      %1460 = vrot.lane.b32.xlu0 %v1450, 111
      %v1461 = vpop.permute.xlu0 %1460
      %1462 = vrot.lane.b32.xlu0 %v1451, 111
      %v1463 = vpop.permute.xlu0 %1462
      %v1464 = vsel %vm643, %v1457, %v1459
      %v1465 = vsel %vm643, %v1459, %v1461
      %v1466 = vsel %vm643, %v1461, %v1463
      %1470 = vst [vmem:[#allocation3 + $0x90] sm:$0xff] %v1464
      %1471 = vst [vmem:[#allocation3 + $0x98] sm:$0xff] %v1465
      %1472 = vst [vmem:[#allocation3 + $0xa0] sm:$0xff] %v1466
      %v1473 = vld [vmem:[#allocation2 + $0x8] sm:$0xff]
      %v1474 = vld [vmem:[#allocation2 + $0x10] sm:$0xff]
      %v1475 = vld [vmem:[#allocation2 + $0x18] sm:$0xff]
      %v1476 = vld [vmem:[#allocation2 + $0x20] sm:$0xff]
      %1481 = vrot.lane.b32.xlu0 %v1473, 110
      %v1482 = vpop.permute.xlu0 %1481
      %1483 = vrot.lane.b32.xlu0 %v1474, 110
      %v1484 = vpop.permute.xlu0 %1483
      %1485 = vrot.lane.b32.xlu0 %v1475, 110
      %v1486 = vpop.permute.xlu0 %1485
      %1487 = vrot.lane.b32.xlu0 %v1476, 110
      %v1488 = vpop.permute.xlu0 %1487
      %v1489 = vsel %vm669, %v1482, %v1484
      %v1490 = vsel %vm669, %v1484, %v1486
      %v1491 = vsel %vm669, %v1486, %v1488
      %1495 = vst [vmem:[#allocation3 + $0xa8] sm:$0xff] %v1489
      %1496 = vst [vmem:[#allocation3 + $0xb0] sm:$0xff] %v1490
      %1497 = vst [vmem:[#allocation3 + $0xb8] sm:$0xff] %v1491
      %v1498 = vld [vmem:[#allocation2 + $0x8] sm:$0xff]
      %v1499 = vld [vmem:[#allocation2 + $0x10] sm:$0xff]
      %v1500 = vld [vmem:[#allocation2 + $0x18] sm:$0xff]
      %v1501 = vld [vmem:[#allocation2 + $0x20] sm:$0xff]
      %1506 = vrot.lane.b32.xlu0 %v1498, 109
      %v1507 = vpop.permute.xlu0 %1506
      %1508 = vrot.lane.b32.xlu0 %v1499, 109
      %v1509 = vpop.permute.xlu0 %1508
      %1510 = vrot.lane.b32.xlu0 %v1500, 109
      %v1511 = vpop.permute.xlu0 %1510
      %1512 = vrot.lane.b32.xlu0 %v1501, 109
      %v1513 = vpop.permute.xlu0 %1512
      %v1514 = vsel %vm695, %v1507, %v1509
      %v1515 = vsel %vm695, %v1509, %v1511
      %v1516 = vsel %vm695, %v1511, %v1513
      %1520 = vst [vmem:[#allocation3 + $0xc0] sm:$0xff] %v1514
      %1521 = vst [vmem:[#allocation3 + $0xc8] sm:$0xff] %v1515
      %1522 = vst [vmem:[#allocation3 + $0xd0] sm:$0xff] %v1516
      %v1523 = vld [vmem:[#allocation3] sm:$0xff]
      %v1524 = vld [vmem:[#allocation3 + $0x8] sm:$0xff]
      %v1525 = vld [vmem:[#allocation3 + $0x10] sm:$0xff]
      %v1526 = vld [vmem:[#allocation3 + $0x18] sm:$0xff]
      %v1527 = vld [vmem:[#allocation3 + $0x20] sm:$0xff]
      %v1528 = vld [vmem:[#allocation3 + $0x28] sm:$0xff]
      %v1529 = vld [vmem:[#allocation3 + $0x30] sm:$0xff]
      %v1530 = vld [vmem:[#allocation3 + $0x38] sm:$0xff]
      %v1531 = vld [vmem:[#allocation3 + $0x40] sm:$0xff]
      %v1532 = vld [vmem:[#allocation3 + $0x48] sm:$0xff]
      %v1533 = vld [vmem:[#allocation3 + $0x50] sm:$0xff]
      %v1534 = vld [vmem:[#allocation3 + $0x58] sm:$0xff]
      %v1535 = vld [vmem:[#allocation3 + $0x60] sm:$0xff]
      %v1536 = vld [vmem:[#allocation3 + $0x68] sm:$0xff]
      %v1537 = vld [vmem:[#allocation3 + $0x70] sm:$0xff]
      %v1538 = vld [vmem:[#allocation3 + $0x78] sm:$0xff]
      %v1539 = vld [vmem:[#allocation3 + $0x80] sm:$0xff]
      %v1540 = vld [vmem:[#allocation3 + $0x88] sm:$0xff]
      %v1541 = vld [vmem:[#allocation3 + $0x90] sm:$0xff]
      %v1542 = vld [vmem:[#allocation3 + $0x98] sm:$0xff]
      %v1543 = vld [vmem:[#allocation3 + $0xa0] sm:$0xff]
      %v1544 = vld [vmem:[#allocation3 + $0xa8] sm:$0xff]
      %v1545 = vld [vmem:[#allocation3 + $0xb0] sm:$0xff]
      %v1546 = vld [vmem:[#allocation3 + $0xb8] sm:$0xff]
      %v1547 = vld [vmem:[#allocation3 + $0xc0] sm:$0xff]
      %v1548 = vld [vmem:[#allocation3 + $0xc8] sm:$0xff]
      %v1549 = vld [vmem:[#allocation3 + $0xd0] sm:$0xff]
      %1551 = vset.pattern.permute.xlu0 0
      %1552 = vperm.xlu0 %1551, %v1310
      %v1553 = vpop.permute.xlu0 %1552
      %v1556 = vsel %vm737, %v1309, 0
      %1558 = vmatprep.subr.mxu0 %v1524
      %1559 = vmatpush1.msra.mxu0 %v1523
      %1560 = vmatprep.subr.mxu0 %v1527
      %1561 = vmatpush1.msra.mxu0 %v1526
      %1562 = vmatprep.subr.mxu0 %v1530
      %1563 = vmatpush1.msra.mxu0 %v1529
      %1564 = vmatprep.subr.mxu0 %v1533
      %1565 = vmatpush1.msra.mxu0 %v1532
      %1566 = vmatprep.subr.mxu0 %v1536
      %1567 = vmatpush1.msra.mxu0 %v1535
      %1568 = vmatprep.subr.mxu0 %v1539
      %1569 = vmatpush1.msra.mxu0 %v1538
      %1570 = vmatprep.subr.mxu0 %v1542
      %1571 = vmatpush1.msra.mxu0 %v1541
      %1572 = vmatprep.subr.mxu0 %v1545
      %1573 = vmatpush1.msra.mxu0 %v1544
      %1574 = vmatprep.subr.mxu0 %v1548
      %1575 = vmatpush1.msra.mxu0 %v1547
      %1576 = vmatprep.subr.mxu0 0.0
      %1577 = vmatpush1.msra.mxu0 0.0
      %1578 = vmatprep.subr.mxu0 0.0
      %1579 = vmatpush1.msra.mxu0 0.0
      %1580 = vmatprep.subr.mxu0 0.0
      %1581 = vmatpush1.msra.mxu0 0.0
      %1582 = vmatprep.subr.mxu0 0.0
      %1583 = vmatpush1.msra.mxu0 0.0
      %1584 = vmatprep.subr.mxu0 0.0
      %1585 = vmatpush1.msra.mxu0 0.0
      %1586 = vmatprep.subr.mxu0 0.0
      %1587 = vmatpush1.msra.mxu0 0.0
      %1588 = vmatprep.subr.mxu0 0.0
      %1589 = vmatpush1.msra.mxu0 0.0
      %1590 = vmatprep.subr.mxu0 0.0
      %1591 = vmatpush1.msra.mxu0 0.0
      %1592 = vmatprep.subr.mxu0 0.0
      %1593 = vmatpush1.msra.mxu0 0.0
      %1594 = vmatprep.subr.mxu0 0.0
      %1595 = vmatpush1.msra.mxu0 0.0
      %1596 = vmatprep.subr.mxu0 0.0
      %1597 = vmatpush1.msra.mxu0 0.0
      %1598 = vmatprep.subr.mxu0 0.0
      %1599 = vmatpush1.msra.mxu0 0.0
      %1600 = vmatprep.subr.mxu0 0.0
      %1601 = vmatpush1.msra.mxu0 0.0
      %1602 = vmatprep.subr.mxu0 0.0
      %1603 = vmatpush1.msra.mxu0 0.0
      %1604 = vmatprep.subr.mxu0 0.0
      %1605 = vmatpush1.msra.mxu0 0.0
      %1606 = vmatprep.subr.mxu0 0.0
      %1607 = vmatpush1.msra.mxu0 0.0
      %1608 = vmatprep.subr.mxu0 0.0
      %1609 = vmatpush1.msra.mxu0 0.0
      %1610 = vmatprep.subr.mxu0 0.0
      %1611 = vmatpush1.msra.mxu0 0.0
      %1612 = vmatprep.subr.mxu0 0.0
      %1613 = vmatpush1.msra.mxu0 0.0
      %1614 = vmatprep.subr.mxu0 0.0
      %1615 = vmatpush1.msra.mxu0 0.0
      %1616 = vmatprep.subr.mxu0 0.0
      %1617 = vmatpush1.msra.mxu0 0.0
      %1618 = vmatprep.subr.mxu0 0.0
      %1619 = vmatpush1.msra.mxu0 0.0
      %1620 = vmatprep.subr.mxu0 0.0
      %1621 = vmatpush1.msra.mxu0 0.0
      %1622 = vmatprep.mubr.f32.mxu0 0.0
      %1623 = vmatmul.mubr.f32.gmra.mrb[0].mxu0 %v1556
      %v1624 = vpop.f32.mrb[0].mxu0
      %v1625 = vadd.f32 %v1553, %v1624
      %v1626 = vpop.f32.mrb[0].mxu0
      %v1627 = vadd.f32 %v1553, %v1626
      %1628 = vdwg.mxu0
      %1629 = vmatprep.subr.mxu0 0.0
      %1630 = vmatpush1.msra.mxu0 %v1525
      %1631 = vmatprep.subr.mxu0 0.0
      %1632 = vmatpush1.msra.mxu0 %v1528
      %1633 = vmatprep.subr.mxu0 0.0
      %1634 = vmatpush1.msra.mxu0 %v1531
      %1635 = vmatprep.subr.mxu0 0.0
      %1636 = vmatpush1.msra.mxu0 %v1534
      %1637 = vmatprep.subr.mxu0 0.0
      %1638 = vmatpush1.msra.mxu0 %v1537
      %1639 = vmatprep.subr.mxu0 0.0
      %1640 = vmatpush1.msra.mxu0 %v1540
      %1641 = vmatprep.subr.mxu0 0.0
      %1642 = vmatpush1.msra.mxu0 %v1543
      %1643 = vmatprep.subr.mxu0 0.0
      %1644 = vmatpush1.msra.mxu0 %v1546
      %1645 = vmatprep.subr.mxu0 0.0
      %1646 = vmatpush1.msra.mxu0 %v1549
      %1647 = vmatprep.subr.mxu0 0.0
      %1648 = vmatpush1.msra.mxu0 0.0
      %1649 = vmatprep.subr.mxu0 0.0
      %1650 = vmatpush1.msra.mxu0 0.0
      %1651 = vmatprep.subr.mxu0 0.0
      %1652 = vmatpush1.msra.mxu0 0.0
      %1653 = vmatprep.subr.mxu0 0.0
      %1654 = vmatpush1.msra.mxu0 0.0
      %1655 = vmatprep.subr.mxu0 0.0
      %1656 = vmatpush1.msra.mxu0 0.0
      %1657 = vmatprep.subr.mxu0 0.0
      %1658 = vmatpush1.msra.mxu0 0.0
      %1659 = vmatprep.subr.mxu0 0.0
      %1660 = vmatpush1.msra.mxu0 0.0
      %1661 = vmatprep.subr.mxu0 0.0
      %1662 = vmatpush1.msra.mxu0 0.0
      %1663 = vmatprep.subr.mxu0 0.0
      %1664 = vmatpush1.msra.mxu0 0.0
      %1665 = vmatprep.subr.mxu0 0.0
      %1666 = vmatpush1.msra.mxu0 0.0
      %1667 = vmatprep.subr.mxu0 0.0
      %1668 = vmatpush1.msra.mxu0 0.0
      %1669 = vmatprep.subr.mxu0 0.0
      %1670 = vmatpush1.msra.mxu0 0.0
      %1671 = vmatprep.subr.mxu0 0.0
      %1672 = vmatpush1.msra.mxu0 0.0
      %1673 = vmatprep.subr.mxu0 0.0
      %1674 = vmatpush1.msra.mxu0 0.0
      %1675 = vmatprep.subr.mxu0 0.0
      %1676 = vmatpush1.msra.mxu0 0.0
      %1677 = vmatprep.subr.mxu0 0.0
      %1678 = vmatpush1.msra.mxu0 0.0
      %1679 = vmatprep.subr.mxu0 0.0
      %1680 = vmatpush1.msra.mxu0 0.0
      %1681 = vmatprep.subr.mxu0 0.0
      %1682 = vmatpush1.msra.mxu0 0.0
      %1683 = vmatprep.subr.mxu0 0.0
      %1684 = vmatpush1.msra.mxu0 0.0
      %1685 = vmatprep.subr.mxu0 0.0
      %1686 = vmatpush1.msra.mxu0 0.0
      %1687 = vmatprep.subr.mxu0 0.0
      %1688 = vmatpush1.msra.mxu0 0.0
      %1689 = vmatprep.subr.mxu0 0.0
      %1690 = vmatpush1.msra.mxu0 0.0
      %1691 = vmatprep.subr.mxu0 0.0
      %1692 = vmatpush1.msra.mxu0 0.0
      %1693 = vmatprep.mubr.f32.mxu0 0.0
      %1694 = vmatmul.mubr.f32.gmra.mrb[0].mxu0 %v1556
      %v1695 = vpop.f32.mrb[0].mxu0
      %v1696 = vadd.f32 %v1553, %v1695
      %v1697 = vpop.f32.mrb[0].mxu0
      %1698 = vdwg.mxu0
      %v1699 = vadd.f32 %v1625, %v808
      %v1700 = vadd.f32 %v1627, %v810
      %v1701 = vadd.f32 %v1696, %v879
      %s1702 = scalar_lea.vmem %s5, 48
      %v1703 = vld [vmem:[%s1702] sm:$0xff]
      %v1704 = vld [vmem:[%s1702 + $0x8] sm:$0xff]
      %v1705 = vld [vmem:[%s1702 + $0x10] sm:$0xff]
      %v1706 = vld [vmem:[%s1702 + $0x18] sm:$0xff]
      %v1707 = vld [vmem:[%s1702 + $0x20] sm:$0xff]
      %v1708 = vld [vmem:[%s1702 + $0x28] sm:$0xff]
      %s1709 = scalar_lea.vmem %s6, 48
      %v1710 = vld [vmem:[%s1709] sm:$0xff]
      %v1711 = vld [vmem:[%s1709 + $0x8] sm:$0xff]
      %v1712 = vld [vmem:[%s1709 + $0x10] sm:$0xff]
      %v1713 = vld [vmem:[%s1709 + $0x18] sm:$0xff]
      %v1714 = vld [vmem:[%s1709 + $0x20] sm:$0xff]
      %v1715 = vld [vmem:[%s1709 + $0x28] sm:$0xff]
      %1717 = vset.pattern.permute.xlu0 0
      %1718 = vperm.xlu0 %1717, %v1710
      %v1719 = vpop.permute.xlu0 %1718
      %1722 = vset.pattern.permute.xlu0 0
      %1723 = vperm.xlu0 %1722, %v1711
      %v1724 = vpop.permute.xlu0 %1723
      %1727 = vset.pattern.permute.xlu0 0
      %1728 = vperm.xlu0 %1727, %v1712
      %v1729 = vpop.permute.xlu0 %1728
      %1732 = vset.pattern.permute.xlu0 0
      %1733 = vperm.xlu0 %1732, %v1713
      %v1734 = vpop.permute.xlu0 %1733
      %1737 = vset.pattern.permute.xlu0 0
      %1738 = vperm.xlu0 %1737, %v1714
      %v1739 = vpop.permute.xlu0 %1738
      %1742 = vset.pattern.permute.xlu0 0
      %1743 = vperm.xlu0 %1742, %v1715
      %v1744 = vpop.permute.xlu0 %1743
      %v1747 = vsel %vm924, %v1703, 0
      %v1750 = vsel %vm924, %v1704, 0
      %v1753 = vsel %vm924, %v1705, 0
      %v1756 = vsel %vm924, %v1706, 0
      %v1759 = vsel %vm924, %v1707, 0
      %v1762 = vsel %vm924, %v1708, 0
      %1764 = vmatprep.subr.mxu0 %v1700
      %1765 = vmatpush1.msra.mxu0 %v1699
      %1766 = vmatprep.subr.mxu0 0.0
      %1767 = vmatpush1.msra.mxu0 0.0
      %1768 = vmatprep.subr.mxu0 0.0
      %1769 = vmatpush1.msra.mxu0 0.0
      %1770 = vmatprep.subr.mxu0 0.0
      %1771 = vmatpush1.msra.mxu0 0.0
      %1772 = vmatprep.subr.mxu0 0.0
      %1773 = vmatpush1.msra.mxu0 0.0
      %1774 = vmatprep.subr.mxu0 0.0
      %1775 = vmatpush1.msra.mxu0 0.0
      %1776 = vmatprep.subr.mxu0 0.0
      %1777 = vmatpush1.msra.mxu0 0.0
      %1778 = vmatprep.subr.mxu0 0.0
      %1779 = vmatpush1.msra.mxu0 0.0
      %1780 = vmatprep.subr.mxu0 0.0
      %1781 = vmatpush1.msra.mxu0 0.0
      %1782 = vmatprep.subr.mxu0 0.0
      %1783 = vmatpush1.msra.mxu0 0.0
      %1784 = vmatprep.subr.mxu0 0.0
      %1785 = vmatpush1.msra.mxu0 0.0
      %1786 = vmatprep.subr.mxu0 0.0
      %1787 = vmatpush1.msra.mxu0 0.0
      %1788 = vmatprep.subr.mxu0 0.0
      %1789 = vmatpush1.msra.mxu0 0.0
      %1790 = vmatprep.subr.mxu0 0.0
      %1791 = vmatpush1.msra.mxu0 0.0
      %1792 = vmatprep.subr.mxu0 0.0
      %1793 = vmatpush1.msra.mxu0 0.0
      %1794 = vmatprep.subr.mxu0 0.0
      %1795 = vmatpush1.msra.mxu0 0.0
      %1796 = vmatprep.subr.mxu0 0.0
      %1797 = vmatpush1.msra.mxu0 0.0
      %1798 = vmatprep.subr.mxu0 0.0
      %1799 = vmatpush1.msra.mxu0 0.0
      %1800 = vmatprep.subr.mxu0 0.0
      %1801 = vmatpush1.msra.mxu0 0.0
      %1802 = vmatprep.subr.mxu0 0.0
      %1803 = vmatpush1.msra.mxu0 0.0
      %1804 = vmatprep.subr.mxu0 0.0
      %1805 = vmatpush1.msra.mxu0 0.0
      %1806 = vmatprep.subr.mxu0 0.0
      %1807 = vmatpush1.msra.mxu0 0.0
      %1808 = vmatprep.subr.mxu0 0.0
      %1809 = vmatpush1.msra.mxu0 0.0
      %1810 = vmatprep.subr.mxu0 0.0
      %1811 = vmatpush1.msra.mxu0 0.0
      %1812 = vmatprep.subr.mxu0 0.0
      %1813 = vmatpush1.msra.mxu0 0.0
      %1814 = vmatprep.subr.mxu0 0.0
      %1815 = vmatpush1.msra.mxu0 0.0
      %1816 = vmatprep.subr.mxu0 0.0
      %1817 = vmatpush1.msra.mxu0 0.0
      %1818 = vmatprep.subr.mxu0 0.0
      %1819 = vmatpush1.msra.mxu0 0.0
      %1820 = vmatprep.subr.mxu0 0.0
      %1821 = vmatpush1.msra.mxu0 0.0
      %1822 = vmatprep.subr.mxu0 0.0
      %1823 = vmatpush1.msra.mxu0 0.0
      %1824 = vmatprep.subr.mxu0 0.0
      %1825 = vmatpush1.msra.mxu0 0.0
      %1826 = vmatprep.subr.mxu0 0.0
      %1827 = vmatpush1.msra.mxu0 0.0
      %1828 = vmatprep.mubr.f32.mxu0 0.0
      %1829 = vmatmul.mubr.f32.gmra.mrb[0].mxu0 %v1747
      %v1830 = vpop.f32.mrb[0].mxu0
      %v1831 = vadd.f32 %v1719, %v1830
      %v1832 = vpop.f32.mrb[0].mxu0
      %v1833 = vadd.f32 %v1719, %v1832
      %1834 = vmatprep.mubr.f32.mxu0 0.0
      %1835 = vmatmul.mubr.f32.gmra.mrb[0].mxu0 %v1750
      %v1836 = vpop.f32.mrb[0].mxu0
      %v1837 = vadd.f32 %v1724, %v1836
      %v1838 = vpop.f32.mrb[0].mxu0
      %v1839 = vadd.f32 %v1724, %v1838
      %1840 = vmatprep.mubr.f32.mxu0 0.0
      %1841 = vmatmul.mubr.f32.gmra.mrb[0].mxu0 %v1753
      %v1842 = vpop.f32.mrb[0].mxu0
      %v1843 = vadd.f32 %v1729, %v1842
      %v1844 = vpop.f32.mrb[0].mxu0
      %v1845 = vadd.f32 %v1729, %v1844
      %1846 = vmatprep.mubr.f32.mxu0 0.0
      %1847 = vmatmul.mubr.f32.gmra.mrb[0].mxu0 %v1756
      %v1848 = vpop.f32.mrb[0].mxu0
      %v1849 = vadd.f32 %v1734, %v1848
      %v1850 = vpop.f32.mrb[0].mxu0
      %v1851 = vadd.f32 %v1734, %v1850
      %1852 = vmatprep.mubr.f32.mxu0 0.0
      %1853 = vmatmul.mubr.f32.gmra.mrb[0].mxu0 %v1759
      %v1854 = vpop.f32.mrb[0].mxu0
      %v1855 = vadd.f32 %v1739, %v1854
      %v1856 = vpop.f32.mrb[0].mxu0
      %v1857 = vadd.f32 %v1739, %v1856
      %1858 = vmatprep.mubr.f32.mxu0 0.0
      %1859 = vmatmul.mubr.f32.gmra.mrb[0].mxu0 %v1762
      %v1860 = vpop.f32.mrb[0].mxu0
      %v1861 = vadd.f32 %v1744, %v1860
      %v1862 = vpop.f32.mrb[0].mxu0
      %v1863 = vadd.f32 %v1744, %v1862
      %1864 = vdwg.mxu0
      %1865 = vmatprep.subr.mxu0 0.0
      %1866 = vmatpush1.msra.mxu0 %v1701
      %1867 = vmatprep.subr.mxu0 0.0
      %1868 = vmatpush1.msra.mxu0 0.0
      %1869 = vmatprep.subr.mxu0 0.0
      %1870 = vmatpush1.msra.mxu0 0.0
      %1871 = vmatprep.subr.mxu0 0.0
      %1872 = vmatpush1.msra.mxu0 0.0
      %1873 = vmatprep.subr.mxu0 0.0
      %1874 = vmatpush1.msra.mxu0 0.0
      %1875 = vmatprep.subr.mxu0 0.0
      %1876 = vmatpush1.msra.mxu0 0.0
      %1877 = vmatprep.subr.mxu0 0.0
      %1878 = vmatpush1.msra.mxu0 0.0
      %1879 = vmatprep.subr.mxu0 0.0
      %1880 = vmatpush1.msra.mxu0 0.0
      %1881 = vmatprep.subr.mxu0 0.0
      %1882 = vmatpush1.msra.mxu0 0.0
      %1883 = vmatprep.subr.mxu0 0.0
      %1884 = vmatpush1.msra.mxu0 0.0
      %1885 = vmatprep.subr.mxu0 0.0
      %1886 = vmatpush1.msra.mxu0 0.0
      %1887 = vmatprep.subr.mxu0 0.0
      %1888 = vmatpush1.msra.mxu0 0.0
      %1889 = vmatprep.subr.mxu0 0.0
      %1890 = vmatpush1.msra.mxu0 0.0
      %1891 = vmatprep.subr.mxu0 0.0
      %1892 = vmatpush1.msra.mxu0 0.0
      %1893 = vmatprep.subr.mxu0 0.0
      %1894 = vmatpush1.msra.mxu0 0.0
      %1895 = vmatprep.subr.mxu0 0.0
      %1896 = vmatpush1.msra.mxu0 0.0
      %1897 = vmatprep.subr.mxu0 0.0
      %1898 = vmatpush1.msra.mxu0 0.0
      %1899 = vmatprep.subr.mxu0 0.0
      %1900 = vmatpush1.msra.mxu0 0.0
      %1901 = vmatprep.subr.mxu0 0.0
      %1902 = vmatpush1.msra.mxu0 0.0
      %1903 = vmatprep.subr.mxu0 0.0
      %1904 = vmatpush1.msra.mxu0 0.0
      %1905 = vmatprep.subr.mxu0 0.0
      %1906 = vmatpush1.msra.mxu0 0.0
      %1907 = vmatprep.subr.mxu0 0.0
      %1908 = vmatpush1.msra.mxu0 0.0
      %1909 = vmatprep.subr.mxu0 0.0
      %1910 = vmatpush1.msra.mxu0 0.0
      %1911 = vmatprep.subr.mxu0 0.0
      %1912 = vmatpush1.msra.mxu0 0.0
      %1913 = vmatprep.subr.mxu0 0.0
      %1914 = vmatpush1.msra.mxu0 0.0
      %1915 = vmatprep.subr.mxu0 0.0
      %1916 = vmatpush1.msra.mxu0 0.0
      %1917 = vmatprep.subr.mxu0 0.0
      %1918 = vmatpush1.msra.mxu0 0.0
      %1919 = vmatprep.subr.mxu0 0.0
      %1920 = vmatpush1.msra.mxu0 0.0
      %1921 = vmatprep.subr.mxu0 0.0
      %1922 = vmatpush1.msra.mxu0 0.0
      %1923 = vmatprep.subr.mxu0 0.0
      %1924 = vmatpush1.msra.mxu0 0.0
      %1925 = vmatprep.subr.mxu0 0.0
      %1926 = vmatpush1.msra.mxu0 0.0
      %1927 = vmatprep.subr.mxu0 0.0
      %1928 = vmatpush1.msra.mxu0 0.0
      %1929 = vmatprep.mubr.f32.mxu0 0.0
      %1930 = vmatmul.mubr.f32.gmra.mrb[0].mxu0 %v1747
      %v1931 = vpop.f32.mrb[0].mxu0
      %v1932 = vadd.f32 %v1719, %v1931
      %v1933 = vpop.f32.mrb[0].mxu0
      %1934 = vmatprep.mubr.f32.mxu0 0.0
      %1935 = vmatmul.mubr.f32.gmra.mrb[0].mxu0 %v1750
      %v1936 = vpop.f32.mrb[0].mxu0
      %v1937 = vadd.f32 %v1724, %v1936
      %v1938 = vpop.f32.mrb[0].mxu0
      %1939 = vmatprep.mubr.f32.mxu0 0.0
      %1940 = vmatmul.mubr.f32.gmra.mrb[0].mxu0 %v1753
      %v1941 = vpop.f32.mrb[0].mxu0
      %v1942 = vadd.f32 %v1729, %v1941
      %v1943 = vpop.f32.mrb[0].mxu0
      %1944 = vmatprep.mubr.f32.mxu0 0.0
      %1945 = vmatmul.mubr.f32.gmra.mrb[0].mxu0 %v1756
      %v1946 = vpop.f32.mrb[0].mxu0
      %v1947 = vadd.f32 %v1734, %v1946
      %v1948 = vpop.f32.mrb[0].mxu0
      %1949 = vmatprep.mubr.f32.mxu0 0.0
      %1950 = vmatmul.mubr.f32.gmra.mrb[0].mxu0 %v1759
      %v1951 = vpop.f32.mrb[0].mxu0
      %v1952 = vadd.f32 %v1739, %v1951
      %v1953 = vpop.f32.mrb[0].mxu0
      %1954 = vmatprep.mubr.f32.mxu0 0.0
      %1955 = vmatmul.mubr.f32.gmra.mrb[0].mxu0 %v1762
      %v1956 = vpop.f32.mrb[0].mxu0
      %v1957 = vadd.f32 %v1744, %v1956
      %v1958 = vpop.f32.mrb[0].mxu0
      %1959 = vdwg.mxu0
      %v1960 = vmax.f32 %v1831, 0.0
      %v1961 = vmax.f32 %v1833, 0.0
      %v1962 = vmax.f32 %v1932, 0.0
      %v1963 = vmax.f32 %v1837, 0.0
      %v1964 = vmax.f32 %v1839, 0.0
      %v1965 = vmax.f32 %v1937, 0.0
      %v1966 = vmax.f32 %v1843, 0.0
      %v1967 = vmax.f32 %v1845, 0.0
      %v1968 = vmax.f32 %v1942, 0.0
      %v1969 = vmax.f32 %v1849, 0.0
      %v1970 = vmax.f32 %v1851, 0.0
      %v1971 = vmax.f32 %v1947, 0.0
      %v1972 = vmax.f32 %v1855, 0.0
      %v1973 = vmax.f32 %v1857, 0.0
      %v1974 = vmax.f32 %v1952, 0.0
      %v1975 = vmax.f32 %v1861, 0.0
      %v1976 = vmax.f32 %v1863, 0.0
      %v1977 = vmax.f32 %v1957, 0.0
      %s1978 = scalar_lea.vmem %s7, 8
      %v1979 = vld [vmem:[%s1978] sm:$0xff]
      %s1980 = scalar_lea.vmem %s8, 8
      %v1981 = vld [vmem:[%s1980] sm:$0xff]
      %1983 = vset.pattern.permute.xlu0 0
      %1984 = vperm.xlu0 %1983, %v1981
      %v1985 = vpop.permute.xlu0 %1984
      %v1988 = vsel %vm1164, %v1979, 0
      %1990 = vmatprep.subr.mxu0 %v1961
      %1991 = vmatpush1.msra.mxu0 %v1960
      %1992 = vmatprep.subr.mxu0 %v1964
      %1993 = vmatpush1.msra.mxu0 %v1963
      %1994 = vmatprep.subr.mxu0 %v1967
      %1995 = vmatpush1.msra.mxu0 %v1966
      %1996 = vmatprep.subr.mxu0 %v1970
      %1997 = vmatpush1.msra.mxu0 %v1969
      %1998 = vmatprep.subr.mxu0 %v1973
      %1999 = vmatpush1.msra.mxu0 %v1972
      %2000 = vmatprep.subr.mxu0 %v1976
      %2001 = vmatpush1.msra.mxu0 %v1975
      %2002 = vmatprep.subr.mxu0 0.0
      %2003 = vmatpush1.msra.mxu0 0.0
      %2004 = vmatprep.subr.mxu0 0.0
      %2005 = vmatpush1.msra.mxu0 0.0
      %2006 = vmatprep.subr.mxu0 0.0
      %2007 = vmatpush1.msra.mxu0 0.0
      %2008 = vmatprep.subr.mxu0 0.0
      %2009 = vmatpush1.msra.mxu0 0.0
      %2010 = vmatprep.subr.mxu0 0.0
      %2011 = vmatpush1.msra.mxu0 0.0
      %2012 = vmatprep.subr.mxu0 0.0
      %2013 = vmatpush1.msra.mxu0 0.0
      %2014 = vmatprep.subr.mxu0 0.0
      %2015 = vmatpush1.msra.mxu0 0.0
      %2016 = vmatprep.subr.mxu0 0.0
      %2017 = vmatpush1.msra.mxu0 0.0
      %2018 = vmatprep.subr.mxu0 0.0
      %2019 = vmatpush1.msra.mxu0 0.0
      %2020 = vmatprep.subr.mxu0 0.0
      %2021 = vmatpush1.msra.mxu0 0.0
      %2022 = vmatprep.subr.mxu0 0.0
      %2023 = vmatpush1.msra.mxu0 0.0
      %2024 = vmatprep.subr.mxu0 0.0
      %2025 = vmatpush1.msra.mxu0 0.0
      %2026 = vmatprep.subr.mxu0 0.0
      %2027 = vmatpush1.msra.mxu0 0.0
      %2028 = vmatprep.subr.mxu0 0.0
      %2029 = vmatpush1.msra.mxu0 0.0
      %2030 = vmatprep.subr.mxu0 0.0
      %2031 = vmatpush1.msra.mxu0 0.0
      %2032 = vmatprep.subr.mxu0 0.0
      %2033 = vmatpush1.msra.mxu0 0.0
      %2034 = vmatprep.subr.mxu0 0.0
      %2035 = vmatpush1.msra.mxu0 0.0
      %2036 = vmatprep.subr.mxu0 0.0
      %2037 = vmatpush1.msra.mxu0 0.0
      %2038 = vmatprep.subr.mxu0 0.0
      %2039 = vmatpush1.msra.mxu0 0.0
      %2040 = vmatprep.subr.mxu0 0.0
      %2041 = vmatpush1.msra.mxu0 0.0
      %2042 = vmatprep.subr.mxu0 0.0
      %2043 = vmatpush1.msra.mxu0 0.0
      %2044 = vmatprep.subr.mxu0 0.0
      %2045 = vmatpush1.msra.mxu0 0.0
      %2046 = vmatprep.subr.mxu0 0.0
      %2047 = vmatpush1.msra.mxu0 0.0
      %2048 = vmatprep.subr.mxu0 0.0
      %2049 = vmatpush1.msra.mxu0 0.0
      %2050 = vmatprep.subr.mxu0 0.0
      %2051 = vmatpush1.msra.mxu0 0.0
      %2052 = vmatprep.subr.mxu0 0.0
      %2053 = vmatpush1.msra.mxu0 0.0
      %2054 = vmatprep.mubr.f32.mxu0 0.0
      %2055 = vmatmul.mubr.f32.gmra.mrb[0].mxu0 %v1988
      %v2056 = vpop.f32.mrb[0].mxu0
      %v2057 = vadd.f32 %v1985, %v2056
      %v2058 = vpop.f32.mrb[0].mxu0
      %v2059 = vadd.f32 %v1985, %v2058
      %2060 = vdwg.mxu0
      %2061 = vmatprep.subr.mxu0 0.0
      %2062 = vmatpush1.msra.mxu0 %v1962
      %2063 = vmatprep.subr.mxu0 0.0
      %2064 = vmatpush1.msra.mxu0 %v1965
      %2065 = vmatprep.subr.mxu0 0.0
      %2066 = vmatpush1.msra.mxu0 %v1968
      %2067 = vmatprep.subr.mxu0 0.0
      %2068 = vmatpush1.msra.mxu0 %v1971
      %2069 = vmatprep.subr.mxu0 0.0
      %2070 = vmatpush1.msra.mxu0 %v1974
      %2071 = vmatprep.subr.mxu0 0.0
      %2072 = vmatpush1.msra.mxu0 %v1977
      %2073 = vmatprep.subr.mxu0 0.0
      %2074 = vmatpush1.msra.mxu0 0.0
      %2075 = vmatprep.subr.mxu0 0.0
      %2076 = vmatpush1.msra.mxu0 0.0
      %2077 = vmatprep.subr.mxu0 0.0
      %2078 = vmatpush1.msra.mxu0 0.0
      %2079 = vmatprep.subr.mxu0 0.0
      %2080 = vmatpush1.msra.mxu0 0.0
      %2081 = vmatprep.subr.mxu0 0.0
      %2082 = vmatpush1.msra.mxu0 0.0
      %2083 = vmatprep.subr.mxu0 0.0
      %2084 = vmatpush1.msra.mxu0 0.0
      %2085 = vmatprep.subr.mxu0 0.0
      %2086 = vmatpush1.msra.mxu0 0.0
      %2087 = vmatprep.subr.mxu0 0.0
      %2088 = vmatpush1.msra.mxu0 0.0
      %2089 = vmatprep.subr.mxu0 0.0
      %2090 = vmatpush1.msra.mxu0 0.0
      %2091 = vmatprep.subr.mxu0 0.0
      %2092 = vmatpush1.msra.mxu0 0.0
      %2093 = vmatprep.subr.mxu0 0.0
      %2094 = vmatpush1.msra.mxu0 0.0
      %2095 = vmatprep.subr.mxu0 0.0
      %2096 = vmatpush1.msra.mxu0 0.0
      %2097 = vmatprep.subr.mxu0 0.0
      %2098 = vmatpush1.msra.mxu0 0.0
      %2099 = vmatprep.subr.mxu0 0.0
      %2100 = vmatpush1.msra.mxu0 0.0
      %2101 = vmatprep.subr.mxu0 0.0
      %2102 = vmatpush1.msra.mxu0 0.0
      %2103 = vmatprep.subr.mxu0 0.0
      %2104 = vmatpush1.msra.mxu0 0.0
      %2105 = vmatprep.subr.mxu0 0.0
      %2106 = vmatpush1.msra.mxu0 0.0
      %2107 = vmatprep.subr.mxu0 0.0
      %2108 = vmatpush1.msra.mxu0 0.0
      %2109 = vmatprep.subr.mxu0 0.0
      %2110 = vmatpush1.msra.mxu0 0.0
      %2111 = vmatprep.subr.mxu0 0.0
      %2112 = vmatpush1.msra.mxu0 0.0
      %2113 = vmatprep.subr.mxu0 0.0
      %2114 = vmatpush1.msra.mxu0 0.0
      %2115 = vmatprep.subr.mxu0 0.0
      %2116 = vmatpush1.msra.mxu0 0.0
      %2117 = vmatprep.subr.mxu0 0.0
      %2118 = vmatpush1.msra.mxu0 0.0
      %2119 = vmatprep.subr.mxu0 0.0
      %2120 = vmatpush1.msra.mxu0 0.0
      %2121 = vmatprep.subr.mxu0 0.0
      %2122 = vmatpush1.msra.mxu0 0.0
      %2123 = vmatprep.subr.mxu0 0.0
      %2124 = vmatpush1.msra.mxu0 0.0
      %2125 = vmatprep.mubr.f32.mxu0 0.0
      %2126 = vmatmul.mubr.f32.gmra.mrb[0].mxu0 %v1988
      %v2127 = vpop.f32.mrb[0].mxu0
      %v2128 = vadd.f32 %v1985, %v2127
      %v2129 = vpop.f32.mrb[0].mxu0
      %2130 = vdwg.mxu0
      %s2131 = scalar_lea.vmem %s9, 8
      %v2132 = vld [vmem:[%s2131] sm:$0xff]
      %s2133 = scalar_lea.vmem %s10, 8
      %v2134 = vld [vmem:[%s2133] sm:$0xff]
      %v2135 = vmul.f32 %v2057, %v473
      %v2136 = vmul.f32 %v2059, %v477
      %v2137 = vmul.f32 %v2128, %v481
      %2138 = vst [vmem:[#allocation2 + $0x8] sm:$0xff] %v2135
      %2139 = vst [vmem:[#allocation2 + $0x10] sm:$0xff] %v2136
      %2140 = vst [vmem:[#allocation2 + $0x18] sm:$0xff] %v2137
      %v2141 = vld [vmem:[#allocation2] sm:$0xff]
      %v2142 = vld [vmem:[#allocation2 + $0x8] sm:$0xff]
      %v2143 = vld [vmem:[#allocation2 + $0x10] sm:$0xff]
      %v2144 = vld [vmem:[#allocation2 + $0x18] sm:$0xff]
      %2149 = vrot.lane.b32.xlu0 %v2141, 19
      %v2150 = vpop.permute.xlu0 %2149
      %2151 = vrot.lane.b32.xlu0 %v2142, 19
      %v2152 = vpop.permute.xlu0 %2151
      %2153 = vrot.lane.b32.xlu0 %v2143, 19
      %v2154 = vpop.permute.xlu0 %2153
      %2155 = vrot.lane.b32.xlu0 %v2144, 19
      %v2156 = vpop.permute.xlu0 %2155
      %v2157 = vsel %vm507, %v2150, %v2152
      %v2158 = vsel %vm507, %v2152, %v2154
      %v2159 = vsel %vm507, %v2154, %v2156
      %2163 = vst [vmem:[#allocation3] sm:$0xff] %v2157
      %2164 = vst [vmem:[#allocation3 + $0x8] sm:$0xff] %v2158
      %2165 = vst [vmem:[#allocation3 + $0x10] sm:$0xff] %v2159
      %v2166 = vld [vmem:[#allocation2] sm:$0xff]
      %v2167 = vld [vmem:[#allocation2 + $0x8] sm:$0xff]
      %v2168 = vld [vmem:[#allocation2 + $0x10] sm:$0xff]
      %v2169 = vld [vmem:[#allocation2 + $0x18] sm:$0xff]
      %2174 = vrot.lane.b32.xlu0 %v2166, 18
      %v2175 = vpop.permute.xlu0 %2174
      %2176 = vrot.lane.b32.xlu0 %v2167, 18
      %v2177 = vpop.permute.xlu0 %2176
      %2178 = vrot.lane.b32.xlu0 %v2168, 18
      %v2179 = vpop.permute.xlu0 %2178
      %2180 = vrot.lane.b32.xlu0 %v2169, 18
      %v2181 = vpop.permute.xlu0 %2180
      %v2182 = vsel %vm533, %v2175, %v2177
      %v2183 = vsel %vm533, %v2177, %v2179
      %v2184 = vsel %vm533, %v2179, %v2181
      %2188 = vst [vmem:[#allocation3 + $0x18] sm:$0xff] %v2182
      %2189 = vst [vmem:[#allocation3 + $0x20] sm:$0xff] %v2183
      %2190 = vst [vmem:[#allocation3 + $0x28] sm:$0xff] %v2184
      %v2191 = vld [vmem:[#allocation2] sm:$0xff]
      %v2192 = vld [vmem:[#allocation2 + $0x8] sm:$0xff]
      %v2193 = vld [vmem:[#allocation2 + $0x10] sm:$0xff]
      %v2194 = vld [vmem:[#allocation2 + $0x18] sm:$0xff]
      %2199 = vrot.lane.b32.xlu0 %v2191, 17
      %v2200 = vpop.permute.xlu0 %2199
      %2201 = vrot.lane.b32.xlu0 %v2192, 17
      %v2202 = vpop.permute.xlu0 %2201
      %2203 = vrot.lane.b32.xlu0 %v2193, 17
      %v2204 = vpop.permute.xlu0 %2203
      %2205 = vrot.lane.b32.xlu0 %v2194, 17
      %v2206 = vpop.permute.xlu0 %2205
      %v2207 = vsel %vm559, %v2200, %v2202
      %v2208 = vsel %vm559, %v2202, %v2204
      %v2209 = vsel %vm559, %v2204, %v2206
      %2213 = vst [vmem:[#allocation3 + $0x30] sm:$0xff] %v2207
      %2214 = vst [vmem:[#allocation3 + $0x38] sm:$0xff] %v2208
      %2215 = vst [vmem:[#allocation3 + $0x40] sm:$0xff] %v2209
      %v2216 = vld [vmem:[#allocation2] sm:$0xff]
      %v2217 = vld [vmem:[#allocation2 + $0x8] sm:$0xff]
      %v2218 = vld [vmem:[#allocation2 + $0x10] sm:$0xff]
      %v2219 = vld [vmem:[#allocation2 + $0x18] sm:$0xff]
      %2224 = vrot.lane.b32.xlu0 %v2216, 1
      %v2225 = vpop.permute.xlu0 %2224
      %2226 = vrot.lane.b32.xlu0 %v2217, 1
      %v2227 = vpop.permute.xlu0 %2226
      %2228 = vrot.lane.b32.xlu0 %v2218, 1
      %v2229 = vpop.permute.xlu0 %2228
      %2230 = vrot.lane.b32.xlu0 %v2219, 1
      %v2231 = vpop.permute.xlu0 %2230
      %v2232 = vsel %vm585, %v2225, %v2227
      %v2233 = vsel %vm585, %v2227, %v2229
      %v2234 = vsel %vm585, %v2229, %v2231
      %2238 = vst [vmem:[#allocation3 + $0x48] sm:$0xff] %v2232
      %2239 = vst [vmem:[#allocation3 + $0x50] sm:$0xff] %v2233
      %2240 = vst [vmem:[#allocation3 + $0x58] sm:$0xff] %v2234
      %v2241 = vld [vmem:[#allocation2 + $0x8] sm:$0xff]
      %v2242 = vld [vmem:[#allocation2 + $0x10] sm:$0xff]
      %v2243 = vld [vmem:[#allocation2 + $0x18] sm:$0xff]
      %2244 = vst [vmem:[#allocation3 + $0x60] sm:$0xff] %v2241
      %2245 = vst [vmem:[#allocation3 + $0x68] sm:$0xff] %v2242
      %2246 = vst [vmem:[#allocation3 + $0x70] sm:$0xff] %v2243
      %v2247 = vld [vmem:[#allocation2 + $0x8] sm:$0xff]
      %v2248 = vld [vmem:[#allocation2 + $0x10] sm:$0xff]
      %v2249 = vld [vmem:[#allocation2 + $0x18] sm:$0xff]
      %v2250 = vld [vmem:[#allocation2 + $0x20] sm:$0xff]
      %2255 = vrot.lane.b32.xlu0 %v2247, 127
      %v2256 = vpop.permute.xlu0 %2255
      %2257 = vrot.lane.b32.xlu0 %v2248, 127
      %v2258 = vpop.permute.xlu0 %2257
      %2259 = vrot.lane.b32.xlu0 %v2249, 127
      %v2260 = vpop.permute.xlu0 %2259
      %2261 = vrot.lane.b32.xlu0 %v2250, 127
      %v2262 = vpop.permute.xlu0 %2261
      %v2263 = vsel %vm617, %v2256, %v2258
      %v2264 = vsel %vm617, %v2258, %v2260
      %v2265 = vsel %vm617, %v2260, %v2262
      %2269 = vst [vmem:[#allocation3 + $0x78] sm:$0xff] %v2263
      %2270 = vst [vmem:[#allocation3 + $0x80] sm:$0xff] %v2264
      %2271 = vst [vmem:[#allocation3 + $0x88] sm:$0xff] %v2265
      %v2272 = vld [vmem:[#allocation2 + $0x8] sm:$0xff]
      %v2273 = vld [vmem:[#allocation2 + $0x10] sm:$0xff]
      %v2274 = vld [vmem:[#allocation2 + $0x18] sm:$0xff]
      %v2275 = vld [vmem:[#allocation2 + $0x20] sm:$0xff]
      %2280 = vrot.lane.b32.xlu0 %v2272, 111
      %v2281 = vpop.permute.xlu0 %2280
      %2282 = vrot.lane.b32.xlu0 %v2273, 111
      %v2283 = vpop.permute.xlu0 %2282
      %2284 = vrot.lane.b32.xlu0 %v2274, 111
      %v2285 = vpop.permute.xlu0 %2284
      %2286 = vrot.lane.b32.xlu0 %v2275, 111
      %v2287 = vpop.permute.xlu0 %2286
      %v2288 = vsel %vm643, %v2281, %v2283
      %v2289 = vsel %vm643, %v2283, %v2285
      %v2290 = vsel %vm643, %v2285, %v2287
      %2294 = vst [vmem:[#allocation3 + $0x90] sm:$0xff] %v2288
      %2295 = vst [vmem:[#allocation3 + $0x98] sm:$0xff] %v2289
      %2296 = vst [vmem:[#allocation3 + $0xa0] sm:$0xff] %v2290
      %v2297 = vld [vmem:[#allocation2 + $0x8] sm:$0xff]
      %v2298 = vld [vmem:[#allocation2 + $0x10] sm:$0xff]
      %v2299 = vld [vmem:[#allocation2 + $0x18] sm:$0xff]
      %v2300 = vld [vmem:[#allocation2 + $0x20] sm:$0xff]
      %2305 = vrot.lane.b32.xlu0 %v2297, 110
      %v2306 = vpop.permute.xlu0 %2305
      %2307 = vrot.lane.b32.xlu0 %v2298, 110
      %v2308 = vpop.permute.xlu0 %2307
      %2309 = vrot.lane.b32.xlu0 %v2299, 110
      %v2310 = vpop.permute.xlu0 %2309
      %2311 = vrot.lane.b32.xlu0 %v2300, 110
      %v2312 = vpop.permute.xlu0 %2311
      %v2313 = vsel %vm669, %v2306, %v2308
      %v2314 = vsel %vm669, %v2308, %v2310
      %v2315 = vsel %vm669, %v2310, %v2312
      %2319 = vst [vmem:[#allocation3 + $0xa8] sm:$0xff] %v2313
      %2320 = vst [vmem:[#allocation3 + $0xb0] sm:$0xff] %v2314
      %2321 = vst [vmem:[#allocation3 + $0xb8] sm:$0xff] %v2315
      %v2322 = vld [vmem:[#allocation2 + $0x8] sm:$0xff]
      %v2323 = vld [vmem:[#allocation2 + $0x10] sm:$0xff]
      %v2324 = vld [vmem:[#allocation2 + $0x18] sm:$0xff]
      %v2325 = vld [vmem:[#allocation2 + $0x20] sm:$0xff]
      %2330 = vrot.lane.b32.xlu0 %v2322, 109
      %v2331 = vpop.permute.xlu0 %2330
      %2332 = vrot.lane.b32.xlu0 %v2323, 109
      %v2333 = vpop.permute.xlu0 %2332
      %2334 = vrot.lane.b32.xlu0 %v2324, 109
      %v2335 = vpop.permute.xlu0 %2334
      %2336 = vrot.lane.b32.xlu0 %v2325, 109
      %v2337 = vpop.permute.xlu0 %2336
      %v2338 = vsel %vm695, %v2331, %v2333
      %v2339 = vsel %vm695, %v2333, %v2335
      %v2340 = vsel %vm695, %v2335, %v2337
      %2344 = vst [vmem:[#allocation3 + $0xc0] sm:$0xff] %v2338
      %2345 = vst [vmem:[#allocation3 + $0xc8] sm:$0xff] %v2339
      %2346 = vst [vmem:[#allocation3 + $0xd0] sm:$0xff] %v2340
      %v2347 = vld [vmem:[#allocation3] sm:$0xff]
      %v2348 = vld [vmem:[#allocation3 + $0x8] sm:$0xff]
      %v2349 = vld [vmem:[#allocation3 + $0x10] sm:$0xff]
      %v2350 = vld [vmem:[#allocation3 + $0x18] sm:$0xff]
      %v2351 = vld [vmem:[#allocation3 + $0x20] sm:$0xff]
      %v2352 = vld [vmem:[#allocation3 + $0x28] sm:$0xff]
      %v2353 = vld [vmem:[#allocation3 + $0x30] sm:$0xff]
      %v2354 = vld [vmem:[#allocation3 + $0x38] sm:$0xff]
      %v2355 = vld [vmem:[#allocation3 + $0x40] sm:$0xff]
      %v2356 = vld [vmem:[#allocation3 + $0x48] sm:$0xff]
      %v2357 = vld [vmem:[#allocation3 + $0x50] sm:$0xff]
      %v2358 = vld [vmem:[#allocation3 + $0x58] sm:$0xff]
      %v2359 = vld [vmem:[#allocation3 + $0x60] sm:$0xff]
      %v2360 = vld [vmem:[#allocation3 + $0x68] sm:$0xff]
      %v2361 = vld [vmem:[#allocation3 + $0x70] sm:$0xff]
      %v2362 = vld [vmem:[#allocation3 + $0x78] sm:$0xff]
      %v2363 = vld [vmem:[#allocation3 + $0x80] sm:$0xff]
      %v2364 = vld [vmem:[#allocation3 + $0x88] sm:$0xff]
      %v2365 = vld [vmem:[#allocation3 + $0x90] sm:$0xff]
      %v2366 = vld [vmem:[#allocation3 + $0x98] sm:$0xff]
      %v2367 = vld [vmem:[#allocation3 + $0xa0] sm:$0xff]
      %v2368 = vld [vmem:[#allocation3 + $0xa8] sm:$0xff]
      %v2369 = vld [vmem:[#allocation3 + $0xb0] sm:$0xff]
      %v2370 = vld [vmem:[#allocation3 + $0xb8] sm:$0xff]
      %v2371 = vld [vmem:[#allocation3 + $0xc0] sm:$0xff]
      %v2372 = vld [vmem:[#allocation3 + $0xc8] sm:$0xff]
      %v2373 = vld [vmem:[#allocation3 + $0xd0] sm:$0xff]
      %2375 = vset.pattern.permute.xlu0 0
      %2376 = vperm.xlu0 %2375, %v2134
      %v2377 = vpop.permute.xlu0 %2376
      %v2380 = vsel %vm737, %v2132, 0
      %2382 = vmatprep.subr.mxu0 %v2348
      %2383 = vmatpush1.msra.mxu0 %v2347
      %2384 = vmatprep.subr.mxu0 %v2351
      %2385 = vmatpush1.msra.mxu0 %v2350
      %2386 = vmatprep.subr.mxu0 %v2354
      %2387 = vmatpush1.msra.mxu0 %v2353
      %2388 = vmatprep.subr.mxu0 %v2357
      %2389 = vmatpush1.msra.mxu0 %v2356
      %2390 = vmatprep.subr.mxu0 %v2360
      %2391 = vmatpush1.msra.mxu0 %v2359
      %2392 = vmatprep.subr.mxu0 %v2363
      %2393 = vmatpush1.msra.mxu0 %v2362
      %2394 = vmatprep.subr.mxu0 %v2366
      %2395 = vmatpush1.msra.mxu0 %v2365
      %2396 = vmatprep.subr.mxu0 %v2369
      %2397 = vmatpush1.msra.mxu0 %v2368
      %2398 = vmatprep.subr.mxu0 %v2372
      %2399 = vmatpush1.msra.mxu0 %v2371
      %2400 = vmatprep.subr.mxu0 0.0
      %2401 = vmatpush1.msra.mxu0 0.0
      %2402 = vmatprep.subr.mxu0 0.0
      %2403 = vmatpush1.msra.mxu0 0.0
      %2404 = vmatprep.subr.mxu0 0.0
      %2405 = vmatpush1.msra.mxu0 0.0
      %2406 = vmatprep.subr.mxu0 0.0
      %2407 = vmatpush1.msra.mxu0 0.0
      %2408 = vmatprep.subr.mxu0 0.0
      %2409 = vmatpush1.msra.mxu0 0.0
      %2410 = vmatprep.subr.mxu0 0.0
      %2411 = vmatpush1.msra.mxu0 0.0
      %2412 = vmatprep.subr.mxu0 0.0
      %2413 = vmatpush1.msra.mxu0 0.0
      %2414 = vmatprep.subr.mxu0 0.0
      %2415 = vmatpush1.msra.mxu0 0.0
      %2416 = vmatprep.subr.mxu0 0.0
      %2417 = vmatpush1.msra.mxu0 0.0
      %2418 = vmatprep.subr.mxu0 0.0
      %2419 = vmatpush1.msra.mxu0 0.0
      %2420 = vmatprep.subr.mxu0 0.0
      %2421 = vmatpush1.msra.mxu0 0.0
      %2422 = vmatprep.subr.mxu0 0.0
      %2423 = vmatpush1.msra.mxu0 0.0
      %2424 = vmatprep.subr.mxu0 0.0
      %2425 = vmatpush1.msra.mxu0 0.0
      %2426 = vmatprep.subr.mxu0 0.0
      %2427 = vmatpush1.msra.mxu0 0.0
      %2428 = vmatprep.subr.mxu0 0.0
      %2429 = vmatpush1.msra.mxu0 0.0
      %2430 = vmatprep.subr.mxu0 0.0
      %2431 = vmatpush1.msra.mxu0 0.0
      %2432 = vmatprep.subr.mxu0 0.0
      %2433 = vmatpush1.msra.mxu0 0.0
      %2434 = vmatprep.subr.mxu0 0.0
      %2435 = vmatpush1.msra.mxu0 0.0
      %2436 = vmatprep.subr.mxu0 0.0
      %2437 = vmatpush1.msra.mxu0 0.0
      %2438 = vmatprep.subr.mxu0 0.0
      %2439 = vmatpush1.msra.mxu0 0.0
      %2440 = vmatprep.subr.mxu0 0.0
      %2441 = vmatpush1.msra.mxu0 0.0
      %2442 = vmatprep.subr.mxu0 0.0
      %2443 = vmatpush1.msra.mxu0 0.0
      %2444 = vmatprep.subr.mxu0 0.0
      %2445 = vmatpush1.msra.mxu0 0.0
      %2446 = vmatprep.mubr.f32.mxu0 0.0
      %2447 = vmatmul.mubr.f32.gmra.mrb[0].mxu0 %v2380
      %v2448 = vpop.f32.mrb[0].mxu0
      %v2449 = vadd.f32 %v2377, %v2448
      %v2450 = vpop.f32.mrb[0].mxu0
      %v2451 = vadd.f32 %v2377, %v2450
      %2452 = vdwg.mxu0
      %2453 = vmatprep.subr.mxu0 0.0
      %2454 = vmatpush1.msra.mxu0 %v2349
      %2455 = vmatprep.subr.mxu0 0.0
      %2456 = vmatpush1.msra.mxu0 %v2352
      %2457 = vmatprep.subr.mxu0 0.0
      %2458 = vmatpush1.msra.mxu0 %v2355
      %2459 = vmatprep.subr.mxu0 0.0
      %2460 = vmatpush1.msra.mxu0 %v2358
      %2461 = vmatprep.subr.mxu0 0.0
      %2462 = vmatpush1.msra.mxu0 %v2361
      %2463 = vmatprep.subr.mxu0 0.0
      %2464 = vmatpush1.msra.mxu0 %v2364
      %2465 = vmatprep.subr.mxu0 0.0
      %2466 = vmatpush1.msra.mxu0 %v2367
      %2467 = vmatprep.subr.mxu0 0.0
      %2468 = vmatpush1.msra.mxu0 %v2370
      %2469 = vmatprep.subr.mxu0 0.0
      %2470 = vmatpush1.msra.mxu0 %v2373
      %2471 = vmatprep.subr.mxu0 0.0
      %2472 = vmatpush1.msra.mxu0 0.0
      %2473 = vmatprep.subr.mxu0 0.0
      %2474 = vmatpush1.msra.mxu0 0.0
      %2475 = vmatprep.subr.mxu0 0.0
      %2476 = vmatpush1.msra.mxu0 0.0
      %2477 = vmatprep.subr.mxu0 0.0
      %2478 = vmatpush1.msra.mxu0 0.0
      %2479 = vmatprep.subr.mxu0 0.0
      %2480 = vmatpush1.msra.mxu0 0.0
      %2481 = vmatprep.subr.mxu0 0.0
      %2482 = vmatpush1.msra.mxu0 0.0
      %2483 = vmatprep.subr.mxu0 0.0
      %2484 = vmatpush1.msra.mxu0 0.0
      %2485 = vmatprep.subr.mxu0 0.0
      %2486 = vmatpush1.msra.mxu0 0.0
      %2487 = vmatprep.subr.mxu0 0.0
      %2488 = vmatpush1.msra.mxu0 0.0
      %2489 = vmatprep.subr.mxu0 0.0
      %2490 = vmatpush1.msra.mxu0 0.0
      %2491 = vmatprep.subr.mxu0 0.0
      %2492 = vmatpush1.msra.mxu0 0.0
      %2493 = vmatprep.subr.mxu0 0.0
      %2494 = vmatpush1.msra.mxu0 0.0
      %2495 = vmatprep.subr.mxu0 0.0
      %2496 = vmatpush1.msra.mxu0 0.0
      %2497 = vmatprep.subr.mxu0 0.0
      %2498 = vmatpush1.msra.mxu0 0.0
      %2499 = vmatprep.subr.mxu0 0.0
      %2500 = vmatpush1.msra.mxu0 0.0
      %2501 = vmatprep.subr.mxu0 0.0
      %2502 = vmatpush1.msra.mxu0 0.0
      %2503 = vmatprep.subr.mxu0 0.0
      %2504 = vmatpush1.msra.mxu0 0.0
      %2505 = vmatprep.subr.mxu0 0.0
      %2506 = vmatpush1.msra.mxu0 0.0
      %2507 = vmatprep.subr.mxu0 0.0
      %2508 = vmatpush1.msra.mxu0 0.0
      %2509 = vmatprep.subr.mxu0 0.0
      %2510 = vmatpush1.msra.mxu0 0.0
      %2511 = vmatprep.subr.mxu0 0.0
      %2512 = vmatpush1.msra.mxu0 0.0
      %2513 = vmatprep.subr.mxu0 0.0
      %2514 = vmatpush1.msra.mxu0 0.0
      %2515 = vmatprep.subr.mxu0 0.0
      %2516 = vmatpush1.msra.mxu0 0.0
      %2517 = vmatprep.mubr.f32.mxu0 0.0
      %2518 = vmatmul.mubr.f32.gmra.mrb[0].mxu0 %v2380
      %v2519 = vpop.f32.mrb[0].mxu0
      %v2520 = vadd.f32 %v2377, %v2519
      %v2521 = vpop.f32.mrb[0].mxu0
      %2522 = vdwg.mxu0
      %v2523 = vadd.f32 %v2449, %v1699
      %v2524 = vadd.f32 %v2451, %v1700
      %v2525 = vadd.f32 %v2520, %v1701
      %v2526 = vld [vmem:[%s11] sm:$0xff]
      %v2527 = vld [vmem:[%s11 + $0x8] sm:$0xff]
      %v2528 = vld [vmem:[%s12] sm:$0xff]
      %v2529 = vld [vmem:[%s12 + $0x8] sm:$0xff]
      %v2530 = vmul.f32 %v2523, %v473
      %v2531 = vmul.f32 %v2524, %v477
      %v2532 = vmul.f32 %v2525, %v481
      %2533 = vst [vmem:[#allocation2 + $0x8] sm:$0xff] %v2530
      %2534 = vst [vmem:[#allocation2 + $0x10] sm:$0xff] %v2531
      %2535 = vst [vmem:[#allocation2 + $0x18] sm:$0xff] %v2532
      %v2536 = vld [vmem:[#allocation2] sm:$0xff]
      %v2537 = vld [vmem:[#allocation2 + $0x8] sm:$0xff]
      %v2538 = vld [vmem:[#allocation2 + $0x10] sm:$0xff]
      %v2539 = vld [vmem:[#allocation2 + $0x18] sm:$0xff]
      %2544 = vrot.lane.b32.xlu0 %v2536, 19
      %v2545 = vpop.permute.xlu0 %2544
      %2546 = vrot.lane.b32.xlu0 %v2537, 19
      %v2547 = vpop.permute.xlu0 %2546
      %2548 = vrot.lane.b32.xlu0 %v2538, 19
      %v2549 = vpop.permute.xlu0 %2548
      %2550 = vrot.lane.b32.xlu0 %v2539, 19
      %v2551 = vpop.permute.xlu0 %2550
      %v2552 = vsel %vm507, %v2545, %v2547
      %v2553 = vsel %vm507, %v2547, %v2549
      %v2554 = vsel %vm507, %v2549, %v2551
      %2558 = vst [vmem:[#allocation3] sm:$0xff] %v2552
      %2559 = vst [vmem:[#allocation3 + $0x8] sm:$0xff] %v2553
      %2560 = vst [vmem:[#allocation3 + $0x10] sm:$0xff] %v2554
      %v2561 = vld [vmem:[#allocation2] sm:$0xff]
      %v2562 = vld [vmem:[#allocation2 + $0x8] sm:$0xff]
      %v2563 = vld [vmem:[#allocation2 + $0x10] sm:$0xff]
      %v2564 = vld [vmem:[#allocation2 + $0x18] sm:$0xff]
      %2569 = vrot.lane.b32.xlu0 %v2561, 18
      %v2570 = vpop.permute.xlu0 %2569
      %2571 = vrot.lane.b32.xlu0 %v2562, 18
      %v2572 = vpop.permute.xlu0 %2571
      %2573 = vrot.lane.b32.xlu0 %v2563, 18
      %v2574 = vpop.permute.xlu0 %2573
      %2575 = vrot.lane.b32.xlu0 %v2564, 18
      %v2576 = vpop.permute.xlu0 %2575
      %v2577 = vsel %vm533, %v2570, %v2572
      %v2578 = vsel %vm533, %v2572, %v2574
      %v2579 = vsel %vm533, %v2574, %v2576
      %2583 = vst [vmem:[#allocation3 + $0x18] sm:$0xff] %v2577
      %2584 = vst [vmem:[#allocation3 + $0x20] sm:$0xff] %v2578
      %2585 = vst [vmem:[#allocation3 + $0x28] sm:$0xff] %v2579
      %v2586 = vld [vmem:[#allocation2] sm:$0xff]
      %v2587 = vld [vmem:[#allocation2 + $0x8] sm:$0xff]
      %v2588 = vld [vmem:[#allocation2 + $0x10] sm:$0xff]
      %v2589 = vld [vmem:[#allocation2 + $0x18] sm:$0xff]
      %2594 = vrot.lane.b32.xlu0 %v2586, 17
      %v2595 = vpop.permute.xlu0 %2594
      %2596 = vrot.lane.b32.xlu0 %v2587, 17
      %v2597 = vpop.permute.xlu0 %2596
      %2598 = vrot.lane.b32.xlu0 %v2588, 17
      %v2599 = vpop.permute.xlu0 %2598
      %2600 = vrot.lane.b32.xlu0 %v2589, 17
      %v2601 = vpop.permute.xlu0 %2600
      %v2602 = vsel %vm559, %v2595, %v2597
      %v2603 = vsel %vm559, %v2597, %v2599
      %v2604 = vsel %vm559, %v2599, %v2601
      %2608 = vst [vmem:[#allocation3 + $0x30] sm:$0xff] %v2602
      %2609 = vst [vmem:[#allocation3 + $0x38] sm:$0xff] %v2603
      %2610 = vst [vmem:[#allocation3 + $0x40] sm:$0xff] %v2604
      %v2611 = vld [vmem:[#allocation2] sm:$0xff]
      %v2612 = vld [vmem:[#allocation2 + $0x8] sm:$0xff]
      %v2613 = vld [vmem:[#allocation2 + $0x10] sm:$0xff]
      %v2614 = vld [vmem:[#allocation2 + $0x18] sm:$0xff]
      %2619 = vrot.lane.b32.xlu0 %v2611, 1
      %v2620 = vpop.permute.xlu0 %2619
      %2621 = vrot.lane.b32.xlu0 %v2612, 1
      %v2622 = vpop.permute.xlu0 %2621
      %2623 = vrot.lane.b32.xlu0 %v2613, 1
      %v2624 = vpop.permute.xlu0 %2623
      %2625 = vrot.lane.b32.xlu0 %v2614, 1
      %v2626 = vpop.permute.xlu0 %2625
      %v2627 = vsel %vm585, %v2620, %v2622
      %v2628 = vsel %vm585, %v2622, %v2624
      %v2629 = vsel %vm585, %v2624, %v2626
      %2633 = vst [vmem:[#allocation3 + $0x48] sm:$0xff] %v2627
      %2634 = vst [vmem:[#allocation3 + $0x50] sm:$0xff] %v2628
      %2635 = vst [vmem:[#allocation3 + $0x58] sm:$0xff] %v2629
      %v2636 = vld [vmem:[#allocation2 + $0x8] sm:$0xff]
      %v2637 = vld [vmem:[#allocation2 + $0x10] sm:$0xff]
      %v2638 = vld [vmem:[#allocation2 + $0x18] sm:$0xff]
      %2639 = vst [vmem:[#allocation3 + $0x60] sm:$0xff] %v2636
      %2640 = vst [vmem:[#allocation3 + $0x68] sm:$0xff] %v2637
      %2641 = vst [vmem:[#allocation3 + $0x70] sm:$0xff] %v2638
      %v2642 = vld [vmem:[#allocation2 + $0x8] sm:$0xff]
      %v2643 = vld [vmem:[#allocation2 + $0x10] sm:$0xff]
      %v2644 = vld [vmem:[#allocation2 + $0x18] sm:$0xff]
      %v2645 = vld [vmem:[#allocation2 + $0x20] sm:$0xff]
      %2650 = vrot.lane.b32.xlu0 %v2642, 127
      %v2651 = vpop.permute.xlu0 %2650
      %2652 = vrot.lane.b32.xlu0 %v2643, 127
      %v2653 = vpop.permute.xlu0 %2652
      %2654 = vrot.lane.b32.xlu0 %v2644, 127
      %v2655 = vpop.permute.xlu0 %2654
      %2656 = vrot.lane.b32.xlu0 %v2645, 127
      %v2657 = vpop.permute.xlu0 %2656
      %v2658 = vsel %vm617, %v2651, %v2653
      %v2659 = vsel %vm617, %v2653, %v2655
      %v2660 = vsel %vm617, %v2655, %v2657
      %2664 = vst [vmem:[#allocation3 + $0x78] sm:$0xff] %v2658
      %2665 = vst [vmem:[#allocation3 + $0x80] sm:$0xff] %v2659
      %2666 = vst [vmem:[#allocation3 + $0x88] sm:$0xff] %v2660
      %v2667 = vld [vmem:[#allocation2 + $0x8] sm:$0xff]
      %v2668 = vld [vmem:[#allocation2 + $0x10] sm:$0xff]
      %v2669 = vld [vmem:[#allocation2 + $0x18] sm:$0xff]
      %v2670 = vld [vmem:[#allocation2 + $0x20] sm:$0xff]
      %2675 = vrot.lane.b32.xlu0 %v2667, 111
      %v2676 = vpop.permute.xlu0 %2675
      %2677 = vrot.lane.b32.xlu0 %v2668, 111
      %v2678 = vpop.permute.xlu0 %2677
      %2679 = vrot.lane.b32.xlu0 %v2669, 111
      %v2680 = vpop.permute.xlu0 %2679
      %2681 = vrot.lane.b32.xlu0 %v2670, 111
      %v2682 = vpop.permute.xlu0 %2681
      %v2683 = vsel %vm643, %v2676, %v2678
      %v2684 = vsel %vm643, %v2678, %v2680
      %v2685 = vsel %vm643, %v2680, %v2682
      %2689 = vst [vmem:[#allocation3 + $0x90] sm:$0xff] %v2683
      %2690 = vst [vmem:[#allocation3 + $0x98] sm:$0xff] %v2684
      %2691 = vst [vmem:[#allocation3 + $0xa0] sm:$0xff] %v2685
      %v2692 = vld [vmem:[#allocation2 + $0x8] sm:$0xff]
      %v2693 = vld [vmem:[#allocation2 + $0x10] sm:$0xff]
      %v2694 = vld [vmem:[#allocation2 + $0x18] sm:$0xff]
      %v2695 = vld [vmem:[#allocation2 + $0x20] sm:$0xff]
      %2700 = vrot.lane.b32.xlu0 %v2692, 110
      %v2701 = vpop.permute.xlu0 %2700
      %2702 = vrot.lane.b32.xlu0 %v2693, 110
      %v2703 = vpop.permute.xlu0 %2702
      %2704 = vrot.lane.b32.xlu0 %v2694, 110
      %v2705 = vpop.permute.xlu0 %2704
      %2706 = vrot.lane.b32.xlu0 %v2695, 110
      %v2707 = vpop.permute.xlu0 %2706
      %v2708 = vsel %vm669, %v2701, %v2703
      %v2709 = vsel %vm669, %v2703, %v2705
      %v2710 = vsel %vm669, %v2705, %v2707
      %2714 = vst [vmem:[#allocation3 + $0xa8] sm:$0xff] %v2708
      %2715 = vst [vmem:[#allocation3 + $0xb0] sm:$0xff] %v2709
      %2716 = vst [vmem:[#allocation3 + $0xb8] sm:$0xff] %v2710
      %v2717 = vld [vmem:[#allocation2 + $0x8] sm:$0xff]
      %v2718 = vld [vmem:[#allocation2 + $0x10] sm:$0xff]
      %v2719 = vld [vmem:[#allocation2 + $0x18] sm:$0xff]
      %v2720 = vld [vmem:[#allocation2 + $0x20] sm:$0xff]
      %2725 = vrot.lane.b32.xlu0 %v2717, 109
      %v2726 = vpop.permute.xlu0 %2725
      %2727 = vrot.lane.b32.xlu0 %v2718, 109
      %v2728 = vpop.permute.xlu0 %2727
      %2729 = vrot.lane.b32.xlu0 %v2719, 109
      %v2730 = vpop.permute.xlu0 %2729
      %2731 = vrot.lane.b32.xlu0 %v2720, 109
      %v2732 = vpop.permute.xlu0 %2731
      %v2733 = vsel %vm695, %v2726, %v2728
      %v2734 = vsel %vm695, %v2728, %v2730
      %v2735 = vsel %vm695, %v2730, %v2732
      %2739 = vst [vmem:[#allocation3 + $0xc0] sm:$0xff] %v2733
      %2740 = vst [vmem:[#allocation3 + $0xc8] sm:$0xff] %v2734
      %2741 = vst [vmem:[#allocation3 + $0xd0] sm:$0xff] %v2735
      %v2742 = vld [vmem:[#allocation3] sm:$0xff]
      %v2743 = vld [vmem:[#allocation3 + $0x8] sm:$0xff]
      %v2744 = vld [vmem:[#allocation3 + $0x10] sm:$0xff]
      %v2745 = vld [vmem:[#allocation3 + $0x18] sm:$0xff]
      %v2746 = vld [vmem:[#allocation3 + $0x20] sm:$0xff]
      %v2747 = vld [vmem:[#allocation3 + $0x28] sm:$0xff]
      %v2748 = vld [vmem:[#allocation3 + $0x30] sm:$0xff]
      %v2749 = vld [vmem:[#allocation3 + $0x38] sm:$0xff]
      %v2750 = vld [vmem:[#allocation3 + $0x40] sm:$0xff]
      %v2751 = vld [vmem:[#allocation3 + $0x48] sm:$0xff]
      %v2752 = vld [vmem:[#allocation3 + $0x50] sm:$0xff]
      %v2753 = vld [vmem:[#allocation3 + $0x58] sm:$0xff]
      %v2754 = vld [vmem:[#allocation3 + $0x60] sm:$0xff]
      %v2755 = vld [vmem:[#allocation3 + $0x68] sm:$0xff]
      %v2756 = vld [vmem:[#allocation3 + $0x70] sm:$0xff]
      %v2757 = vld [vmem:[#allocation3 + $0x78] sm:$0xff]
      %v2758 = vld [vmem:[#allocation3 + $0x80] sm:$0xff]
      %v2759 = vld [vmem:[#allocation3 + $0x88] sm:$0xff]
      %v2760 = vld [vmem:[#allocation3 + $0x90] sm:$0xff]
      %v2761 = vld [vmem:[#allocation3 + $0x98] sm:$0xff]
      %v2762 = vld [vmem:[#allocation3 + $0xa0] sm:$0xff]
      %v2763 = vld [vmem:[#allocation3 + $0xa8] sm:$0xff]
      %v2764 = vld [vmem:[#allocation3 + $0xb0] sm:$0xff]
      %v2765 = vld [vmem:[#allocation3 + $0xb8] sm:$0xff]
      %v2766 = vld [vmem:[#allocation3 + $0xc0] sm:$0xff]
      %v2767 = vld [vmem:[#allocation3 + $0xc8] sm:$0xff]
      %v2768 = vld [vmem:[#allocation3 + $0xd0] sm:$0xff]
      %2770 = vset.pattern.permute.xlu0 0
      %2771 = vperm.xlu0 %2770, %v2528
      %v2772 = vpop.permute.xlu0 %2771
      %2775 = vset.pattern.permute.xlu0 0
      %2776 = vperm.xlu0 %2775, %v2529
      %v2777 = vpop.permute.xlu0 %2776
      %v2780 = vsel %vm737, %v2526, 0
      %v2783 = vsel %vm737, %v2527, 0
      %2785 = vmatprep.subr.mxu0 %v2743
      %2786 = vmatpush1.msra.mxu0 %v2742
      %2787 = vmatprep.subr.mxu0 %v2746
      %2788 = vmatpush1.msra.mxu0 %v2745
      %2789 = vmatprep.subr.mxu0 %v2749
      %2790 = vmatpush1.msra.mxu0 %v2748
      %2791 = vmatprep.subr.mxu0 %v2752
      %2792 = vmatpush1.msra.mxu0 %v2751
      %2793 = vmatprep.subr.mxu0 %v2755
      %2794 = vmatpush1.msra.mxu0 %v2754
      %2795 = vmatprep.subr.mxu0 %v2758
      %2796 = vmatpush1.msra.mxu0 %v2757
      %2797 = vmatprep.subr.mxu0 %v2761
      %2798 = vmatpush1.msra.mxu0 %v2760
      %2799 = vmatprep.subr.mxu0 %v2764
      %2800 = vmatpush1.msra.mxu0 %v2763
      %2801 = vmatprep.subr.mxu0 %v2767
      %2802 = vmatpush1.msra.mxu0 %v2766
      %2803 = vmatprep.subr.mxu0 0.0
      %2804 = vmatpush1.msra.mxu0 0.0
      %2805 = vmatprep.subr.mxu0 0.0
      %2806 = vmatpush1.msra.mxu0 0.0
      %2807 = vmatprep.subr.mxu0 0.0
      %2808 = vmatpush1.msra.mxu0 0.0
      %2809 = vmatprep.subr.mxu0 0.0
      %2810 = vmatpush1.msra.mxu0 0.0
      %2811 = vmatprep.subr.mxu0 0.0
      %2812 = vmatpush1.msra.mxu0 0.0
      %2813 = vmatprep.subr.mxu0 0.0
      %2814 = vmatpush1.msra.mxu0 0.0
      %2815 = vmatprep.subr.mxu0 0.0
      %2816 = vmatpush1.msra.mxu0 0.0
      %2817 = vmatprep.subr.mxu0 0.0
      %2818 = vmatpush1.msra.mxu0 0.0
      %2819 = vmatprep.subr.mxu0 0.0
      %2820 = vmatpush1.msra.mxu0 0.0
      %2821 = vmatprep.subr.mxu0 0.0
      %2822 = vmatpush1.msra.mxu0 0.0
      %2823 = vmatprep.subr.mxu0 0.0
      %2824 = vmatpush1.msra.mxu0 0.0
      %2825 = vmatprep.subr.mxu0 0.0
      %2826 = vmatpush1.msra.mxu0 0.0
      %2827 = vmatprep.subr.mxu0 0.0
      %2828 = vmatpush1.msra.mxu0 0.0
      %2829 = vmatprep.subr.mxu0 0.0
      %2830 = vmatpush1.msra.mxu0 0.0
      %2831 = vmatprep.subr.mxu0 0.0
      %2832 = vmatpush1.msra.mxu0 0.0
      %2833 = vmatprep.subr.mxu0 0.0
      %2834 = vmatpush1.msra.mxu0 0.0
      %2835 = vmatprep.subr.mxu0 0.0
      %2836 = vmatpush1.msra.mxu0 0.0
      %2837 = vmatprep.subr.mxu0 0.0
      %2838 = vmatpush1.msra.mxu0 0.0
      %2839 = vmatprep.subr.mxu0 0.0
      %2840 = vmatpush1.msra.mxu0 0.0
      %2841 = vmatprep.subr.mxu0 0.0
      %2842 = vmatpush1.msra.mxu0 0.0
      %2843 = vmatprep.subr.mxu0 0.0
      %2844 = vmatpush1.msra.mxu0 0.0
      %2845 = vmatprep.subr.mxu0 0.0
      %2846 = vmatpush1.msra.mxu0 0.0
      %2847 = vmatprep.subr.mxu0 0.0
      %2848 = vmatpush1.msra.mxu0 0.0
      %2849 = vmatprep.mubr.f32.mxu0 0.0
      %2850 = vmatmul.mubr.f32.gmra.mrb[0].mxu0 %v2780
      %v2851 = vpop.f32.mrb[0].mxu0
      %v2852 = vadd.f32 %v2772, %v2851
      %v2853 = vpop.f32.mrb[0].mxu0
      %v2854 = vadd.f32 %v2772, %v2853
      %2855 = vmatprep.mubr.f32.mxu0 0.0
      %2856 = vmatmul.mubr.f32.gmra.mrb[0].mxu0 %v2783
      %v2857 = vpop.f32.mrb[0].mxu0
      %v2858 = vadd.f32 %v2777, %v2857
      %v2859 = vpop.f32.mrb[0].mxu0
      %v2860 = vadd.f32 %v2777, %v2859
      %2861 = vdwg.mxu0
      %2862 = vmatprep.subr.mxu0 0.0
      %2863 = vmatpush1.msra.mxu0 %v2744
      %2864 = vmatprep.subr.mxu0 0.0
      %2865 = vmatpush1.msra.mxu0 %v2747
      %2866 = vmatprep.subr.mxu0 0.0
      %2867 = vmatpush1.msra.mxu0 %v2750
      %2868 = vmatprep.subr.mxu0 0.0
      %2869 = vmatpush1.msra.mxu0 %v2753
      %2870 = vmatprep.subr.mxu0 0.0
      %2871 = vmatpush1.msra.mxu0 %v2756
      %2872 = vmatprep.subr.mxu0 0.0
      %2873 = vmatpush1.msra.mxu0 %v2759
      %2874 = vmatprep.subr.mxu0 0.0
      %2875 = vmatpush1.msra.mxu0 %v2762
      %2876 = vmatprep.subr.mxu0 0.0
      %2877 = vmatpush1.msra.mxu0 %v2765
      %2878 = vmatprep.subr.mxu0 0.0
      %2879 = vmatpush1.msra.mxu0 %v2768
      %2880 = vmatprep.subr.mxu0 0.0
      %2881 = vmatpush1.msra.mxu0 0.0
      %2882 = vmatprep.subr.mxu0 0.0
      %2883 = vmatpush1.msra.mxu0 0.0
      %2884 = vmatprep.subr.mxu0 0.0
      %2885 = vmatpush1.msra.mxu0 0.0
      %2886 = vmatprep.subr.mxu0 0.0
      %2887 = vmatpush1.msra.mxu0 0.0
      %2888 = vmatprep.subr.mxu0 0.0
      %2889 = vmatpush1.msra.mxu0 0.0
      %2890 = vmatprep.subr.mxu0 0.0
      %2891 = vmatpush1.msra.mxu0 0.0
      %2892 = vmatprep.subr.mxu0 0.0
      %2893 = vmatpush1.msra.mxu0 0.0
      %2894 = vmatprep.subr.mxu0 0.0
      %2895 = vmatpush1.msra.mxu0 0.0
      %2896 = vmatprep.subr.mxu0 0.0
      %2897 = vmatpush1.msra.mxu0 0.0
      %2898 = vmatprep.subr.mxu0 0.0
      %2899 = vmatpush1.msra.mxu0 0.0
      %2900 = vmatprep.subr.mxu0 0.0
      %2901 = vmatpush1.msra.mxu0 0.0
      %2902 = vmatprep.subr.mxu0 0.0
      %2903 = vmatpush1.msra.mxu0 0.0
      %2904 = vmatprep.subr.mxu0 0.0
      %2905 = vmatpush1.msra.mxu0 0.0
      %2906 = vmatprep.subr.mxu0 0.0
      %2907 = vmatpush1.msra.mxu0 0.0
      %2908 = vmatprep.subr.mxu0 0.0
      %2909 = vmatpush1.msra.mxu0 0.0
      %2910 = vmatprep.subr.mxu0 0.0
      %2911 = vmatpush1.msra.mxu0 0.0
      %2912 = vmatprep.subr.mxu0 0.0
      %2913 = vmatpush1.msra.mxu0 0.0
      %2914 = vmatprep.subr.mxu0 0.0
      %2915 = vmatpush1.msra.mxu0 0.0
      %2916 = vmatprep.subr.mxu0 0.0
      %2917 = vmatpush1.msra.mxu0 0.0
      %2918 = vmatprep.subr.mxu0 0.0
      %2919 = vmatpush1.msra.mxu0 0.0
      %2920 = vmatprep.subr.mxu0 0.0
      %2921 = vmatpush1.msra.mxu0 0.0
      %2922 = vmatprep.subr.mxu0 0.0
      %2923 = vmatpush1.msra.mxu0 0.0
      %2924 = vmatprep.subr.mxu0 0.0
      %2925 = vmatpush1.msra.mxu0 0.0
      %2926 = vmatprep.mubr.f32.mxu0 0.0
      %2927 = vmatmul.mubr.f32.gmra.mrb[0].mxu0 %v2780
      %v2928 = vpop.f32.mrb[0].mxu0
      %v2929 = vadd.f32 %v2772, %v2928
      %v2930 = vpop.f32.mrb[0].mxu0
      %2931 = vmatprep.mubr.f32.mxu0 0.0
      %2932 = vmatmul.mubr.f32.gmra.mrb[0].mxu0 %v2783
      %v2933 = vpop.f32.mrb[0].mxu0
      %v2934 = vadd.f32 %v2777, %v2933
      %v2935 = vpop.f32.mrb[0].mxu0
      %2936 = vdwg.mxu0
      %v2937 = vld [vmem:[%s455] sm:$0xff]
      %v2938 = vld [vmem:[%s455 + $0x8] sm:$0xff]
      %v2939 = vld [vmem:[%s455 + $0x10] sm:$0xff]
      %v2940 = vld [vmem:[%s455 + $0x18] sm:$0xff]
      %v2941 = vld [vmem:[%s455 + $0x20] sm:$0xff]
      %v2942 = vld [vmem:[%s455 + $0x28] sm:$0xff]
      %v2943 = vadd.f32 %v2852, %v2937
      %v2944 = vadd.f32 %v2854, %v2938
      %v2945 = vadd.f32 %v2929, %v2939
      %v2946 = vadd.f32 %v2858, %v2940
      %v2947 = vadd.f32 %v2860, %v2941
      %v2948 = vadd.f32 %v2934, %v2942
      %2949 = vst [vmem:[%s460] sm:$0xff] %v2943
      %2950 = vst [vmem:[%s460 + $0x8] sm:$0xff] %v2944
      %2951 = vst [vmem:[%s460 + $0x10] sm:$0xff] %v2945
      %2952 = vst [vmem:[%s460 + $0x18] sm:$0xff] %v2946
      %2953 = vst [vmem:[%s460 + $0x20] sm:$0xff] %v2947
      %2954 = vst [vmem:[%s460 + $0x28] sm:$0xff] %v2948
      %p2955 = scmp.lt.s32.totalorder %s24, 1
      %s2956 = scalar_select %p2955, %s24, 1
      %s2957 = smul.addr %s2956, 6
      %s2958 = smul.addr %s2957, 8
      %s2959 = scalar_lea.vmem %s13, %s2958
      // Predicated region
      $region73: #{wsdr_b_forward.1} parent=71 // pred_check
        %p2960 = pneg %p325
      $region74: #{wsdr_b_forward.1} parent=71 // pred_check_branch
        %2962 = sbr.rel (%p2960) target = $region76
      $region75: #{wsdr_b_forward.1} parent=71 // pred_region
        _
      $region76: #{wsdr_b_forward.1} parent=71 // pred_fallthru
        _
    $region72: #{wsdr_b_forward.1} parent=5 // pred_fallthru
      _
    %p2963 = scmp.le.s32.totalorder 2, %s19
    // Predicated region
    $region77: #{wsdr_b_forward.1} parent=5 // pred_check
      %p2964 = pneg %p2963
    $region78: #{wsdr_b_forward.1} parent=5 // pred_check_branch
      %2966 = sbr.rel (%p2964) target = $region80
    $region79: #{wsdr_b_forward.1} parent=5 // pred_region
      %s2967 = ssub.s32 %s19, 2
      // Predicated region
      $region81: #{wsdr_b_forward.1} parent=79 // pred_check
        %p2968 = pneg %p331
      $region82: #{wsdr_b_forward.1} parent=79 // pred_check_branch
        %2970 = sbr.rel (%p2968) target = $region84
      $region83: #{wsdr_b_forward.1} parent=79 // pred_region
        %p2971 = scmp.lt.s32.totalorder %s25, 1
        %s2972 = scalar_select %p2971, %s25, 1
        %s2973 = smul.addr %s2972, 6
        %s2974 = smul.addr %s2973, 8
        %s2975 = scalar_lea.vmem %s13, %s2974
      $region84: #{wsdr_b_forward.1} parent=79 // pred_fallthru
        _
    $region80: #{wsdr_b_forward.1} parent=5 // pred_fallthru
      _
  $region6: #{wsdr_b_forward.1} parent=0 // loop_footer
    %s23 = sadd.s32 1, %s19
  $region7: #{wsdr_b_forward.1} parent=0 // loop_footer_branch
    %18 = sbr.rel target = $region3
  $region8: #{wsdr_b_forward.1} parent=0 // loop_exit
    _

</llo_original>
